<compile_context>
chip_gen: v6e
topology: v6e:2x2x1
jax: 0.10.0
libtpu: 0.0.40
codegen_flags: <defaults>
</compile_context>

<pallas_src>
import functools

import jax
import jax.numpy as jnp
from jax.experimental import pallas as pl
from jax.experimental.pallas import tpu as pltpu

F32 = jnp.float32
BF16 = jnp.bfloat16


def _round_up(x, m):
    return (x + m - 1) // m * m


def _pad2(a, rows, cols):
    return jnp.pad(a, ((0, rows - a.shape[0]), (0, cols - a.shape[1])))


def _pick_tile(n, candidates):
    for c in candidates:
        if n % c == 0:
            return c
    return 128


def _vmem_limit_bytes():
    """~78% of physical VMEM, capped at 100 MiB (v5e/v6e: ~100 MiB, v7x: ~50 MiB)."""
    cap = 64 * 1024 * 1024
    try:
        info = pltpu.get_tpu_info()
        cap = int(getattr(info, "vmem_capacity_bytes", cap))
    except Exception:
        pass
    return min(int(cap * 0.78), 100 * 1024 * 1024)


# ---------------------------------------------------------------------------
# Kernels
# ---------------------------------------------------------------------------
def _head_kernel(x_ref, w1_ref, b1_ref, m_ref, y0_ref, ym_ref):
    """Y0 = relu(X @ W1 + b1) (f32) and YM[s] = Y0 @ M[s] (bf16) per row block."""
    y = jnp.dot(x_ref[...], w1_ref[...], preferred_element_type=F32) + b1_ref[...]
    y = jnp.maximum(y, 0.0)
    y0_ref[...] = y
    yb = y.astype(BF16)
    for s in range(4):
        ym_ref[s] = jnp.dot(yb, m_ref[s], preferred_element_type=F32).astype(BF16)


def _qinv_kernel(lam0, lam1, alpha, n_valid, tile_m, tile_k, db_ref, dg_ref, aq_ref):
    """aQinv = alpha / (lam0*D_beta + lam1*D_gamma + I); zeroed on padded rows/cols.

    The dense identity of the reference is rebuilt from an in-kernel iota diagonal
    (saves an N^2 HBM stream). Purely elementwise -> both grid axes are parallel."""
    i = pl.program_id(0)
    j = pl.program_id(1)
    row = i * tile_m + jax.lax.broadcasted_iota(jnp.int32, (tile_m, tile_k), 0)
    col = j * tile_k + jax.lax.broadcasted_iota(jnp.int32, (tile_m, tile_k), 1)
    diag = jnp.where(row == col, 1.0, 0.0).astype(F32)
    q = lam0 * db_ref[0].astype(F32) + lam1 * dg_ref[0].astype(F32) + diag
    valid = jnp.logical_and(row < n_valid, col < n_valid)
    q = jnp.where(valid, q, 1.0)                      # keep padded entries finite
    aq_ref[...] = jnp.where(valid, alpha / q, 0.0).astype(aq_ref.dtype)


def _yhat_kernel(adj_ref, ym_ref, y0_ref, yhat_ref, acc_ref):
    """Y_hat = sum_s Adj[s] @ (Y @ M[s]) + Y0, with a single f32 accumulator.

    adj_ref is the stacked (4, tile_m, tile_k) bf16 block (one DMA for all four
    adjacency operands); ym_ref is the stacked (4, tile_k, Hp) bf16 block of the
    right-factor-pre-applied Y.  Epilogue is just `acc + Y0` (no HxH matmul tail)."""
    k = pl.program_id(1)

    @pl.when(k == 0)
    def _():
        acc_ref[...] = jnp.zeros_like(acc_ref)

    dot = lambda a, b: jnp.dot(a, b, preferred_element_type=F32)
    acc_ref[...] += (dot(adj_ref[0], ym_ref[0]) + dot(adj_ref[1], ym_ref[1])
                     + dot(adj_ref[2], ym_ref[2]) + dot(adj_ref[3], ym_ref[3]))

    @pl.when(k == pl.num_programs(1) - 1)
    def _():
        yhat_ref[...] = (acc_ref[...] + y0_ref[...]).astype(yhat_ref.dtype)


def _update_kernel(one_minus_alpha, aq_ref, yhat_ref, y_ref, m_ref,
                   yn_ref, ymn_ref, acc_ref):
    """Y <- (1-alpha)*Y + (alpha*Q_inv) @ Y_hat; epilogue pre-applies the HxH right
    factors for the next propagation step (YM_next[s] = Y_new @ M[s], bf16)."""
    k = pl.program_id(1)

    @pl.when(k == 0)
    def _():
        acc_ref[...] = jnp.zeros_like(acc_ref)

    acc_ref[...] += jnp.dot(aq_ref[...], yhat_ref[...], preferred_element_type=F32)

    @pl.when(k == pl.num_programs(1) - 1)
    def _():
        yn = one_minus_alpha * y_ref[...] + acc_ref[...]
        yn_ref[...] = yn
        ynb = yn.astype(BF16)
        for s in range(4):
            ymn_ref[s] = jnp.dot(ynb, m_ref[s], preferred_element_type=F32).astype(BF16)


def _tail_kernel(y_ref, w2_ref, b2_ref, o_ref):
    """out = relu(Y) @ W2 + b2 (bf16 MXU operands, f32 accumulation, lane-dense out)."""
    y = jnp.maximum(y_ref[...], 0.0).astype(BF16)
    o_ref[...] = jnp.dot(y, w2_ref[...], preferred_element_type=F32) + b2_ref[...]


# ---------------------------------------------------------------------------
# Wrapper
# ---------------------------------------------------------------------------
def phenomnn_forward(x, A_beta, A_gamma, D_beta, D_gamma, H1, H2,
                     W1, b1, W2, b2, *, lam0, lam1, alpha, num_steps):
    N, nfeat = x.shape
    nhidden = W1.shape[1]
    nclass = W2.shape[1]

    # Lane-dense padding of the small dims; N padded only to 128 and rectangular
    # streaming tiles chosen to divide Np (no full-tile padding slack).
    Hp = _round_up(nhidden, 128)
    Fp = _round_up(nfeat, 128)
    Cp = _round_up(nclass, 128)
    Np = _round_up(N, 128)
    tile_m = _pick_tile(Np, (512, 256, 128))
    tile_k = _pick_tile(Np, (1024, 512, 256, 128))
    num_i = Np // tile_m
    num_k = Np // tile_k

    xp = _pad2(x, Np, Fp).astype(BF16)
    ab = _pad2(A_beta, Np, Np).astype(BF16)
    db = _pad2(D_beta, Np, Np).astype(BF16)
    ag = _pad2(A_gamma, Np, Np).astype(BF16)
    dg = _pad2(D_gamma, Np, Np).astype(BF16)
    adj = jnp.stack([ab, db, ag, dg])                 # (4, Np, Np) bf16, one DMA stream
    w1 = _pad2(W1, Fp, Hp).astype(BF16)
    b1p = _pad2(b1.astype(F32), 1, Hp)
    w2 = _pad2(W2, Hp, Cp).astype(BF16)
    b2p = _pad2(b2.astype(F32), 1, Cp)
    h1 = _pad2(H1.astype(F32), Hp, Hp)
    h2 = _pad2(H2.astype(F32), Hp, Hp)

    # Loop-invariant HxH right factors (absorb lam0/lam1 and L_gamma = D_gamma - A_gamma):
    #   Y_hat = Ab@(Y@M_Ab) + Db@(Y@M_Db) + Ag@(Y@M_Ag) + Dg@(Y@M_Dg) + Y0
    eye_h = jnp.eye(Hp, dtype=F32)
    m_ab = lam0 * (h1 + h1.T)
    m_db = -lam0 * (h1 @ h1.T)
    m_ag = lam1 * (h2 + h2.T - eye_h)
    m_dg = lam1 * (eye_h - h2 @ h2.T)
    m_stack = jnp.stack([m_ab, m_db, m_ag, m_dg]).astype(BF16)   # (4, Hp, Hp)

    vmem_limit = _vmem_limit_bytes()
    cp_i = pltpu.CompilerParams(dimension_semantics=("parallel",),
                                vmem_limit_bytes=vmem_limit)
    cp_pp = pltpu.CompilerParams(dimension_semantics=("parallel", "parallel"),
                                 vmem_limit_bytes=vmem_limit)
    cp_ik = pltpu.CompilerParams(dimension_semantics=("parallel", "arbitrary"),
                                 vmem_limit_bytes=vmem_limit)
    # TODO(synk): pipeline_mode=pl.Buffered(3) on the adjacency stream (v5e/v6e only)
    # is a further small win once validated on the target jax version.

    # ---- fcs[0] + ReLU (dropout is identity at inference), fused with YM = Y0 @ M ----
    y0_f32, ym = pl.pallas_call(
        _head_kernel,
        grid=(num_i,),
        in_specs=[pl.BlockSpec((tile_m, Fp), lambda i: (i, 0)),
                  pl.BlockSpec((Fp, Hp), lambda i: (0, 0)),
                  pl.BlockSpec((1, Hp), lambda i: (0, 0)),
                  pl.BlockSpec((4, Hp, Hp), lambda i: (0, 0, 0))],
        out_specs=(pl.BlockSpec((tile_m, Hp), lambda i: (i, 0)),
                   pl.BlockSpec((4, tile_m, Hp), lambda i: (0, i, 0))),
        out_shape=(jax.ShapeDtypeStruct((Np, Hp), F32),
                   jax.ShapeDtypeStruct((4, Np, Hp), BF16)),
        compiler_params=cp_i,
    )(xp, w1, b1p, m_stack)
    y_f32 = y0_f32

    # ---- alpha * Q_tild^(-1) (elementwise, as in the reference), computed once ----
    aqinv = pl.pallas_call(
        functools.partial(_qinv_kernel, float(lam0), float(lam1), float(alpha),
                          N, tile_m, tile_k),
        grid=(num_i, num_k),
        in_specs=[pl.BlockSpec((1, tile_m, tile_k), lambda i, j: (1, i, j)),   # D_beta
                  pl.BlockSpec((1, tile_m, tile_k), lambda i, j: (3, i, j))],  # D_gamma
        out_specs=pl.BlockSpec((tile_m, tile_k), lambda i, j: (i, j)),
        out_shape=jax.ShapeDtypeStruct((Np, Np), BF16),
        compiler_params=cp_pp,
    )(adj, adj)

    yhat_call = pl.pallas_call(
        _yhat_kernel,
        grid=(num_i, num_k),
        in_specs=[pl.BlockSpec((4, tile_m, tile_k), lambda i, k: (0, i, k)),  # adj stack
                  pl.BlockSpec((4, tile_k, Hp), lambda i, k: (0, k, 0)),      # YM stack
                  pl.BlockSpec((tile_m, Hp), lambda i, k: (i, 0))],           # Y0 (f32)
        out_specs=pl.BlockSpec((tile_m, Hp), lambda i, k: (i, 0)),
        out_shape=jax.ShapeDtypeStruct((Np, Hp), BF16),
        scratch_shapes=[pltpu.VMEM((tile_m, Hp), F32)],
        compiler_params=cp_ik,
    )

    update_call = pl.pallas_call(
        functools.partial(_update_kernel, float(1.0 - alpha)),
        grid=(num_i, num_k),
        in_specs=[pl.BlockSpec((tile_m, tile_k), lambda i, k: (i, k)),        # alpha*Qinv
                  pl.BlockSpec((tile_k, Hp), lambda i, k: (k, 0)),            # Y_hat bf16
                  pl.BlockSpec((tile_m, Hp), lambda i, k: (i, 0)),            # Y (f32)
                  pl.BlockSpec((4, Hp, Hp), lambda i, k: (0, 0, 0))],         # M stack
        out_specs=(pl.BlockSpec((tile_m, Hp), lambda i, k: (i, 0)),
                   pl.BlockSpec((4, tile_m, Hp), lambda i, k: (0, i, 0))),
        out_shape=(jax.ShapeDtypeStruct((Np, Hp), F32),
                   jax.ShapeDtypeStruct((4, Np, Hp), BF16)),
        scratch_shapes=[pltpu.VMEM((tile_m, Hp), F32)],
        compiler_params=cp_ik,
    )

    # ---- GraphConvolution propagation (H not None, diagD=True, twoHgamma/HisI=False) ----
    for _ in range(num_steps):
        yhat = yhat_call(adj, ym, y0_f32)
        y_f32, ym = update_call(aqinv, yhat, y_f32, m_stack)

    # ---- ReLU + fcs[-1] ----
    out_p = pl.pallas_call(
        _tail_kernel,
        grid=(num_i,),
        in_specs=[pl.BlockSpec((tile_m, Hp), lambda i: (i, 0)),
                  pl.BlockSpec((Hp, Cp), lambda i: (0, 0)),
                  pl.BlockSpec((1, Cp), lambda i: (0, 0))],
        out_specs=pl.BlockSpec((tile_m, Cp), lambda i: (i, 0)),
        out_shape=jax.ShapeDtypeStruct((Np, Cp), F32),
        compiler_params=cp_i,
    )(y_f32, w2, b2p)

    return out_p[:N, :nclass]


def phenomnn_reference(x, A_beta, A_gamma, D_beta, D_gamma, H1, H2,
                       W1, b1, W2, b2, *, lam0, lam1, alpha, num_steps):
    """Pure-JAX f32 reference of the same forward pass (for a sanity check)."""
    I = jnp.eye(x.shape[0], dtype=jnp.float32)
    y = jnp.maximum(x @ W1 + b1, 0.0)
    Y0 = Y = y
    Q_inv = 1.0 / (lam0 * D_beta + lam1 * D_gamma + I)
    L_gamma = D_gamma - A_gamma
    for _ in range(num_steps):
        tb = (A_beta @ Y) @ (H1 + H1.T) - ((D_beta @ Y) @ H1) @ H1.T
        tg = (L_gamma @ Y) + (A_gamma @ Y) @ (H2 + H2.T) - ((D_gamma @ Y) @ H2) @ H2.T
        Y_hat = lam0 * tb + Y0 + lam1 * tg
        Y = (1.0 - alpha) * Y + (alpha * Q_inv) @ Y_hat
    Y = jnp.maximum(Y, 0.0)
    return Y @ W2 + b2


if __name__ == "__main__":
    # small shapes
    N, nfeat, nhidden, nclass = 64, 32, 32, 8
    lam0, lam1, lam4 = 1.0, 1.0, 0.0
    alp = 0.0
    alpha = alp if alp != 0 else 1.0 / (1.0 + lam4 + lam0 + lam1)
    num_steps = 2  # args.prop_step

    key = jax.random.PRNGKey(0)
    keys = jax.random.split(key, 12)

    x = jax.random.normal(keys[0], (N, nfeat), jnp.float32)
    A_beta = jax.random.uniform(keys[1], (N, N), jnp.float32)
    A_gamma = jax.random.uniform(keys[2], (N, N), jnp.float32)
    # dense, strictly positive degree surrogates so the elementwise reciprocal
    # Q_tild ** (-1) of the reference stays finite
    D_beta = jax.random.uniform(keys[3], (N, N), jnp.float32) + 0.5
    D_gamma = jax.random.uniform(keys[4], (N, N), jnp.float32) + 0.5

    # H params (notresidual=False branch): normal(0, 1/in_features) + eye
    H1 = jax.random.normal(keys[5], (nhidden, nhidden), jnp.float32) * (1.0 / nhidden) \
        + jnp.eye(nhidden, dtype=jnp.float32)
    H2 = jax.random.normal(keys[6], (nhidden, nhidden), jnp.float32) * (1.0 / nhidden) \
        + jnp.eye(nhidden, dtype=jnp.float32)
    # TODO(synk): H['gamma2'] exists in the module but is only used when args.twoHgamma=True;
    # that branch is not exercised here.

    # nn.Linear-style init, stored transposed as (in, out)
    b1_bound = 1.0 / (nfeat ** 0.5)
    W1 = jax.random.uniform(keys[7], (nfeat, nhidden), jnp.float32, -b1_bound, b1_bound)
    b1 = jax.random.uniform(keys[8], (1, nhidden), jnp.float32, -b1_bound, b1_bound)
    b2_bound = 1.0 / (nhidden ** 0.5)
    W2 = jax.random.uniform(keys[9], (nhidden, nclass), jnp.float32, -b2_bound, b2_bound)
    b2 = jax.random.uniform(keys[10], (1, nclass), jnp.float32, -b2_bound, b2_bound)

    fwd = jax.jit(functools.partial(phenomnn_forward,
                                    lam0=lam0, lam1=lam1, alpha=alpha,
                                    num_steps=num_steps))
    out = jax.block_until_ready(fwd(x, A_beta, A_gamma, D_beta, D_gamma, H1, H2,
                                    W1, b1, W2, b2))

    assert out.shape == (N, nclass)
    assert bool(jnp.all(jnp.isfinite(out)))

    ref = jax.block_until_ready(
        phenomnn_reference(x, A_beta, A_gamma, D_beta, D_gamma, H1, H2,
                           W1, b1, W2, b2,
                           lam0=lam0, lam1=lam1, alpha=alpha, num_steps=num_steps))
    scale = float(jnp.max(jnp.abs(ref))) + 1e-6
    rel_err = float(jnp.max(jnp.abs(out - ref))) / scale
    assert rel_err < 5e-2, f"mismatch vs reference: normalized max err {rel_err}"

    print("KERNEL_OK")
</pallas_src>

<mosaic_0001>
module attributes {stable_mosaic.version = 11 : i64} {
  func.func @_head_kernel(%arg0: i32, %arg1: memref<128x128xbf16, #tpu.memory_space<vmem>>, %arg2: memref<128x128xbf16, #tpu.memory_space<vmem>>, %arg3: memref<1x128xf32, #tpu.memory_space<vmem>>, %arg4: memref<4x128x128xbf16, #tpu.memory_space<vmem>>, %arg5: memref<128x128xf32, #tpu.memory_space<vmem>>, %arg6: memref<4x128x128xbf16, #tpu.memory_space<vmem>>) attributes {dimension_semantics = [#tpu.dimension_semantics<parallel>], iteration_bounds = array<i64: 1>, scalar_prefetch = 0 : i64, scratch_operands = 0 : i64, tpu.core_type = #tpu.core_type<tc>, window_params = [{transform_indices = @transform_0, window_bounds = array<i64: 128, 128>}, {pipeline_mode = #tpu.pipeline_mode<synchronous>, transform_indices = @transform_1, window_bounds = array<i64: 128, 128>}, {pipeline_mode = #tpu.pipeline_mode<synchronous>, transform_indices = @transform_2, window_bounds = array<i64: 1, 128>}, {pipeline_mode = #tpu.pipeline_mode<synchronous>, transform_indices = @transform_3, window_bounds = array<i64: 4, 128, 128>}, {transform_indices = @transform_4, window_bounds = array<i64: 128, 128>}, {transform_indices = @transform_5, window_bounds = array<i64: 4, 128, 128>}]} {
    %c0 = arith.constant 0 : index
    %c0_0 = arith.constant 0 : index
    %0 = vector.load %arg1[%c0, %c0_0] : memref<128x128xbf16, #tpu.memory_space<vmem>>, vector<128x128xbf16>
    %c0_1 = arith.constant 0 : index
    %c0_2 = arith.constant 0 : index
    %1 = vector.load %arg2[%c0_1, %c0_2] : memref<128x128xbf16, #tpu.memory_space<vmem>>, vector<128x128xbf16>
    %cst = arith.constant dense<0.000000e+00> : vector<128x128xf32>
    %2 = tpu.matmul %0, %1, %cst {dimension_numbers = #tpu.dot_dimension_numbers<[1], [0], [0], [1], [0, 0, 1, 1], [], []>} : vector<128x128xbf16>, vector<128x128xbf16>, vector<128x128xf32> -> vector<128x128xf32>
    %c0_3 = arith.constant 0 : index
    %c0_4 = arith.constant 0 : index
    %3 = vector.load %arg3[%c0_3, %c0_4] : memref<1x128xf32, #tpu.memory_space<vmem>>, vector<1x128xf32>
    %4 = vector.broadcast %3 : vector<1x128xf32> to vector<128x128xf32>
    %5 = arith.addf %2, %4 : vector<128x128xf32>
    %cst_5 = arith.constant 0.000000e+00 : f32
    %6 = vector.broadcast %cst_5 : f32 to vector<128x128xf32>
    %7 = arith.maximumf %5, %6 : vector<128x128xf32>
    %c0_6 = arith.constant 0 : index
    %c0_7 = arith.constant 0 : index
    %8 = vector.load %arg5[%c0_6, %c0_7] : memref<128x128xf32, #tpu.memory_space<vmem>>, vector<128x128xf32>
    tpu.vector_store %arg5[%c0_6, %c0_7], %7 {strides = array<i32>} : memref<128x128xf32, #tpu.memory_space<vmem>>, vector<128x128xf32>,
    %9 = arith.truncf %7 : vector<128x128xf32> to vector<128x128xbf16>
    %c0_8 = arith.constant 0 : index
    %c0_9 = arith.constant 0 : index
    %c0_10 = arith.constant 0 : index
    %10 = vector.load %arg4[%c0_8, %c0_9, %c0_10] : memref<4x128x128xbf16, #tpu.memory_space<vmem>>, vector<1x128x128xbf16>
    %11 = vector.shape_cast %10 : vector<1x128x128xbf16> to vector<128x128xbf16>
    %cst_11 = arith.constant dense<0.000000e+00> : vector<128x128xf32>
    %12 = tpu.matmul %9, %11, %cst_11 {dimension_numbers = #tpu.dot_dimension_numbers<[1], [0], [0], [1], [0, 0, 1, 1], [], []>} : vector<128x128xbf16>, vector<128x128xbf16>, vector<128x128xf32> -> vector<128x128xf32>
    %13 = arith.truncf %12 : vector<128x128xf32> to vector<128x128xbf16>
    %c0_12 = arith.constant 0 : index
    %c0_13 = arith.constant 0 : index
    %c0_14 = arith.constant 0 : index
    %14 = vector.load %arg6[%c0_12, %c0_13, %c0_14] : memref<4x128x128xbf16, #tpu.memory_space<vmem>>, vector<1x128x128xbf16>
    %15 = vector.shape_cast %14 : vector<1x128x128xbf16> to vector<128x128xbf16>
    %16 = vector.shape_cast %13 : vector<128x128xbf16> to vector<1x128x128xbf16>
    tpu.vector_store %arg6[%c0_12, %c0_13, %c0_14], %16 {strides = array<i32>} : memref<4x128x128xbf16, #tpu.memory_space<vmem>>, vector<1x128x128xbf16>,
    %c1 = arith.constant 1 : index
    %c0_15 = arith.constant 0 : index
    %c0_16 = arith.constant 0 : index
    %17 = vector.load %arg4[%c1, %c0_15, %c0_16] : memref<4x128x128xbf16, #tpu.memory_space<vmem>>, vector<1x128x128xbf16>
    %18 = vector.shape_cast %17 : vector<1x128x128xbf16> to vector<128x128xbf16>
    %cst_17 = arith.constant dense<0.000000e+00> : vector<128x128xf32>
    %19 = tpu.matmul %9, %18, %cst_17 {dimension_numbers = #tpu.dot_dimension_numbers<[1], [0], [0], [1], [0, 0, 1, 1], [], []>} : vector<128x128xbf16>, vector<128x128xbf16>, vector<128x128xf32> -> vector<128x128xf32>
    %20 = arith.truncf %19 : vector<128x128xf32> to vector<128x128xbf16>
    %c1_18 = arith.constant 1 : index
    %c0_19 = arith.constant 0 : index
    %c0_20 = arith.constant 0 : index
    %21 = vector.load %arg6[%c1_18, %c0_19, %c0_20] : memref<4x128x128xbf16, #tpu.memory_space<vmem>>, vector<1x128x128xbf16>
    %22 = vector.shape_cast %21 : vector<1x128x128xbf16> to vector<128x128xbf16>
    %23 = vector.shape_cast %20 : vector<128x128xbf16> to vector<1x128x128xbf16>
    tpu.vector_store %arg6[%c1_18, %c0_19, %c0_20], %23 {strides = array<i32>} : memref<4x128x128xbf16, #tpu.memory_space<vmem>>, vector<1x128x128xbf16>,
    %c2 = arith.constant 2 : index
    %c0_21 = arith.constant 0 : index
    %c0_22 = arith.constant 0 : index
    %24 = vector.load %arg4[%c2, %c0_21, %c0_22] : memref<4x128x128xbf16, #tpu.memory_space<vmem>>, vector<1x128x128xbf16>
    %25 = vector.shape_cast %24 : vector<1x128x128xbf16> to vector<128x128xbf16>
    %cst_23 = arith.constant dense<0.000000e+00> : vector<128x128xf32>
    %26 = tpu.matmul %9, %25, %cst_23 {dimension_numbers = #tpu.dot_dimension_numbers<[1], [0], [0], [1], [0, 0, 1, 1], [], []>} : vector<128x128xbf16>, vector<128x128xbf16>, vector<128x128xf32> -> vector<128x128xf32>
    %27 = arith.truncf %26 : vector<128x128xf32> to vector<128x128xbf16>
    %c2_24 = arith.constant 2 : index
    %c0_25 = arith.constant 0 : index
    %c0_26 = arith.constant 0 : index
    %28 = vector.load %arg6[%c2_24, %c0_25, %c0_26] : memref<4x128x128xbf16, #tpu.memory_space<vmem>>, vector<1x128x128xbf16>
    %29 = vector.shape_cast %28 : vector<1x128x128xbf16> to vector<128x128xbf16>
    %30 = vector.shape_cast %27 : vector<128x128xbf16> to vector<1x128x128xbf16>
    tpu.vector_store %arg6[%c2_24, %c0_25, %c0_26], %30 {strides = array<i32>} : memref<4x128x128xbf16, #tpu.memory_space<vmem>>, vector<1x128x128xbf16>,
    %c3 = arith.constant 3 : index
    %c0_27 = arith.constant 0 : index
    %c0_28 = arith.constant 0 : index
    %31 = vector.load %arg4[%c3, %c0_27, %c0_28] : memref<4x128x128xbf16, #tpu.memory_space<vmem>>, vector<1x128x128xbf16>
    %32 = vector.shape_cast %31 : vector<1x128x128xbf16> to vector<128x128xbf16>
    %cst_29 = arith.constant dense<0.000000e+00> : vector<128x128xf32>
    %33 = tpu.matmul %9, %32, %cst_29 {dimension_numbers = #tpu.dot_dimension_numbers<[1], [0], [0], [1], [0, 0, 1, 1], [], []>} : vector<128x128xbf16>, vector<128x128xbf16>, vector<128x128xf32> -> vector<128x128xf32>
    %34 = arith.truncf %33 : vector<128x128xf32> to vector<128x128xbf16>
    %c3_30 = arith.constant 3 : index
    %c0_31 = arith.constant 0 : index
    %c0_32 = arith.constant 0 : index
    %35 = vector.load %arg6[%c3_30, %c0_31, %c0_32] : memref<4x128x128xbf16, #tpu.memory_space<vmem>>, vector<1x128x128xbf16>
    %36 = vector.shape_cast %35 : vector<1x128x128xbf16> to vector<128x128xbf16>
    %37 = vector.shape_cast %34 : vector<128x128xbf16> to vector<1x128x128xbf16>
    tpu.vector_store %arg6[%c3_30, %c0_31, %c0_32], %37 {strides = array<i32>} : memref<4x128x128xbf16, #tpu.memory_space<vmem>>, vector<1x128x128xbf16>,
    return
  }
  func.func @transform_0(%arg0: i32) -> (i32, i32) {
    %c0_i32 = arith.constant 0 : i32
    %c0_i32_0 = arith.constant 0 : i32
    return %arg0, %c0_i32 : i32, i32
  }
  func.func @transform_1(%arg0: i32) -> (i32, i32) {
    %c0_i32 = arith.constant 0 : i32
    %c0_i32_0 = arith.constant 0 : i32
    %c0_i32_1 = arith.constant 0 : i32
    return %c0_i32, %c0_i32_0 : i32, i32
  }
  func.func @transform_2(%arg0: i32) -> (i32, i32) {
    %c0_i32 = arith.constant 0 : i32
    %c0_i32_0 = arith.constant 0 : i32
    %c0_i32_1 = arith.constant 0 : i32
    return %c0_i32, %c0_i32_0 : i32, i32
  }
  func.func @transform_3(%arg0: i32) -> (i32, i32, i32) {
    %c0_i32 = arith.constant 0 : i32
    %c0_i32_0 = arith.constant 0 : i32
    %c0_i32_1 = arith.constant 0 : i32
    %c0_i32_2 = arith.constant 0 : i32
    return %c0_i32, %c0_i32_0, %c0_i32_1 : i32, i32, i32
  }
  func.func @transform_4(%arg0: i32) -> (i32, i32) {
    %c0_i32 = arith.constant 0 : i32
    %c0_i32_0 = arith.constant 0 : i32
    return %arg0, %c0_i32 : i32, i32
  }
  func.func @transform_5(%arg0: i32) -> (i32, i32, i32) {
    %c0_i32 = arith.constant 0 : i32
    %c0_i32_0 = arith.constant 0 : i32
    %c0_i32_1 = arith.constant 0 : i32
    return %c0_i32, %arg0, %c0_i32_0 : i32, i32, i32
  }
}

module attributes {stable_mosaic.version = 11 : i64} {
  func.func @_qinv_kernel(%arg0: i32, %arg1: i32, %arg2: memref<1x128x128xbf16, #tpu.memory_space<vmem>>, %arg3: memref<1x128x128xbf16, #tpu.memory_space<vmem>>, %arg4: memref<128x128xbf16, #tpu.memory_space<vmem>>) attributes {dimension_semantics = [#tpu.dimension_semantics<parallel>, #tpu.dimension_semantics<parallel>], iteration_bounds = array<i64: 1, 1>, scalar_prefetch = 0 : i64, scratch_operands = 0 : i64, tpu.core_type = #tpu.core_type<tc>, window_params = [{transform_indices = @transform_0, window_bounds = array<i64: 1, 128, 128>}, {transform_indices = @transform_1, window_bounds = array<i64: 1, 128, 128>}, {transform_indices = @transform_2, window_bounds = array<i64: 128, 128>}]} {
    %c128_i32 = arith.constant 128 : i32
    %0 = arith.muli %arg0, %c128_i32 : i32
    %1 = tpu.iota {dimensions = array<i32: 0>} : vector<128x128xi32>
    %2 = vector.broadcast %0 : i32 to vector<128x128xi32>
    %3 = arith.addi %2, %1 : vector<128x128xi32>
    %c128_i32_0 = arith.constant 128 : i32
    %4 = arith.muli %arg1, %c128_i32_0 : i32
    %5 = tpu.iota {dimensions = array<i32: 1>} : vector<128x128xi32>
    %6 = vector.broadcast %4 : i32 to vector<128x128xi32>
    %7 = arith.addi %6, %5 : vector<128x128xi32>
    %8 = arith.cmpi eq, %3, %7 : vector<128x128xi32>
    %cst = arith.constant 1.000000e+00 : f32
    %cst_1 = arith.constant 0.000000e+00 : f32
    %9 = vector.broadcast %cst : f32 to vector<128x128xf32>
    %10 = vector.broadcast %cst_1 : f32 to vector<128x128xf32>
    %11 = arith.select %8, %9, %10 : vector<128x128xi1>, vector<128x128xf32>
    %c0 = arith.constant 0 : index
    %c0_2 = arith.constant 0 : index
    %c0_3 = arith.constant 0 : index
    %12 = vector.load %arg2[%c0, %c0_2, %c0_3] : memref<1x128x128xbf16, #tpu.memory_space<vmem>>, vector<1x128x128xbf16>
    %13 = vector.shape_cast %12 : vector<1x128x128xbf16> to vector<128x128xbf16>
    %14 = arith.extf %13 : vector<128x128xbf16> to vector<128x128xf32>
    %cst_4 = arith.constant 1.000000e+00 : f32
    %15 = vector.broadcast %cst_4 : f32 to vector<128x128xf32>
    %16 = arith.mulf %15, %14 : vector<128x128xf32>
    %c0_5 = arith.constant 0 : index
    %c0_6 = arith.constant 0 : index
    %c0_7 = arith.constant 0 : index
    %17 = vector.load %arg3[%c0_5, %c0_6, %c0_7] : memref<1x128x128xbf16, #tpu.memory_space<vmem>>, vector<1x128x128xbf16>
    %18 = vector.shape_cast %17 : vector<1x128x128xbf16> to vector<128x128xbf16>
    %19 = arith.extf %18 : vector<128x128xbf16> to vector<128x128xf32>
    %cst_8 = arith.constant 1.000000e+00 : f32
    %20 = vector.broadcast %cst_8 : f32 to vector<128x128xf32>
    %21 = arith.mulf %20, %19 : vector<128x128xf32>
    %22 = arith.addf %16, %21 : vector<128x128xf32>
    %23 = arith.addf %22, %11 : vector<128x128xf32>
    %c64_i32 = arith.constant 64 : i32
    %24 = vector.broadcast %c64_i32 : i32 to vector<128x128xi32>
    %25 = arith.cmpi slt, %3, %24 : vector<128x128xi32>
    %c64_i32_9 = arith.constant 64 : i32
    %26 = vector.broadcast %c64_i32_9 : i32 to vector<128x128xi32>
    %27 = arith.cmpi slt, %7, %26 : vector<128x128xi32>
    %28 = arith.andi %25, %27 : vector<128x128xi1>
    %cst_10 = arith.constant 1.000000e+00 : f32
    %29 = vector.broadcast %cst_10 : f32 to vector<128x128xf32>
    %30 = arith.select %28, %23, %29 : vector<128x128xi1>, vector<128x128xf32>
    %cst_11 = arith.constant 0.333333343 : f32
    %31 = vector.broadcast %cst_11 : f32 to vector<128x128xf32>
    %32 = arith.divf %31, %30 : vector<128x128xf32>
    %cst_12 = arith.constant 0.000000e+00 : f32
    %33 = vector.broadcast %cst_12 : f32 to vector<128x128xf32>
    %34 = arith.select %28, %32, %33 : vector<128x128xi1>, vector<128x128xf32>
    %35 = arith.truncf %34 : vector<128x128xf32> to vector<128x128xbf16>
    %c0_13 = arith.constant 0 : index
    %c0_14 = arith.constant 0 : index
    %36 = vector.load %arg4[%c0_13, %c0_14] : memref<128x128xbf16, #tpu.memory_space<vmem>>, vector<128x128xbf16>
    tpu.vector_store %arg4[%c0_13, %c0_14], %35 {strides = array<i32>} : memref<128x128xbf16, #tpu.memory_space<vmem>>, vector<128x128xbf16>,
    return
  }
  func.func @transform_0(%arg0: i32, %arg1: i32) -> (i32, i32, i32) {
    %c1_i32 = arith.constant 1 : i32
    %c0_i32 = arith.constant 0 : i32
    return %c1_i32, %arg0, %arg1 : i32, i32, i32
  }
  func.func @transform_1(%arg0: i32, %arg1: i32) -> (i32, i32, i32) {
    %c3_i32 = arith.constant 3 : i32
    %c0_i32 = arith.constant 0 : i32
    return %c3_i32, %arg0, %arg1 : i32, i32, i32
  }
  func.func @transform_2(%arg0: i32, %arg1: i32) -> (i32, i32) {
    %c0_i32 = arith.constant 0 : i32
    return %arg0, %arg1 : i32, i32
  }
}

module attributes {stable_mosaic.version = 11 : i64} {
  func.func @_yhat_kernel(%arg0: i32, %arg1: i32, %arg2: memref<4x128x128xbf16, #tpu.memory_space<vmem>>, %arg3: memref<4x128x128xbf16, #tpu.memory_space<vmem>>, %arg4: memref<128x128xf32, #tpu.memory_space<vmem>>, %arg5: memref<128x128xbf16, #tpu.memory_space<vmem>>, %arg6: memref<128x128xf32, #tpu.memory_space<vmem>>) attributes {dimension_semantics = [#tpu.dimension_semantics<parallel>, #tpu.dimension_semantics<arbitrary>], iteration_bounds = array<i64: 1, 1>, scalar_prefetch = 0 : i64, scratch_operands = 1 : i64, tpu.core_type = #tpu.core_type<tc>, window_params = [{transform_indices = @transform_0, window_bounds = array<i64: 4, 128, 128>}, {transform_indices = @transform_1, window_bounds = array<i64: 4, 128, 128>}, {transform_indices = @transform_2, window_bounds = array<i64: 128, 128>}, {transform_indices = @transform_3, window_bounds = array<i64: 128, 128>}]} {
    %c0_i32 = arith.constant 0 : i32
    %0 = arith.cmpi eq, %arg1, %c0_i32 : i32
    %1 = arith.extui %0 : i1 to i32
    %c0_i32_0 = arith.constant 0 : i32
    %2 = arith.cmpi ne, %1, %c0_i32_0 : i32
    scf.if %2 {
      %cst_30 = arith.constant 0.000000e+00 : f32
      %32 = vector.broadcast %cst_30 : f32 to vector<128x128xf32>
      %c0_31 = arith.constant 0 : index
      %c0_32 = arith.constant 0 : index
      %33 = vector.load %arg6[%c0_31, %c0_32] : memref<128x128xf32, #tpu.memory_space<vmem>>, vector<128x128xf32>
      tpu.vector_store %arg6[%c0_31, %c0_32], %32 {strides = array<i32>} : memref<128x128xf32, #tpu.memory_space<vmem>>, vector<128x128xf32>,
    } else {
    }
    %c0 = arith.constant 0 : index
    %c0_1 = arith.constant 0 : index
    %3 = vector.load %arg6[%c0, %c0_1] : memref<128x128xf32, #tpu.memory_space<vmem>>, vector<128x128xf32>
    %c0_2 = arith.constant 0 : index
    %c0_3 = arith.constant 0 : index
    %c0_4 = arith.constant 0 : index
    %4 = vector.load %arg2[%c0_2, %c0_3, %c0_4] : memref<4x128x128xbf16, #tpu.memory_space<vmem>>, vector<1x128x128xbf16>
    %5 = vector.shape_cast %4 : vector<1x128x128xbf16> to vector<128x128xbf16>
    %c0_5 = arith.constant 0 : index
    %c0_6 = arith.constant 0 : index
    %c0_7 = arith.constant 0 : index
    %6 = vector.load %arg3[%c0_5, %c0_6, %c0_7] : memref<4x128x128xbf16, #tpu.memory_space<vmem>>, vector<1x128x128xbf16>
    %7 = vector.shape_cast %6 : vector<1x128x128xbf16> to vector<128x128xbf16>
    %cst = arith.constant dense<0.000000e+00> : vector<128x128xf32>
    %8 = tpu.matmul %5, %7, %cst {dimension_numbers = #tpu.dot_dimension_numbers<[1], [0], [0], [1], [0, 0, 1, 1], [], []>} : vector<128x128xbf16>, vector<128x128xbf16>, vector<128x128xf32> -> vector<128x128xf32>
    %c1 = arith.constant 1 : index
    %c0_8 = arith.constant 0 : index
    %c0_9 = arith.constant 0 : index
    %9 = vector.load %arg2[%c1, %c0_8, %c0_9] : memref<4x128x128xbf16, #tpu.memory_space<vmem>>, vector<1x128x128xbf16>
    %10 = vector.shape_cast %9 : vector<1x128x128xbf16> to vector<128x128xbf16>
    %c1_10 = arith.constant 1 : index
    %c0_11 = arith.constant 0 : index
    %c0_12 = arith.constant 0 : index
    %11 = vector.load %arg3[%c1_10, %c0_11, %c0_12] : memref<4x128x128xbf16, #tpu.memory_space<vmem>>, vector<1x128x128xbf16>
    %12 = vector.shape_cast %11 : vector<1x128x128xbf16> to vector<128x128xbf16>
    %cst_13 = arith.constant dense<0.000000e+00> : vector<128x128xf32>
    %13 = tpu.matmul %10, %12, %cst_13 {dimension_numbers = #tpu.dot_dimension_numbers<[1], [0], [0], [1], [0, 0, 1, 1], [], []>} : vector<128x128xbf16>, vector<128x128xbf16>, vector<128x128xf32> -> vector<128x128xf32>
    %14 = arith.addf %8, %13 : vector<128x128xf32>
    %c2 = arith.constant 2 : index
    %c0_14 = arith.constant 0 : index
    %c0_15 = arith.constant 0 : index
    %15 = vector.load %arg2[%c2, %c0_14, %c0_15] : memref<4x128x128xbf16, #tpu.memory_space<vmem>>, vector<1x128x128xbf16>
    %16 = vector.shape_cast %15 : vector<1x128x128xbf16> to vector<128x128xbf16>
    %c2_16 = arith.constant 2 : index
    %c0_17 = arith.constant 0 : index
    %c0_18 = arith.constant 0 : index
    %17 = vector.load %arg3[%c2_16, %c0_17, %c0_18] : memref<4x128x128xbf16, #tpu.memory_space<vmem>>, vector<1x128x128xbf16>
    %18 = vector.shape_cast %17 : vector<1x128x128xbf16> to vector<128x128xbf16>
    %cst_19 = arith.constant dense<0.000000e+00> : vector<128x128xf32>
    %19 = tpu.matmul %16, %18, %cst_19 {dimension_numbers = #tpu.dot_dimension_numbers<[1], [0], [0], [1], [0, 0, 1, 1], [], []>} : vector<128x128xbf16>, vector<128x128xbf16>, vector<128x128xf32> -> vector<128x128xf32>
    %20 = arith.addf %14, %19 : vector<128x128xf32>
    %c3 = arith.constant 3 : index
    %c0_20 = arith.constant 0 : index
    %c0_21 = arith.constant 0 : index
    %21 = vector.load %arg2[%c3, %c0_20, %c0_21] : memref<4x128x128xbf16, #tpu.memory_space<vmem>>, vector<1x128x128xbf16>
    %22 = vector.shape_cast %21 : vector<1x128x128xbf16> to vector<128x128xbf16>
    %c3_22 = arith.constant 3 : index
    %c0_23 = arith.constant 0 : index
    %c0_24 = arith.constant 0 : index
    %23 = vector.load %arg3[%c3_22, %c0_23, %c0_24] : memref<4x128x128xbf16, #tpu.memory_space<vmem>>, vector<1x128x128xbf16>
    %24 = vector.shape_cast %23 : vector<1x128x128xbf16> to vector<128x128xbf16>
    %cst_25 = arith.constant dense<0.000000e+00> : vector<128x128xf32>
    %25 = tpu.matmul %22, %24, %cst_25 {dimension_numbers = #tpu.dot_dimension_numbers<[1], [0], [0], [1], [0, 0, 1, 1], [], []>} : vector<128x128xbf16>, vector<128x128xbf16>, vector<128x128xf32> -> vector<128x128xf32>
    %26 = arith.addf %20, %25 : vector<128x128xf32>
    %27 = arith.addf %3, %26 : vector<128x128xf32>
    %c0_26 = arith.constant 0 : index
    %c0_27 = arith.constant 0 : index
    %28 = vector.load %arg6[%c0_26, %c0_27] : memref<128x128xf32, #tpu.memory_space<vmem>>, vector<128x128xf32>
    tpu.vector_store %arg6[%c0_26, %c0_27], %27 {strides = array<i32>} : memref<128x128xf32, #tpu.memory_space<vmem>>, vector<128x128xf32>,
    %c0_i32_28 = arith.constant 0 : i32
    %29 = arith.cmpi eq, %arg1, %c0_i32_28 : i32
    %30 = arith.extui %29 : i1 to i32
    %c0_i32_29 = arith.constant 0 : i32
    %31 = arith.cmpi ne, %30, %c0_i32_29 : i32
    scf.if %31 {
      %c0_30 = arith.constant 0 : index
      %c0_31 = arith.constant 0 : index
      %32 = vector.load %arg6[%c0_30, %c0_31] : memref<128x128xf32, #tpu.memory_space<vmem>>, vector<128x128xf32>
      %c0_32 = arith.constant 0 : index
      %c0_33 = arith.constant 0 : index
      %33 = vector.load %arg4[%c0_32, %c0_33] : memref<128x128xf32, #tpu.memory_space<vmem>>, vector<128x128xf32>
      %34 = arith.addf %32, %33 : vector<128x128xf32>
      %35 = arith.truncf %34 : vector<128x128xf32> to vector<128x128xbf16>
      %c0_34 = arith.constant 0 : index
      %c0_35 = arith.constant 0 : index
      %36 = vector.load %arg5[%c0_34, %c0_35] : memref<128x128xbf16, #tpu.memory_space<vmem>>, vector<128x128xbf16>
      tpu.vector_store %arg5[%c0_34, %c0_35], %35 {strides = array<i32>} : memref<128x128xbf16, #tpu.memory_space<vmem>>, vector<128x128xbf16>,
    } else {
    }
    return
  }
  func.func @transform_0(%arg0: i32, %arg1: i32) -> (i32, i32, i32) {
    %c0_i32 = arith.constant 0 : i32
    %c0_i32_0 = arith.constant 0 : i32
    return %c0_i32, %arg0, %arg1 : i32, i32, i32
  }
  func.func @transform_1(%arg0: i32, %arg1: i32) -> (i32, i32, i32) {
    %c0_i32 = arith.constant 0 : i32
    %c0_i32_0 = arith.constant 0 : i32
    %c0_i32_1 = arith.constant 0 : i32
    return %c0_i32, %arg1, %c0_i32_0 : i32, i32, i32
  }
  func.func @transform_2(%arg0: i32, %arg1: i32) -> (i32, i32) {
    %c0_i32 = arith.constant 0 : i32
    %c0_i32_0 = arith.constant 0 : i32
    return %arg0, %c0_i32 : i32, i32
  }
  func.func @transform_3(%arg0: i32, %arg1: i32) -> (i32, i32) {
    %c0_i32 = arith.constant 0 : i32
    %c0_i32_0 = arith.constant 0 : i32
    return %arg0, %c0_i32 : i32, i32
  }
}

module attributes {stable_mosaic.version = 11 : i64} {
  func.func @_update_kernel(%arg0: i32, %arg1: i32, %arg2: memref<128x128xbf16, #tpu.memory_space<vmem>>, %arg3: memref<128x128xbf16, #tpu.memory_space<vmem>>, %arg4: memref<128x128xf32, #tpu.memory_space<vmem>>, %arg5: memref<4x128x128xbf16, #tpu.memory_space<vmem>>, %arg6: memref<128x128xf32, #tpu.memory_space<vmem>>, %arg7: memref<4x128x128xbf16, #tpu.memory_space<vmem>>, %arg8: memref<128x128xf32, #tpu.memory_space<vmem>>) attributes {dimension_semantics = [#tpu.dimension_semantics<parallel>, #tpu.dimension_semantics<arbitrary>], iteration_bounds = array<i64: 1, 1>, scalar_prefetch = 0 : i64, scratch_operands = 1 : i64, tpu.core_type = #tpu.core_type<tc>, window_params = [{transform_indices = @transform_0, window_bounds = array<i64: 128, 128>}, {transform_indices = @transform_1, window_bounds = array<i64: 128, 128>}, {transform_indices = @transform_2, window_bounds = array<i64: 128, 128>}, {pipeline_mode = #tpu.pipeline_mode<synchronous>, transform_indices = @transform_3, window_bounds = array<i64: 4, 128, 128>}, {transform_indices = @transform_4, window_bounds = array<i64: 128, 128>}, {transform_indices = @transform_5, window_bounds = array<i64: 4, 128, 128>}]} {
    %c0_i32 = arith.constant 0 : i32
    %0 = arith.cmpi eq, %arg1, %c0_i32 : i32
    %1 = arith.extui %0 : i1 to i32
    %c0_i32_0 = arith.constant 0 : i32
    %2 = arith.cmpi ne, %1, %c0_i32_0 : i32
    scf.if %2 {
      %cst_10 = arith.constant 0.000000e+00 : f32
      %12 = vector.broadcast %cst_10 : f32 to vector<128x128xf32>
      %c0_11 = arith.constant 0 : index
      %c0_12 = arith.constant 0 : index
      %13 = vector.load %arg8[%c0_11, %c0_12] : memref<128x128xf32, #tpu.memory_space<vmem>>, vector<128x128xf32>
      tpu.vector_store %arg8[%c0_11, %c0_12], %12 {strides = array<i32>} : memref<128x128xf32, #tpu.memory_space<vmem>>, vector<128x128xf32>,
    } else {
    }
    %c0 = arith.constant 0 : index
    %c0_1 = arith.constant 0 : index
    %3 = vector.load %arg8[%c0, %c0_1] : memref<128x128xf32, #tpu.memory_space<vmem>>, vector<128x128xf32>
    %c0_2 = arith.constant 0 : index
    %c0_3 = arith.constant 0 : index
    %4 = vector.load %arg2[%c0_2, %c0_3] : memref<128x128xbf16, #tpu.memory_space<vmem>>, vector<128x128xbf16>
    %c0_4 = arith.constant 0 : index
    %c0_5 = arith.constant 0 : index
    %5 = vector.load %arg3[%c0_4, %c0_5] : memref<128x128xbf16, #tpu.memory_space<vmem>>, vector<128x128xbf16>
    %cst = arith.constant dense<0.000000e+00> : vector<128x128xf32>
    %6 = tpu.matmul %4, %5, %cst {dimension_numbers = #tpu.dot_dimension_numbers<[1], [0], [0], [1], [0, 0, 1, 1], [], []>} : vector<128x128xbf16>, vector<128x128xbf16>, vector<128x128xf32> -> vector<128x128xf32>
    %7 = arith.addf %3, %6 : vector<128x128xf32>
    %c0_6 = arith.constant 0 : index
    %c0_7 = arith.constant 0 : index
    %8 = vector.load %arg8[%c0_6, %c0_7] : memref<128x128xf32, #tpu.memory_space<vmem>>, vector<128x128xf32>
    tpu.vector_store %arg8[%c0_6, %c0_7], %7 {strides = array<i32>} : memref<128x128xf32, #tpu.memory_space<vmem>>, vector<128x128xf32>,
    %c0_i32_8 = arith.constant 0 : i32
    %9 = arith.cmpi eq, %arg1, %c0_i32_8 : i32
    %10 = arith.extui %9 : i1 to i32
    %c0_i32_9 = arith.constant 0 : i32
    %11 = arith.cmpi ne, %10, %c0_i32_9 : i32
    scf.if %11 {
      %c0_10 = arith.constant 0 : index
      %c0_11 = arith.constant 0 : index
      %12 = vector.load %arg4[%c0_10, %c0_11] : memref<128x128xf32, #tpu.memory_space<vmem>>, vector<128x128xf32>
      %cst_12 = arith.constant 0.666666686 : f32
      %13 = vector.broadcast %cst_12 : f32 to vector<128x128xf32>
      %14 = arith.mulf %13, %12 : vector<128x128xf32>
      %c0_13 = arith.constant 0 : index
      %c0_14 = arith.constant 0 : index
      %15 = vector.load %arg8[%c0_13, %c0_14] : memref<128x128xf32, #tpu.memory_space<vmem>>, vector<128x128xf32>
      %16 = arith.addf %14, %15 : vector<128x128xf32>
      %c0_15 = arith.constant 0 : index
      %c0_16 = arith.constant 0 : index
      %17 = vector.load %arg6[%c0_15, %c0_16] : memref<128x128xf32, #tpu.memory_space<vmem>>, vector<128x128xf32>
      tpu.vector_store %arg6[%c0_15, %c0_16], %16 {strides = array<i32>} : memref<128x128xf32, #tpu.memory_space<vmem>>, vector<128x128xf32>,
      %18 = arith.truncf %16 : vector<128x128xf32> to vector<128x128xbf16>
      %c0_17 = arith.constant 0 : index
      %c0_18 = arith.constant 0 : index
      %c0_19 = arith.constant 0 : index
      %19 = vector.load %arg5[%c0_17, %c0_18, %c0_19] : memref<4x128x128xbf16, #tpu.memory_space<vmem>>, vector<1x128x128xbf16>
      %20 = vector.shape_cast %19 : vector<1x128x128xbf16> to vector<128x128xbf16>
      %cst_20 = arith.constant dense<0.000000e+00> : vector<128x128xf32>
      %21 = tpu.matmul %18, %20, %cst_20 {dimension_numbers = #tpu.dot_dimension_numbers<[1], [0], [0], [1], [0, 0, 1, 1], [], []>} : vector<128x128xbf16>, vector<128x128xbf16>, vector<128x128xf32> -> vector<128x128xf32>
      %22 = arith.truncf %21 : vector<128x128xf32> to vector<128x128xbf16>
      %c0_21 = arith.constant 0 : index
      %c0_22 = arith.constant 0 : index
      %c0_23 = arith.constant 0 : index
      %23 = vector.load %arg7[%c0_21, %c0_22, %c0_23] : memref<4x128x128xbf16, #tpu.memory_space<vmem>>, vector<1x128x128xbf16>
      %24 = vector.shape_cast %23 : vector<1x128x128xbf16> to vector<128x128xbf16>
      %25 = vector.shape_cast %22 : vector<128x128xbf16> to vector<1x128x128xbf16>
      tpu.vector_store %arg7[%c0_21, %c0_22, %c0_23], %25 {strides = array<i32>} : memref<4x128x128xbf16, #tpu.memory_space<vmem>>, vector<1x128x128xbf16>,
      %c1 = arith.constant 1 : index
      %c0_24 = arith.constant 0 : index
      %c0_25 = arith.constant 0 : index
      %26 = vector.load %arg5[%c1, %c0_24, %c0_25] : memref<4x128x128xbf16, #tpu.memory_space<vmem>>, vector<1x128x128xbf16>
      %27 = vector.shape_cast %26 : vector<1x128x128xbf16> to vector<128x128xbf16>
      %cst_26 = arith.constant dense<0.000000e+00> : vector<128x128xf32>
      %28 = tpu.matmul %18, %27, %cst_26 {dimension_numbers = #tpu.dot_dimension_numbers<[1], [0], [0], [1], [0, 0, 1, 1], [], []>} : vector<128x128xbf16>, vector<128x128xbf16>, vector<128x128xf32> -> vector<128x128xf32>
      %29 = arith.truncf %28 : vector<128x128xf32> to vector<128x128xbf16>
      %c1_27 = arith.constant 1 : index
      %c0_28 = arith.constant 0 : index
      %c0_29 = arith.constant 0 : index
      %30 = vector.load %arg7[%c1_27, %c0_28, %c0_29] : memref<4x128x128xbf16, #tpu.memory_space<vmem>>, vector<1x128x128xbf16>
      %31 = vector.shape_cast %30 : vector<1x128x128xbf16> to vector<128x128xbf16>
      %32 = vector.shape_cast %29 : vector<128x128xbf16> to vector<1x128x128xbf16>
      tpu.vector_store %arg7[%c1_27, %c0_28, %c0_29], %32 {strides = array<i32>} : memref<4x128x128xbf16, #tpu.memory_space<vmem>>, vector<1x128x128xbf16>,
      %c2 = arith.constant 2 : index
      %c0_30 = arith.constant 0 : index
      %c0_31 = arith.constant 0 : index
      %33 = vector.load %arg5[%c2, %c0_30, %c0_31] : memref<4x128x128xbf16, #tpu.memory_space<vmem>>, vector<1x128x128xbf16>
      %34 = vector.shape_cast %33 : vector<1x128x128xbf16> to vector<128x128xbf16>
      %cst_32 = arith.constant dense<0.000000e+00> : vector<128x128xf32>
      %35 = tpu.matmul %18, %34, %cst_32 {dimension_numbers = #tpu.dot_dimension_numbers<[1], [0], [0], [1], [0, 0, 1, 1], [], []>} : vector<128x128xbf16>, vector<128x128xbf16>, vector<128x128xf32> -> vector<128x128xf32>
      %36 = arith.truncf %35 : vector<128x128xf32> to vector<128x128xbf16>
      %c2_33 = arith.constant 2 : index
      %c0_34 = arith.constant 0 : index
      %c0_35 = arith.constant 0 : index
      %37 = vector.load %arg7[%c2_33, %c0_34, %c0_35] : memref<4x128x128xbf16, #tpu.memory_space<vmem>>, vector<1x128x128xbf16>
      %38 = vector.shape_cast %37 : vector<1x128x128xbf16> to vector<128x128xbf16>
      %39 = vector.shape_cast %36 : vector<128x128xbf16> to vector<1x128x128xbf16>
      tpu.vector_store %arg7[%c2_33, %c0_34, %c0_35], %39 {strides = array<i32>} : memref<4x128x128xbf16, #tpu.memory_space<vmem>>, vector<1x128x128xbf16>,
      %c3 = arith.constant 3 : index
      %c0_36 = arith.constant 0 : index
      %c0_37 = arith.constant 0 : index
      %40 = vector.load %arg5[%c3, %c0_36, %c0_37] : memref<4x128x128xbf16, #tpu.memory_space<vmem>>, vector<1x128x128xbf16>
      %41 = vector.shape_cast %40 : vector<1x128x128xbf16> to vector<128x128xbf16>
      %cst_38 = arith.constant dense<0.000000e+00> : vector<128x128xf32>
      %42 = tpu.matmul %18, %41, %cst_38 {dimension_numbers = #tpu.dot_dimension_numbers<[1], [0], [0], [1], [0, 0, 1, 1], [], []>} : vector<128x128xbf16>, vector<128x128xbf16>, vector<128x128xf32> -> vector<128x128xf32>
      %43 = arith.truncf %42 : vector<128x128xf32> to vector<128x128xbf16>
      %c3_39 = arith.constant 3 : index
      %c0_40 = arith.constant 0 : index
      %c0_41 = arith.constant 0 : index
      %44 = vector.load %arg7[%c3_39, %c0_40, %c0_41] : memref<4x128x128xbf16, #tpu.memory_space<vmem>>, vector<1x128x128xbf16>
      %45 = vector.shape_cast %44 : vector<1x128x128xbf16> to vector<128x128xbf16>
      %46 = vector.shape_cast %43 : vector<128x128xbf16> to vector<1x128x128xbf16>
      tpu.vector_store %arg7[%c3_39, %c0_40, %c0_41], %46 {strides = array<i32>} : memref<4x128x128xbf16, #tpu.memory_space<vmem>>, vector<1x128x128xbf16>,
    } else {
    }
    return
  }
  func.func @transform_0(%arg0: i32, %arg1: i32) -> (i32, i32) {
    %c0_i32 = arith.constant 0 : i32
    return %arg0, %arg1 : i32, i32
  }
  func.func @transform_1(%arg0: i32, %arg1: i32) -> (i32, i32) {
    %c0_i32 = arith.constant 0 : i32
    %c0_i32_0 = arith.constant 0 : i32
    return %arg1, %c0_i32 : i32, i32
  }
  func.func @transform_2(%arg0: i32, %arg1: i32) -> (i32, i32) {
    %c0_i32 = arith.constant 0 : i32
    %c0_i32_0 = arith.constant 0 : i32
    return %arg0, %c0_i32 : i32, i32
  }
  func.func @transform_3(%arg0: i32, %arg1: i32) -> (i32, i32, i32) {
    %c0_i32 = arith.constant 0 : i32
    %c0_i32_0 = arith.constant 0 : i32
    %c0_i32_1 = arith.constant 0 : i32
    %c0_i32_2 = arith.constant 0 : i32
    return %c0_i32, %c0_i32_0, %c0_i32_1 : i32, i32, i32
  }
  func.func @transform_4(%arg0: i32, %arg1: i32) -> (i32, i32) {
    %c0_i32 = arith.constant 0 : i32
    %c0_i32_0 = arith.constant 0 : i32
    return %arg0, %c0_i32 : i32, i32
  }
  func.func @transform_5(%arg0: i32, %arg1: i32) -> (i32, i32, i32) {
    %c0_i32 = arith.constant 0 : i32
    %c0_i32_0 = arith.constant 0 : i32
    %c0_i32_1 = arith.constant 0 : i32
    return %c0_i32, %arg0, %c0_i32_0 : i32, i32, i32
  }
}

module attributes {stable_mosaic.version = 11 : i64} {
  func.func @_update_kernel(%arg0: i32, %arg1: i32, %arg2: memref<128x128xbf16, #tpu.memory_space<vmem>>, %arg3: memref<128x128xbf16, #tpu.memory_space<vmem>>, %arg4: memref<128x128xf32, #tpu.memory_space<vmem>>, %arg5: memref<4x128x128xbf16, #tpu.memory_space<vmem>>, %arg6: memref<128x128xf32, #tpu.memory_space<vmem>>, %arg7: memref<4x128x128xbf16, #tpu.memory_space<vmem>>, %arg8: memref<128x128xf32, #tpu.memory_space<vmem>>) attributes {dimension_semantics = [#tpu.dimension_semantics<parallel>, #tpu.dimension_semantics<arbitrary>], iteration_bounds = array<i64: 1, 1>, scalar_prefetch = 0 : i64, scratch_operands = 1 : i64, tpu.core_type = #tpu.core_type<tc>, window_params = [{transform_indices = @transform_0, window_bounds = array<i64: 128, 128>}, {transform_indices = @transform_1, window_bounds = array<i64: 128, 128>}, {transform_indices = @transform_2, window_bounds = array<i64: 128, 128>}, {pipeline_mode = #tpu.pipeline_mode<synchronous>, transform_indices = @transform_3, window_bounds = array<i64: 4, 128, 128>}, {transform_indices = @transform_4, window_bounds = array<i64: 128, 128>}, {transform_indices = @transform_5, window_bounds = array<i64: 4, 128, 128>}]} {
    %c0_i32 = arith.constant 0 : i32
    %0 = arith.cmpi eq, %arg1, %c0_i32 : i32
    %1 = arith.extui %0 : i1 to i32
    %c0_i32_0 = arith.constant 0 : i32
    %2 = arith.cmpi ne, %1, %c0_i32_0 : i32
    scf.if %2 {
      %cst_10 = arith.constant 0.000000e+00 : f32
      %12 = vector.broadcast %cst_10 : f32 to vector<128x128xf32>
      %c0_11 = arith.constant 0 : index
      %c0_12 = arith.constant 0 : index
      %13 = vector.load %arg8[%c0_11, %c0_12] : memref<128x128xf32, #tpu.memory_space<vmem>>, vector<128x128xf32>
      tpu.vector_store %arg8[%c0_11, %c0_12], %12 {strides = array<i32>} : memref<128x128xf32, #tpu.memory_space<vmem>>, vector<128x128xf32>,
    } else {
    }
    %c0 = arith.constant 0 : index
    %c0_1 = arith.constant 0 : index
    %3 = vector.load %arg8[%c0, %c0_1] : memref<128x128xf32, #tpu.memory_space<vmem>>, vector<128x128xf32>
    %c0_2 = arith.constant 0 : index
    %c0_3 = arith.constant 0 : index
    %4 = vector.load %arg2[%c0_2, %c0_3] : memref<128x128xbf16, #tpu.memory_space<vmem>>, vector<128x128xbf16>
    %c0_4 = arith.constant 0 : index
    %c0_5 = arith.constant 0 : index
    %5 = vector.load %arg3[%c0_4, %c0_5] : memref<128x128xbf16, #tpu.memory_space<vmem>>, vector<128x128xbf16>
    %cst = arith.constant dense<0.000000e+00> : vector<128x128xf32>
    %6 = tpu.matmul %4, %5, %cst {dimension_numbers = #tpu.dot_dimension_numbers<[1], [0], [0], [1], [0, 0, 1, 1], [], []>} : vector<128x128xbf16>, vector<128x128xbf16>, vector<128x128xf32> -> vector<128x128xf32>
    %7 = arith.addf %3, %6 : vector<128x128xf32>
    %c0_6 = arith.constant 0 : index
    %c0_7 = arith.constant 0 : index
    %8 = vector.load %arg8[%c0_6, %c0_7] : memref<128x128xf32, #tpu.memory_space<vmem>>, vector<128x128xf32>
    tpu.vector_store %arg8[%c0_6, %c0_7], %7 {strides = array<i32>} : memref<128x128xf32, #tpu.memory_space<vmem>>, vector<128x128xf32>,
    %c0_i32_8 = arith.constant 0 : i32
    %9 = arith.cmpi eq, %arg1, %c0_i32_8 : i32
    %10 = arith.extui %9 : i1 to i32
    %c0_i32_9 = arith.constant 0 : i32
    %11 = arith.cmpi ne, %10, %c0_i32_9 : i32
    scf.if %11 {
      %c0_10 = arith.constant 0 : index
      %c0_11 = arith.constant 0 : index
      %12 = vector.load %arg4[%c0_10, %c0_11] : memref<128x128xf32, #tpu.memory_space<vmem>>, vector<128x128xf32>
      %cst_12 = arith.constant 0.666666686 : f32
      %13 = vector.broadcast %cst_12 : f32 to vector<128x128xf32>
      %14 = arith.mulf %13, %12 : vector<128x128xf32>
      %c0_13 = arith.constant 0 : index
      %c0_14 = arith.constant 0 : index
      %15 = vector.load %arg8[%c0_13, %c0_14] : memref<128x128xf32, #tpu.memory_space<vmem>>, vector<128x128xf32>
      %16 = arith.addf %14, %15 : vector<128x128xf32>
      %c0_15 = arith.constant 0 : index
      %c0_16 = arith.constant 0 : index
      %17 = vector.load %arg6[%c0_15, %c0_16] : memref<128x128xf32, #tpu.memory_space<vmem>>, vector<128x128xf32>
      tpu.vector_store %arg6[%c0_15, %c0_16], %16 {strides = array<i32>} : memref<128x128xf32, #tpu.memory_space<vmem>>, vector<128x128xf32>,
      %18 = arith.truncf %16 : vector<128x128xf32> to vector<128x128xbf16>
      %c0_17 = arith.constant 0 : index
      %c0_18 = arith.constant 0 : index
      %c0_19 = arith.constant 0 : index
      %19 = vector.load %arg5[%c0_17, %c0_18, %c0_19] : memref<4x128x128xbf16, #tpu.memory_space<vmem>>, vector<1x128x128xbf16>
      %20 = vector.shape_cast %19 : vector<1x128x128xbf16> to vector<128x128xbf16>
      %cst_20 = arith.constant dense<0.000000e+00> : vector<128x128xf32>
      %21 = tpu.matmul %18, %20, %cst_20 {dimension_numbers = #tpu.dot_dimension_numbers<[1], [0], [0], [1], [0, 0, 1, 1], [], []>} : vector<128x128xbf16>, vector<128x128xbf16>, vector<128x128xf32> -> vector<128x128xf32>
      %22 = arith.truncf %21 : vector<128x128xf32> to vector<128x128xbf16>
      %c0_21 = arith.constant 0 : index
      %c0_22 = arith.constant 0 : index
      %c0_23 = arith.constant 0 : index
      %23 = vector.load %arg7[%c0_21, %c0_22, %c0_23] : memref<4x128x128xbf16, #tpu.memory_space<vmem>>, vector<1x128x128xbf16>
      %24 = vector.shape_cast %23 : vector<1x128x128xbf16> to vector<128x128xbf16>
      %25 = vector.shape_cast %22 : vector<128x128xbf16> to vector<1x128x128xbf16>
      tpu.vector_store %arg7[%c0_21, %c0_22, %c0_23], %25 {strides = array<i32>} : memref<4x128x128xbf16, #tpu.memory_space<vmem>>, vector<1x128x128xbf16>,
      %c1 = arith.constant 1 : index
      %c0_24 = arith.constant 0 : index
      %c0_25 = arith.constant 0 : index
      %26 = vector.load %arg5[%c1, %c0_24, %c0_25] : memref<4x128x128xbf16, #tpu.memory_space<vmem>>, vector<1x128x128xbf16>
      %27 = vector.shape_cast %26 : vector<1x128x128xbf16> to vector<128x128xbf16>
      %cst_26 = arith.constant dense<0.000000e+00> : vector<128x128xf32>
      %28 = tpu.matmul %18, %27, %cst_26 {dimension_numbers = #tpu.dot_dimension_numbers<[1], [0], [0], [1], [0, 0, 1, 1], [], []>} : vector<128x128xbf16>, vector<128x128xbf16>, vector<128x128xf32> -> vector<128x128xf32>
      %29 = arith.truncf %28 : vector<128x128xf32> to vector<128x128xbf16>
      %c1_27 = arith.constant 1 : index
      %c0_28 = arith.constant 0 : index
      %c0_29 = arith.constant 0 : index
      %30 = vector.load %arg7[%c1_27, %c0_28, %c0_29] : memref<4x128x128xbf16, #tpu.memory_space<vmem>>, vector<1x128x128xbf16>
      %31 = vector.shape_cast %30 : vector<1x128x128xbf16> to vector<128x128xbf16>
      %32 = vector.shape_cast %29 : vector<128x128xbf16> to vector<1x128x128xbf16>
      tpu.vector_store %arg7[%c1_27, %c0_28, %c0_29], %32 {strides = array<i32>} : memref<4x128x128xbf16, #tpu.memory_space<vmem>>, vector<1x128x128xbf16>,
      %c2 = arith.constant 2 : index
      %c0_30 = arith.constant 0 : index
      %c0_31 = arith.constant 0 : index
      %33 = vector.load %arg5[%c2, %c0_30, %c0_31] : memref<4x128x128xbf16, #tpu.memory_space<vmem>>, vector<1x128x128xbf16>
      %34 = vector.shape_cast %33 : vector<1x128x128xbf16> to vector<128x128xbf16>
      %cst_32 = arith.constant dense<0.000000e+00> : vector<128x128xf32>
      %35 = tpu.matmul %18, %34, %cst_32 {dimension_numbers = #tpu.dot_dimension_numbers<[1], [0], [0], [1], [0, 0, 1, 1], [], []>} : vector<128x128xbf16>, vector<128x128xbf16>, vector<128x128xf32> -> vector<128x128xf32>
      %36 = arith.truncf %35 : vector<128x128xf32> to vector<128x128xbf16>
      %c2_33 = arith.constant 2 : index
      %c0_34 = arith.constant 0 : index
      %c0_35 = arith.constant 0 : index
      %37 = vector.load %arg7[%c2_33, %c0_34, %c0_35] : memref<4x128x128xbf16, #tpu.memory_space<vmem>>, vector<1x128x128xbf16>
      %38 = vector.shape_cast %37 : vector<1x128x128xbf16> to vector<128x128xbf16>
      %39 = vector.shape_cast %36 : vector<128x128xbf16> to vector<1x128x128xbf16>
      tpu.vector_store %arg7[%c2_33, %c0_34, %c0_35], %39 {strides = array<i32>} : memref<4x128x128xbf16, #tpu.memory_space<vmem>>, vector<1x128x128xbf16>,
      %c3 = arith.constant 3 : index
      %c0_36 = arith.constant 0 : index
      %c0_37 = arith.constant 0 : index
      %40 = vector.load %arg5[%c3, %c0_36, %c0_37] : memref<4x128x128xbf16, #tpu.memory_space<vmem>>, vector<1x128x128xbf16>
      %41 = vector.shape_cast %40 : vector<1x128x128xbf16> to vector<128x128xbf16>
      %cst_38 = arith.constant dense<0.000000e+00> : vector<128x128xf32>
      %42 = tpu.matmul %18, %41, %cst_38 {dimension_numbers = #tpu.dot_dimension_numbers<[1], [0], [0], [1], [0, 0, 1, 1], [], []>} : vector<128x128xbf16>, vector<128x128xbf16>, vector<128x128xf32> -> vector<128x128xf32>
      %43 = arith.truncf %42 : vector<128x128xf32> to vector<128x128xbf16>
      %c3_39 = arith.constant 3 : index
      %c0_40 = arith.constant 0 : index
      %c0_41 = arith.constant 0 : index
      %44 = vector.load %arg7[%c3_39, %c0_40, %c0_41] : memref<4x128x128xbf16, #tpu.memory_space<vmem>>, vector<1x128x128xbf16>
      %45 = vector.shape_cast %44 : vector<1x128x128xbf16> to vector<128x128xbf16>
      %46 = vector.shape_cast %43 : vector<128x128xbf16> to vector<1x128x128xbf16>
      tpu.vector_store %arg7[%c3_39, %c0_40, %c0_41], %46 {strides = array<i32>} : memref<4x128x128xbf16, #tpu.memory_space<vmem>>, vector<1x128x128xbf16>,
    } else {
    }
    return
  }
  func.func @transform_0(%arg0: i32, %arg1: i32) -> (i32, i32) {
    %c0_i32 = arith.constant 0 : i32
    return %arg0, %arg1 : i32, i32
  }
  func.func @transform_1(%arg0: i32, %arg1: i32) -> (i32, i32) {
    %c0_i32 = arith.constant 0 : i32
    %c0_i32_0 = arith.constant 0 : i32
    return %arg1, %c0_i32 : i32, i32
  }
  func.func @transform_2(%arg0: i32, %arg1: i32) -> (i32, i32) {
    %c0_i32 = arith.constant 0 : i32
    %c0_i32_0 = arith.constant 0 : i32
    return %arg0, %c0_i32 : i32, i32
  }
  func.func @transform_3(%arg0: i32, %arg1: i32) -> (i32, i32, i32) {
    %c0_i32 = arith.constant 0 : i32
    %c0_i32_0 = arith.constant 0 : i32
    %c0_i32_1 = arith.constant 0 : i32
    %c0_i32_2 = arith.constant 0 : i32
    return %c0_i32, %c0_i32_0, %c0_i32_1 : i32, i32, i32
  }
  func.func @transform_4(%arg0: i32, %arg1: i32) -> (i32, i32) {
    %c0_i32 = arith.constant 0 : i32
    %c0_i32_0 = arith.constant 0 : i32
    return %arg0, %c0_i32 : i32, i32
  }
  func.func @transform_5(%arg0: i32, %arg1: i32) -> (i32, i32, i32) {
    %c0_i32 = arith.constant 0 : i32
    %c0_i32_0 = arith.constant 0 : i32
    %c0_i32_1 = arith.constant 0 : i32
    return %c0_i32, %arg0, %c0_i32_0 : i32, i32, i32
  }
}

module attributes {stable_mosaic.version = 11 : i64} {
  func.func @_tail_kernel(%arg0: i32, %arg1: memref<128x128xf32, #tpu.memory_space<vmem>>, %arg2: memref<128x128xbf16, #tpu.memory_space<vmem>>, %arg3: memref<1x128xf32, #tpu.memory_space<vmem>>, %arg4: memref<128x128xf32, #tpu.memory_space<vmem>>) attributes {dimension_semantics = [#tpu.dimension_semantics<parallel>], iteration_bounds = array<i64: 1>, scalar_prefetch = 0 : i64, scratch_operands = 0 : i64, tpu.core_type = #tpu.core_type<tc>, window_params = [{transform_indices = @transform_0, window_bounds = array<i64: 128, 128>}, {pipeline_mode = #tpu.pipeline_mode<synchronous>, transform_indices = @transform_1, window_bounds = array<i64: 128, 128>}, {pipeline_mode = #tpu.pipeline_mode<synchronous>, transform_indices = @transform_2, window_bounds = array<i64: 1, 128>}, {transform_indices = @transform_3, window_bounds = array<i64: 128, 128>}]} {
    %c0 = arith.constant 0 : index
    %c0_0 = arith.constant 0 : index
    %0 = vector.load %arg1[%c0, %c0_0] : memref<128x128xf32, #tpu.memory_space<vmem>>, vector<128x128xf32>
    %cst = arith.constant 0.000000e+00 : f32
    %1 = vector.broadcast %cst : f32 to vector<128x128xf32>
    %2 = arith.maximumf %0, %1 : vector<128x128xf32>
    %3 = arith.truncf %2 : vector<128x128xf32> to vector<128x128xbf16>
    %c0_1 = arith.constant 0 : index
    %c0_2 = arith.constant 0 : index
    %4 = vector.load %arg2[%c0_1, %c0_2] : memref<128x128xbf16, #tpu.memory_space<vmem>>, vector<128x128xbf16>
    %cst_3 = arith.constant dense<0.000000e+00> : vector<128x128xf32>
    %5 = tpu.matmul %3, %4, %cst_3 {dimension_numbers = #tpu.dot_dimension_numbers<[1], [0], [0], [1], [0, 0, 1, 1], [], []>} : vector<128x128xbf16>, vector<128x128xbf16>, vector<128x128xf32> -> vector<128x128xf32>
    %c0_4 = arith.constant 0 : index
    %c0_5 = arith.constant 0 : index
    %6 = vector.load %arg3[%c0_4, %c0_5] : memref<1x128xf32, #tpu.memory_space<vmem>>, vector<1x128xf32>
    %7 = vector.broadcast %6 : vector<1x128xf32> to vector<128x128xf32>
    %8 = arith.addf %5, %7 : vector<128x128xf32>
    %c0_6 = arith.constant 0 : index
    %c0_7 = arith.constant 0 : index
    %9 = vector.load %arg4[%c0_6, %c0_7] : memref<128x128xf32, #tpu.memory_space<vmem>>, vector<128x128xf32>
    tpu.vector_store %arg4[%c0_6, %c0_7], %8 {strides = array<i32>} : memref<128x128xf32, #tpu.memory_space<vmem>>, vector<128x128xf32>,
    return
  }
  func.func @transform_0(%arg0: i32) -> (i32, i32) {
    %c0_i32 = arith.constant 0 : i32
    %c0_i32_0 = arith.constant 0 : i32
    return %arg0, %c0_i32 : i32, i32
  }
  func.func @transform_1(%arg0: i32) -> (i32, i32) {
    %c0_i32 = arith.constant 0 : i32
    %c0_i32_0 = arith.constant 0 : i32
    %c0_i32_1 = arith.constant 0 : i32
    return %c0_i32, %c0_i32_0 : i32, i32
  }
  func.func @transform_2(%arg0: i32) -> (i32, i32) {
    %c0_i32 = arith.constant 0 : i32
    %c0_i32_0 = arith.constant 0 : i32
    %c0_i32_1 = arith.constant 0 : i32
    return %c0_i32, %c0_i32_0 : i32, i32
  }
  func.func @transform_3(%arg0: i32) -> (i32, i32) {
    %c0_i32 = arith.constant 0 : i32
    %c0_i32_0 = arith.constant 0 : i32
    return %arg0, %c0_i32 : i32, i32
  }
}

</mosaic_0001>

<llo_original>
// kernel: phenomnn_forward.8
$region0: #{phenomnn_forward.8}
  #allocation0 [shape = 'u32[]', space=smem, size = 0x4, offset = 0x4, fixed_abs, tag = 'smem constant byte address 0x4 - core index']
  #allocation1 [shape = 'u32[144,128]{1,0:T(1,128)}', space=vmem, size = 0x12000, scoped, tag = 'internal scratch']
  %s0 = inlined_call_operand.vmem [shape: bf16[4,128,128], index: 0, kind: input, shape index: {}, may-alias: {0,1}]
  %s1 = inlined_call_operand.vmem [shape: bf16[4,128,128], index: 1, kind: input, shape index: {}, may-alias: {0,1}]
  %s2 = inlined_call_operand.vmem [shape: bf16[128,128], index: 2, kind: output, shape index: {}]
  %s3 = sld [smem:[#allocation0]]
  $region18: #{phenomnn_forward.8} parent=0
    _
  %s5 = ssub.s32 1, %s3
  %s6 = scalar_select 0, %s5, %s3
  // Predicated region
  $region2: #{phenomnn_forward.8} parent=0 // pred_check
    _
  $region3: #{phenomnn_forward.8} parent=0 // pred_check_branch
    %8 = sbr.rel (0) target = $region5
  $region4: #{phenomnn_forward.8} parent=0 // pred_region
    %s9 = scalar_lea.vmem %s0, 64
  $region5: #{phenomnn_forward.8} parent=0 // pred_fallthru
    _
  // Predicated region
  $region6: #{phenomnn_forward.8} parent=0 // pred_check
    _
  $region7: #{phenomnn_forward.8} parent=0 // pred_check_branch
    %11 = sbr.rel (0) target = $region9
  $region8: #{phenomnn_forward.8} parent=0 // pred_region
    %s12 = scalar_lea.vmem %s1, 192
  $region9: #{phenomnn_forward.8} parent=0 // pred_fallthru
    _
  %s13 = scalar_lea.vmem %s0, 64
  %s14 = scalar_lea.vmem %s1, 192
  %s15 = scalar_lea.vmem %s0, 64
  %s16 = scalar_lea.vmem %s1, 192
  %s17 = smul.u32 0, 128
  %v18 = vlaneseq
  %v19 = vshrl.u32 %v18, 7
  %v20 = vadd.s32 %v19, 8
  %v21 = vadd.s32 %v19, 16
  %v22 = vadd.s32 %v19, 24
  %v23 = vadd.s32 %v19, 32
  %v24 = vadd.s32 %v19, 40
  %v25 = vadd.s32 %v19, 48
  %v26 = vadd.s32 %v19, 56
  %v27 = vadd.s32 %v19, 64
  %v28 = vadd.s32 %v19, 72
  %v29 = vadd.s32 %v19, 80
  %v30 = vadd.s32 %v19, 88
  %v31 = vadd.s32 %v19, 96
  %v32 = vadd.s32 %v19, 104
  %v33 = vadd.s32 %v19, 112
  %v34 = vadd.s32 %v19, 120
  %v35 = vstv %s17
  %v36 = vadd.s32 %v35, %v19
  %v37 = vadd.s32 %v35, %v20
  %v38 = vadd.s32 %v35, %v21
  %v39 = vadd.s32 %v35, %v22
  %v40 = vadd.s32 %v35, %v23
  %v41 = vadd.s32 %v35, %v24
  %v42 = vadd.s32 %v35, %v25
  %v43 = vadd.s32 %v35, %v26
  %v44 = vadd.s32 %v35, %v27
  %v45 = vadd.s32 %v35, %v28
  %v46 = vadd.s32 %v35, %v29
  %v47 = vadd.s32 %v35, %v30
  %v48 = vadd.s32 %v35, %v31
  %v49 = vadd.s32 %v35, %v32
  %v50 = vadd.s32 %v35, %v33
  %v51 = vadd.s32 %v35, %v34
  %s52 = smul.u32 0, 128
  %v53 = vlaneseq
  %v54 = vand.u32 %v53, 127
  %v55 = vstv %s52
  %v56 = vadd.s32 %v55, %v54
  %vm57 = vcmp.eq.s32.totalorder %v36, %v56
  %vm58 = vcmp.eq.s32.totalorder %v37, %v56
  %vm59 = vcmp.eq.s32.totalorder %v38, %v56
  %vm60 = vcmp.eq.s32.totalorder %v39, %v56
  %vm61 = vcmp.eq.s32.totalorder %v40, %v56
  %vm62 = vcmp.eq.s32.totalorder %v41, %v56
  %vm63 = vcmp.eq.s32.totalorder %v42, %v56
  %vm64 = vcmp.eq.s32.totalorder %v43, %v56
  %vm65 = vcmp.eq.s32.totalorder %v44, %v56
  %vm66 = vcmp.eq.s32.totalorder %v45, %v56
  %vm67 = vcmp.eq.s32.totalorder %v46, %v56
  %vm68 = vcmp.eq.s32.totalorder %v47, %v56
  %vm69 = vcmp.eq.s32.totalorder %v48, %v56
  %vm70 = vcmp.eq.s32.totalorder %v49, %v56
  %vm71 = vcmp.eq.s32.totalorder %v50, %v56
  %vm72 = vcmp.eq.s32.totalorder %v51, %v56
  %v73 = vsel %vm57, 1.0, 0.0
  %v74 = vsel %vm58, 1.0, 0.0
  %v75 = vsel %vm59, 1.0, 0.0
  %v76 = vsel %vm60, 1.0, 0.0
  %v77 = vsel %vm61, 1.0, 0.0
  %v78 = vsel %vm62, 1.0, 0.0
  %v79 = vsel %vm63, 1.0, 0.0
  %v80 = vsel %vm64, 1.0, 0.0
  %v81 = vsel %vm65, 1.0, 0.0
  %v82 = vsel %vm66, 1.0, 0.0
  %v83 = vsel %vm67, 1.0, 0.0
  %v84 = vsel %vm68, 1.0, 0.0
  %v85 = vsel %vm69, 1.0, 0.0
  %v86 = vsel %vm70, 1.0, 0.0
  %v87 = vsel %vm71, 1.0, 0.0
  %v88 = vsel %vm72, 1.0, 0.0
  %v89 = vld [vmem:[%s15] sm:$0xf]
  %v90 = vld [vmem:[%s15 + $0x4] sm:$0xf]
  %v91 = vld [vmem:[%s15 + $0x8] sm:$0xf]
  %v92 = vld [vmem:[%s15 + $0xc] sm:$0xf]
  %v93 = vld [vmem:[%s15 + $0x10] sm:$0xf]
  %v94 = vld [vmem:[%s15 + $0x14] sm:$0xf]
  %v95 = vld [vmem:[%s15 + $0x18] sm:$0xf]
  %v96 = vld [vmem:[%s15 + $0x1c] sm:$0xf]
  %v97 = vld [vmem:[%s15 + $0x20] sm:$0xf]
  %v98 = vld [vmem:[%s15 + $0x24] sm:$0xf]
  %v99 = vld [vmem:[%s15 + $0x28] sm:$0xf]
  %v100 = vld [vmem:[%s15 + $0x2c] sm:$0xf]
  %v101 = vld [vmem:[%s15 + $0x30] sm:$0xf]
  %v102 = vld [vmem:[%s15 + $0x34] sm:$0xf]
  %v103 = vld [vmem:[%s15 + $0x38] sm:$0xf]
  %v104 = vld [vmem:[%s15 + $0x3c] sm:$0xf]
  %v105 = vunpack.c.l.bf16 %v89
  %v106 = vunpack.c.l.bf16 %v90
  %v107 = vunpack.c.l.bf16 %v91
  %v108 = vunpack.c.l.bf16 %v92
  %v109 = vunpack.c.l.bf16 %v93
  %v110 = vunpack.c.l.bf16 %v94
  %v111 = vunpack.c.l.bf16 %v95
  %v112 = vunpack.c.l.bf16 %v96
  %v113 = vunpack.c.l.bf16 %v97
  %v114 = vunpack.c.l.bf16 %v98
  %v115 = vunpack.c.l.bf16 %v99
  %v116 = vunpack.c.l.bf16 %v100
  %v117 = vunpack.c.l.bf16 %v101
  %v118 = vunpack.c.l.bf16 %v102
  %v119 = vunpack.c.l.bf16 %v103
  %v120 = vunpack.c.l.bf16 %v104
  %v121 = vld [vmem:[%s16] sm:$0xf]
  %v122 = vld [vmem:[%s16 + $0x4] sm:$0xf]
  %v123 = vld [vmem:[%s16 + $0x8] sm:$0xf]
  %v124 = vld [vmem:[%s16 + $0xc] sm:$0xf]
  %v125 = vld [vmem:[%s16 + $0x10] sm:$0xf]
  %v126 = vld [vmem:[%s16 + $0x14] sm:$0xf]
  %v127 = vld [vmem:[%s16 + $0x18] sm:$0xf]
  %v128 = vld [vmem:[%s16 + $0x1c] sm:$0xf]
  %v129 = vld [vmem:[%s16 + $0x20] sm:$0xf]
  %v130 = vld [vmem:[%s16 + $0x24] sm:$0xf]
  %v131 = vld [vmem:[%s16 + $0x28] sm:$0xf]
  %v132 = vld [vmem:[%s16 + $0x2c] sm:$0xf]
  %v133 = vld [vmem:[%s16 + $0x30] sm:$0xf]
  %v134 = vld [vmem:[%s16 + $0x34] sm:$0xf]
  %v135 = vld [vmem:[%s16 + $0x38] sm:$0xf]
  %v136 = vld [vmem:[%s16 + $0x3c] sm:$0xf]
  %v137 = vunpack.c.l.bf16 %v121
  %v138 = vunpack.c.l.bf16 %v122
  %v139 = vunpack.c.l.bf16 %v123
  %v140 = vunpack.c.l.bf16 %v124
  %v141 = vunpack.c.l.bf16 %v125
  %v142 = vunpack.c.l.bf16 %v126
  %v143 = vunpack.c.l.bf16 %v127
  %v144 = vunpack.c.l.bf16 %v128
  %v145 = vunpack.c.l.bf16 %v129
  %v146 = vunpack.c.l.bf16 %v130
  %v147 = vunpack.c.l.bf16 %v131
  %v148 = vunpack.c.l.bf16 %v132
  %v149 = vunpack.c.l.bf16 %v133
  %v150 = vunpack.c.l.bf16 %v134
  %v151 = vunpack.c.l.bf16 %v135
  %v152 = vunpack.c.l.bf16 %v136
  %v153 = vadd.f32 %v105, %v137
  %v154 = vadd.f32 %v106, %v138
  %v155 = vadd.f32 %v107, %v139
  %v156 = vadd.f32 %v108, %v140
  %v157 = vadd.f32 %v109, %v141
  %v158 = vadd.f32 %v110, %v142
  %v159 = vadd.f32 %v111, %v143
  %v160 = vadd.f32 %v112, %v144
  %v161 = vadd.f32 %v113, %v145
  %v162 = vadd.f32 %v114, %v146
  %v163 = vadd.f32 %v115, %v147
  %v164 = vadd.f32 %v116, %v148
  %v165 = vadd.f32 %v117, %v149
  %v166 = vadd.f32 %v118, %v150
  %v167 = vadd.f32 %v119, %v151
  %v168 = vadd.f32 %v120, %v152
  %v169 = vadd.f32 %v153, %v73
  %v170 = vadd.f32 %v154, %v74
  %v171 = vadd.f32 %v155, %v75
  %v172 = vadd.f32 %v156, %v76
  %v173 = vadd.f32 %v157, %v77
  %v174 = vadd.f32 %v158, %v78
  %v175 = vadd.f32 %v159, %v79
  %v176 = vadd.f32 %v160, %v80
  %v177 = vadd.f32 %v161, %v81
  %v178 = vadd.f32 %v162, %v82
  %v179 = vadd.f32 %v163, %v83
  %v180 = vadd.f32 %v164, %v84
  %v181 = vadd.f32 %v165, %v85
  %v182 = vadd.f32 %v166, %v86
  %v183 = vadd.f32 %v167, %v87
  %v184 = vadd.f32 %v168, %v88
  %vm185 = vcmp.lt.s32.totalorder %v36, 64
  %vm186 = vcmp.lt.s32.totalorder %v37, 64
  %vm187 = vcmp.lt.s32.totalorder %v38, 64
  %vm188 = vcmp.lt.s32.totalorder %v39, 64
  %vm189 = vcmp.lt.s32.totalorder %v40, 64
  %vm190 = vcmp.lt.s32.totalorder %v41, 64
  %vm191 = vcmp.lt.s32.totalorder %v42, 64
  %vm192 = vcmp.lt.s32.totalorder %v43, 64
  %vm193 = vcmp.lt.s32.totalorder %v44, 64
  %vm194 = vcmp.lt.s32.totalorder %v45, 64
  %vm195 = vcmp.lt.s32.totalorder %v46, 64
  %vm196 = vcmp.lt.s32.totalorder %v47, 64
  %vm197 = vcmp.lt.s32.totalorder %v48, 64
  %vm198 = vcmp.lt.s32.totalorder %v49, 64
  %vm199 = vcmp.lt.s32.totalorder %v50, 64
  %vm200 = vcmp.lt.s32.totalorder %v51, 64
  %vm201 = vcmp.lt.s32.totalorder %v56, 64
  %vm202 = vmand %vm185, %vm201
  %vm203 = vmand %vm186, %vm201
  %vm204 = vmand %vm187, %vm201
  %vm205 = vmand %vm188, %vm201
  %vm206 = vmand %vm189, %vm201
  %vm207 = vmand %vm190, %vm201
  %vm208 = vmand %vm191, %vm201
  %vm209 = vmand %vm192, %vm201
  %vm210 = vmand %vm193, %vm201
  %vm211 = vmand %vm194, %vm201
  %vm212 = vmand %vm195, %vm201
  %vm213 = vmand %vm196, %vm201
  %vm214 = vmand %vm197, %vm201
  %vm215 = vmand %vm198, %vm201
  %vm216 = vmand %vm199, %vm201
  %vm217 = vmand %vm200, %vm201
  %v218 = vsel %vm202, %v169, 1.0
  %v219 = vsel %vm203, %v170, 1.0
  %v220 = vsel %vm204, %v171, 1.0
  %v221 = vsel %vm205, %v172, 1.0
  %v222 = vsel %vm206, %v173, 1.0
  %v223 = vsel %vm207, %v174, 1.0
  %v224 = vsel %vm208, %v175, 1.0
  %v225 = vsel %vm209, %v176, 1.0
  %v226 = vsel %vm210, %v177, 1.0
  %v227 = vsel %vm211, %v178, 1.0
  %v228 = vsel %vm212, %v179, 1.0
  %v229 = vsel %vm213, %v180, 1.0
  %v230 = vsel %vm214, %v181, 1.0
  %v231 = vsel %vm215, %v182, 1.0
  %v232 = vsel %vm216, %v183, 1.0
  %v233 = vsel %vm217, %v184, 1.0
  %v234 = vrcp.pop %v218
  %v235 = vmul.f32 0.33333334, %v234
  %v236 = vrcp.pop %v219
  %v237 = vmul.f32 0.33333334, %v236
  %v238 = vrcp.pop %v220
  %v239 = vmul.f32 0.33333334, %v238
  %v240 = vrcp.pop %v221
  %v241 = vmul.f32 0.33333334, %v240
  %v242 = vrcp.pop %v222
  %v243 = vmul.f32 0.33333334, %v242
  %v244 = vrcp.pop %v223
  %v245 = vmul.f32 0.33333334, %v244
  %v246 = vrcp.pop %v224
  %v247 = vmul.f32 0.33333334, %v246
  %v248 = vrcp.pop %v225
  %v249 = vmul.f32 0.33333334, %v248
  %v250 = vrcp.pop %v226
  %v251 = vmul.f32 0.33333334, %v250
  %v252 = vrcp.pop %v227
  %v253 = vmul.f32 0.33333334, %v252
  %v254 = vrcp.pop %v228
  %v255 = vmul.f32 0.33333334, %v254
  %v256 = vrcp.pop %v229
  %v257 = vmul.f32 0.33333334, %v256
  %v258 = vrcp.pop %v230
  %v259 = vmul.f32 0.33333334, %v258
  %v260 = vrcp.pop %v231
  %v261 = vmul.f32 0.33333334, %v260
  %v262 = vrcp.pop %v232
  %v263 = vmul.f32 0.33333334, %v262
  %v264 = vrcp.pop %v233
  %v265 = vmul.f32 0.33333334, %v264
  %v266 = vsel %vm202, %v235, 0.0
  %v267 = vsel %vm203, %v237, 0.0
  %v268 = vsel %vm204, %v239, 0.0
  %v269 = vsel %vm205, %v241, 0.0
  %v270 = vsel %vm206, %v243, 0.0
  %v271 = vsel %vm207, %v245, 0.0
  %v272 = vsel %vm208, %v247, 0.0
  %v273 = vsel %vm209, %v249, 0.0
  %v274 = vsel %vm210, %v251, 0.0
  %v275 = vsel %vm211, %v253, 0.0
  %v276 = vsel %vm212, %v255, 0.0
  %v277 = vsel %vm213, %v257, 0.0
  %v278 = vsel %vm214, %v259, 0.0
  %v279 = vsel %vm215, %v261, 0.0
  %v280 = vsel %vm216, %v263, 0.0
  %v281 = vsel %vm217, %v265, 0.0
  %v282 = vpack.c.bf16 %v267, %v266
  %v283 = vpack.c.bf16 %v269, %v268
  %v284 = vpack.c.bf16 %v271, %v270
  %v285 = vpack.c.bf16 %v273, %v272
  %v286 = vpack.c.bf16 %v275, %v274
  %v287 = vpack.c.bf16 %v277, %v276
  %v288 = vpack.c.bf16 %v279, %v278
  %v289 = vpack.c.bf16 %v281, %v280
  %v298 = vunpack.c.l.b16 %v282
  %v299 = vunpack.c.h.b16 %v282
  %v300 = vunpack.c.l.b16 %v283
  %v301 = vunpack.c.h.b16 %v283
  %v302 = vunpack.c.l.b16 %v284
  %v303 = vunpack.c.h.b16 %v284
  %v304 = vunpack.c.l.b16 %v285
  %v305 = vunpack.c.h.b16 %v285
  %v306 = vunpack.c.l.b16 %v286
  %v307 = vunpack.c.h.b16 %v286
  %v308 = vunpack.c.l.b16 %v287
  %v309 = vunpack.c.h.b16 %v287
  %v310 = vunpack.c.l.b16 %v288
  %v311 = vunpack.c.h.b16 %v288
  %v312 = vunpack.c.l.b16 %v289
  %v313 = vunpack.c.h.b16 %v289
  %v314 = vpack.c.b16 %v298, %v298
  %v315 = vpack.c.b16 %v299, %v299
  %v316 = vpack.c.b16 %v300, %v300
  %v317 = vpack.c.b16 %v301, %v301
  %v318 = vpack.c.b16 %v302, %v302
  %v319 = vpack.c.b16 %v303, %v303
  %v320 = vpack.c.b16 %v304, %v304
  %v321 = vpack.c.b16 %v305, %v305
  %v322 = vpack.c.b16 %v306, %v306
  %v323 = vpack.c.b16 %v307, %v307
  %v324 = vpack.c.b16 %v308, %v308
  %v325 = vpack.c.b16 %v309, %v309
  %v326 = vpack.c.b16 %v310, %v310
  %v327 = vpack.c.b16 %v311, %v311
  %v328 = vpack.c.b16 %v312, %v312
  %v329 = vpack.c.b16 %v313, %v313
  %346 = vst [vmem:[%s2] sm:$0xf] %v314
  %347 = vst [vmem:[%s2 + $0x4] sm:$0xf] %v315
  %348 = vst [vmem:[%s2 + $0x8] sm:$0xf] %v316
  %349 = vst [vmem:[%s2 + $0xc] sm:$0xf] %v317
  %350 = vst [vmem:[%s2 + $0x10] sm:$0xf] %v318
  %351 = vst [vmem:[%s2 + $0x14] sm:$0xf] %v319
  %352 = vst [vmem:[%s2 + $0x18] sm:$0xf] %v320
  %353 = vst [vmem:[%s2 + $0x1c] sm:$0xf] %v321
  %354 = vst [vmem:[%s2 + $0x20] sm:$0xf] %v322
  %355 = vst [vmem:[%s2 + $0x24] sm:$0xf] %v323
  %356 = vst [vmem:[%s2 + $0x28] sm:$0xf] %v324
  %357 = vst [vmem:[%s2 + $0x2c] sm:$0xf] %v325
  %358 = vst [vmem:[%s2 + $0x30] sm:$0xf] %v326
  %359 = vst [vmem:[%s2 + $0x34] sm:$0xf] %v327
  %360 = vst [vmem:[%s2 + $0x38] sm:$0xf] %v328
  %361 = vst [vmem:[%s2 + $0x3c] sm:$0xf] %v329
  // Predicated region
  $region10: #{phenomnn_forward.8} parent=0 // pred_check
    _
  $region11: #{phenomnn_forward.8} parent=0 // pred_check_branch
    %363 = sbr.rel (0) target = $region13
  $region12: #{phenomnn_forward.8} parent=0 // pred_region
    _
  $region13: #{phenomnn_forward.8} parent=0 // pred_fallthru
    _
  // Predicated region
  $region14: #{phenomnn_forward.8} parent=0 // pred_check
    _
  $region15: #{phenomnn_forward.8} parent=0 // pred_check_branch
    %365 = sbr.rel (0) target = $region17
  $region16: #{phenomnn_forward.8} parent=0 // pred_region
    _
  $region17: #{phenomnn_forward.8} parent=0 // pred_fallthru
    _

// kernel: phenomnn_forward.7
$region0: #{phenomnn_forward.7}
  #allocation0 [shape = 'u32[]', space=smem, size = 0x4, offset = 0x4, fixed_abs, tag = 'smem constant byte address 0x4 - core index']
  #allocation1 [shape = 'u32[144,128]{1,0:T(1,128)}', space=vmem, size = 0x12000, scoped, tag = 'internal scratch']
  %s0 = inlined_call_operand.vmem [shape: bf16[128,128], index: 0, kind: input, shape index: {}]
  %s1 = inlined_call_operand.vmem [shape: bf16[128,128], index: 1, kind: input, shape index: {}]
  %s2 = inlined_call_operand.vmem [shape: f32[1,128], index: 2, kind: input, shape index: {}]
  %s3 = inlined_call_operand.vmem [shape: bf16[4,128,128], index: 3, kind: input, shape index: {}]
  %s4 = inlined_call_operand.vmem [shape: f32[128,128], index: 4, kind: output, shape index: {0}]
  %s5 = inlined_call_operand.vmem [shape: bf16[4,128,128], index: 5, kind: output, shape index: {1}]
  %6 = xla_tuple %s4, %s5
  %s7 = sld [smem:[#allocation0]]
  $region34: #{phenomnn_forward.7} parent=0
    _
  %s9 = ssub.s32 1, %s7
  %s10 = scalar_select 0, %s9, %s7
  // Predicated region
  $region2: #{phenomnn_forward.7} parent=0 // pred_check
    _
  $region3: #{phenomnn_forward.7} parent=0 // pred_check_branch
    %12 = sbr.rel (0) target = $region5
  $region4: #{phenomnn_forward.7} parent=0 // pred_region
    _
  $region5: #{phenomnn_forward.7} parent=0 // pred_fallthru
    _
  // Predicated region
  $region6: #{phenomnn_forward.7} parent=0 // pred_check
    _
  $region7: #{phenomnn_forward.7} parent=0 // pred_check_branch
    %14 = sbr.rel (0) target = $region9
  $region8: #{phenomnn_forward.7} parent=0 // pred_region
    _
  $region9: #{phenomnn_forward.7} parent=0 // pred_fallthru
    _
  // Predicated region
  $region10: #{phenomnn_forward.7} parent=0 // pred_check
    _
  $region11: #{phenomnn_forward.7} parent=0 // pred_check_branch
    %16 = sbr.rel (0) target = $region13
  $region12: #{phenomnn_forward.7} parent=0 // pred_region
    _
  $region13: #{phenomnn_forward.7} parent=0 // pred_fallthru
    _
  // Predicated region
  $region14: #{phenomnn_forward.7} parent=0 // pred_check
    _
  $region15: #{phenomnn_forward.7} parent=0 // pred_check_branch
    %18 = sbr.rel (0) target = $region17
  $region16: #{phenomnn_forward.7} parent=0 // pred_region
    _
  $region17: #{phenomnn_forward.7} parent=0 // pred_fallthru
    _
  %v20 = vld [vmem:[%s0] sm:$0xf]
  %v21 = vld [vmem:[%s0 + $0x4] sm:$0xf]
  %v22 = vld [vmem:[%s0 + $0x8] sm:$0xf]
  %v23 = vld [vmem:[%s0 + $0xc] sm:$0xf]
  %v24 = vld [vmem:[%s0 + $0x10] sm:$0xf]
  %v25 = vld [vmem:[%s0 + $0x14] sm:$0xf]
  %v26 = vld [vmem:[%s0 + $0x18] sm:$0xf]
  %v27 = vld [vmem:[%s0 + $0x1c] sm:$0xf]
  %v28 = vld [vmem:[%s0 + $0x20] sm:$0xf]
  %v29 = vld [vmem:[%s0 + $0x24] sm:$0xf]
  %v30 = vld [vmem:[%s0 + $0x28] sm:$0xf]
  %v31 = vld [vmem:[%s0 + $0x2c] sm:$0xf]
  %v32 = vld [vmem:[%s0 + $0x30] sm:$0xf]
  %v33 = vld [vmem:[%s0 + $0x34] sm:$0xf]
  %v34 = vld [vmem:[%s0 + $0x38] sm:$0xf]
  %v35 = vld [vmem:[%s0 + $0x3c] sm:$0xf]
  %v36 = vld [vmem:[%s1] sm:$0xf]
  %v37 = vld [vmem:[%s1 + $0x4] sm:$0xf]
  %v38 = vld [vmem:[%s1 + $0x8] sm:$0xf]
  %v39 = vld [vmem:[%s1 + $0xc] sm:$0xf]
  %v40 = vld [vmem:[%s1 + $0x10] sm:$0xf]
  %v41 = vld [vmem:[%s1 + $0x14] sm:$0xf]
  %v42 = vld [vmem:[%s1 + $0x18] sm:$0xf]
  %v43 = vld [vmem:[%s1 + $0x1c] sm:$0xf]
  %v44 = vld [vmem:[%s1 + $0x20] sm:$0xf]
  %v45 = vld [vmem:[%s1 + $0x24] sm:$0xf]
  %v46 = vld [vmem:[%s1 + $0x28] sm:$0xf]
  %v47 = vld [vmem:[%s1 + $0x2c] sm:$0xf]
  %v48 = vld [vmem:[%s1 + $0x30] sm:$0xf]
  %v49 = vld [vmem:[%s1 + $0x34] sm:$0xf]
  %v50 = vld [vmem:[%s1 + $0x38] sm:$0xf]
  %v51 = vld [vmem:[%s1 + $0x3c] sm:$0xf]
  %v52 = vld [vmem:[%s2] sm:$0x1]
  %v54 = vlaneseq
  %v55 = vshrl.u32 %v54, 7
  %v56 = vsub.s32 0, %v55
  %v57 = vrot.slane %v52, %v56
  %v75 = vunpack.c.l.b16 %v20
  %v76 = vunpack.c.l.b16 %v21
  %v77 = vunpack.c.l.b16 %v22
  %v78 = vunpack.c.l.b16 %v23
  %v79 = vunpack.c.l.b16 %v24
  %v80 = vunpack.c.l.b16 %v25
  %v81 = vunpack.c.l.b16 %v26
  %v82 = vunpack.c.l.b16 %v27
  %v83 = vunpack.c.l.b16 %v28
  %v84 = vunpack.c.l.b16 %v29
  %v85 = vunpack.c.l.b16 %v30
  %v86 = vunpack.c.l.b16 %v31
  %v87 = vunpack.c.l.b16 %v32
  %v88 = vunpack.c.l.b16 %v33
  %v89 = vunpack.c.l.b16 %v34
  %v90 = vunpack.c.l.b16 %v35
  %v91 = vpack.c.b16 %v76, %v75
  %v92 = vpack.c.b16 %v78, %v77
  %v93 = vpack.c.b16 %v80, %v79
  %v94 = vpack.c.b16 %v82, %v81
  %v95 = vpack.c.b16 %v84, %v83
  %v96 = vpack.c.b16 %v86, %v85
  %v97 = vpack.c.b16 %v88, %v87
  %v98 = vpack.c.b16 %v90, %v89
  %v123 = vunpack.c.l.b16 %v36
  %v124 = vunpack.c.l.b16 %v37
  %v125 = vunpack.c.l.b16 %v38
  %v126 = vunpack.c.l.b16 %v39
  %v127 = vunpack.c.l.b16 %v40
  %v128 = vunpack.c.l.b16 %v41
  %v129 = vunpack.c.l.b16 %v42
  %v130 = vunpack.c.l.b16 %v43
  %v131 = vunpack.c.l.b16 %v44
  %v132 = vunpack.c.l.b16 %v45
  %v133 = vunpack.c.l.b16 %v46
  %v134 = vunpack.c.l.b16 %v47
  %v135 = vunpack.c.l.b16 %v48
  %v136 = vunpack.c.l.b16 %v49
  %v137 = vunpack.c.l.b16 %v50
  %v138 = vunpack.c.l.b16 %v51
  %v139 = vpack.c.b16 %v124, %v123
  %v140 = vpack.c.b16 %v126, %v125
  %v141 = vpack.c.b16 %v128, %v127
  %v142 = vpack.c.b16 %v130, %v129
  %v143 = vpack.c.b16 %v132, %v131
  %v144 = vpack.c.b16 %v134, %v133
  %v145 = vpack.c.b16 %v136, %v135
  %v146 = vpack.c.b16 %v138, %v137
  %155 = vmatprep.subr.bf16.mxu0 0
  %156 = vmatpush1.bf16.msra.mxu0 %v146
  %157 = vmatprep.subr.bf16.mxu0 0
  %158 = vmatpush1.bf16.msra.mxu0 %v145
  %159 = vmatprep.subr.bf16.mxu0 0
  %160 = vmatpush1.bf16.msra.mxu0 %v144
  %161 = vmatprep.subr.bf16.mxu0 0
  %162 = vmatpush1.bf16.msra.mxu0 %v143
  %163 = vmatprep.subr.bf16.mxu0 0
  %164 = vmatpush1.bf16.msra.mxu0 %v142
  %165 = vmatprep.subr.bf16.mxu0 0
  %166 = vmatpush1.bf16.msra.mxu0 %v141
  %167 = vmatprep.subr.bf16.mxu0 0
  %168 = vmatpush1.bf16.msra.mxu0 %v140
  %169 = vmatprep.subr.bf16.mxu0 0
  %170 = vmatpush1.bf16.msra.mxu0 %v139
  %171 = vmatprep.subr.bf16.mxu0 0
  %172 = vmatpush2.bf16.msra.mxu0 0
  %173 = vmatprep.subr.bf16.mxu0 0
  %174 = vmatpush2.bf16.msra.mxu0 0
  %175 = vmatprep.subr.bf16.mxu0 0
  %176 = vmatpush2.bf16.msra.mxu0 0
  %177 = vmatprep.subr.bf16.mxu0 0
  %178 = vmatpush2.bf16.msra.mxu0 0
  %179 = vmatprep.subr.bf16.mxu0 0
  %180 = vmatpush2.bf16.msra.mxu0 0
  %181 = vmatprep.subr.bf16.mxu0 0
  %182 = vmatpush2.bf16.msra.mxu0 0
  %183 = vmatprep.subr.bf16.mxu0 0
  %184 = vmatpush2.bf16.msra.mxu0 0
  %185 = vmatprep.subr.bf16.mxu0 0
  %186 = vmatpush2.bf16.msra.mxu0 0
  %187 = vmatprep.mubr.bf16.mxu0 0
  %188 = vmatmul.mubr.bf16.gmra.mxu0 %v91
  %v189 = vpop.f32.mrf.mxu0
  %v190 = vadd.f32 %v57, %v189
  %v191 = vpop.f32.mrf.mxu0
  %v192 = vpop.f32.mrf.mxu0
  %v193 = vadd.f32 %v57, %v192
  %v194 = vpop.f32.mrf.mxu0
  %195 = vmatprep.mubr.bf16.mxu0 0
  %196 = vmatmul.mubr.bf16.gmra.mxu0 %v92
  %v197 = vpop.f32.mrf.mxu0
  %v198 = vadd.f32 %v57, %v197
  %v199 = vpop.f32.mrf.mxu0
  %v200 = vpop.f32.mrf.mxu0
  %v201 = vadd.f32 %v57, %v200
  %v202 = vpop.f32.mrf.mxu0
  %203 = vmatprep.mubr.bf16.mxu0 0
  %204 = vmatmul.mubr.bf16.gmra.mxu0 %v93
  %v205 = vpop.f32.mrf.mxu0
  %v206 = vadd.f32 %v57, %v205
  %v207 = vpop.f32.mrf.mxu0
  %v208 = vpop.f32.mrf.mxu0
  %v209 = vadd.f32 %v57, %v208
  %v210 = vpop.f32.mrf.mxu0
  %211 = vmatprep.mubr.bf16.mxu0 0
  %212 = vmatmul.mubr.bf16.gmra.mxu0 %v94
  %v213 = vpop.f32.mrf.mxu0
  %v214 = vadd.f32 %v57, %v213
  %v215 = vpop.f32.mrf.mxu0
  %v216 = vpop.f32.mrf.mxu0
  %v217 = vadd.f32 %v57, %v216
  %v218 = vpop.f32.mrf.mxu0
  %219 = vmatprep.mubr.bf16.mxu0 0
  %220 = vmatmul.mubr.bf16.gmra.mxu0 %v95
  %v221 = vpop.f32.mrf.mxu0
  %v222 = vadd.f32 %v57, %v221
  %v223 = vpop.f32.mrf.mxu0
  %v224 = vpop.f32.mrf.mxu0
  %v225 = vadd.f32 %v57, %v224
  %v226 = vpop.f32.mrf.mxu0
  %227 = vmatprep.mubr.bf16.mxu0 0
  %228 = vmatmul.mubr.bf16.gmra.mxu0 %v96
  %v229 = vpop.f32.mrf.mxu0
  %v230 = vadd.f32 %v57, %v229
  %v231 = vpop.f32.mrf.mxu0
  %v232 = vpop.f32.mrf.mxu0
  %v233 = vadd.f32 %v57, %v232
  %v234 = vpop.f32.mrf.mxu0
  %235 = vmatprep.mubr.bf16.mxu0 0
  %236 = vmatmul.mubr.bf16.gmra.mxu0 %v97
  %v237 = vpop.f32.mrf.mxu0
  %v238 = vadd.f32 %v57, %v237
  %v239 = vpop.f32.mrf.mxu0
  %v240 = vpop.f32.mrf.mxu0
  %v241 = vadd.f32 %v57, %v240
  %v242 = vpop.f32.mrf.mxu0
  %243 = vmatprep.mubr.bf16.mxu0 0
  %244 = vmatmul.mubr.bf16.gmra.mxu0 %v98
  %v245 = vpop.f32.mrf.mxu0
  %v246 = vadd.f32 %v57, %v245
  %v247 = vpop.f32.mrf.mxu0
  %v248 = vpop.f32.mrf.mxu0
  %v249 = vadd.f32 %v57, %v248
  %v250 = vpop.f32.mrf.mxu0
  %251 = vdwg.mxu0
  %v252 = vmax.f32 %v190, 0.0
  %v253 = vmax.f32 %v193, 0.0
  %v254 = vmax.f32 %v198, 0.0
  %v255 = vmax.f32 %v201, 0.0
  %v256 = vmax.f32 %v206, 0.0
  %v257 = vmax.f32 %v209, 0.0
  %v258 = vmax.f32 %v214, 0.0
  %v259 = vmax.f32 %v217, 0.0
  %v260 = vmax.f32 %v222, 0.0
  %v261 = vmax.f32 %v225, 0.0
  %v262 = vmax.f32 %v230, 0.0
  %v263 = vmax.f32 %v233, 0.0
  %v264 = vmax.f32 %v238, 0.0
  %v265 = vmax.f32 %v241, 0.0
  %v266 = vmax.f32 %v246, 0.0
  %v267 = vmax.f32 %v249, 0.0
  %268 = vst [vmem:[%s4] sm:$0xff] %v252
  %269 = vst [vmem:[%s4 + $0x8] sm:$0xff] %v253
  %270 = vst [vmem:[%s4 + $0x10] sm:$0xff] %v254
  %271 = vst [vmem:[%s4 + $0x18] sm:$0xff] %v255
  %272 = vst [vmem:[%s4 + $0x20] sm:$0xff] %v256
  %273 = vst [vmem:[%s4 + $0x28] sm:$0xff] %v257
  %274 = vst [vmem:[%s4 + $0x30] sm:$0xff] %v258
  %275 = vst [vmem:[%s4 + $0x38] sm:$0xff] %v259
  %276 = vst [vmem:[%s4 + $0x40] sm:$0xff] %v260
  %277 = vst [vmem:[%s4 + $0x48] sm:$0xff] %v261
  %278 = vst [vmem:[%s4 + $0x50] sm:$0xff] %v262
  %279 = vst [vmem:[%s4 + $0x58] sm:$0xff] %v263
  %280 = vst [vmem:[%s4 + $0x60] sm:$0xff] %v264
  %281 = vst [vmem:[%s4 + $0x68] sm:$0xff] %v265
  %282 = vst [vmem:[%s4 + $0x70] sm:$0xff] %v266
  %283 = vst [vmem:[%s4 + $0x78] sm:$0xff] %v267
  %v284 = vpack.c.bf16 %v253, %v252
  %v285 = vpack.c.bf16 %v255, %v254
  %v286 = vpack.c.bf16 %v257, %v256
  %v287 = vpack.c.bf16 %v259, %v258
  %v288 = vpack.c.bf16 %v261, %v260
  %v289 = vpack.c.bf16 %v263, %v262
  %v290 = vpack.c.bf16 %v265, %v264
  %v291 = vpack.c.bf16 %v267, %v266
  %v292 = vld [vmem:[%s3] sm:$0xf]
  %v293 = vld [vmem:[%s3 + $0x4] sm:$0xf]
  %v294 = vld [vmem:[%s3 + $0x8] sm:$0xf]
  %v295 = vld [vmem:[%s3 + $0xc] sm:$0xf]
  %v296 = vld [vmem:[%s3 + $0x10] sm:$0xf]
  %v297 = vld [vmem:[%s3 + $0x14] sm:$0xf]
  %v298 = vld [vmem:[%s3 + $0x18] sm:$0xf]
  %v299 = vld [vmem:[%s3 + $0x1c] sm:$0xf]
  %v300 = vld [vmem:[%s3 + $0x20] sm:$0xf]
  %v301 = vld [vmem:[%s3 + $0x24] sm:$0xf]
  %v302 = vld [vmem:[%s3 + $0x28] sm:$0xf]
  %v303 = vld [vmem:[%s3 + $0x2c] sm:$0xf]
  %v304 = vld [vmem:[%s3 + $0x30] sm:$0xf]
  %v305 = vld [vmem:[%s3 + $0x34] sm:$0xf]
  %v306 = vld [vmem:[%s3 + $0x38] sm:$0xf]
  %v307 = vld [vmem:[%s3 + $0x3c] sm:$0xf]
  %v324 = vunpack.c.l.b16 %v292
  %v325 = vunpack.c.l.b16 %v293
  %v326 = vunpack.c.l.b16 %v294
  %v327 = vunpack.c.l.b16 %v295
  %v328 = vunpack.c.l.b16 %v296
  %v329 = vunpack.c.l.b16 %v297
  %v330 = vunpack.c.l.b16 %v298
  %v331 = vunpack.c.l.b16 %v299
  %v332 = vunpack.c.l.b16 %v300
  %v333 = vunpack.c.l.b16 %v301
  %v334 = vunpack.c.l.b16 %v302
  %v335 = vunpack.c.l.b16 %v303
  %v336 = vunpack.c.l.b16 %v304
  %v337 = vunpack.c.l.b16 %v305
  %v338 = vunpack.c.l.b16 %v306
  %v339 = vunpack.c.l.b16 %v307
  %v340 = vpack.c.b16 %v325, %v324
  %v341 = vpack.c.b16 %v327, %v326
  %v342 = vpack.c.b16 %v329, %v328
  %v343 = vpack.c.b16 %v331, %v330
  %v344 = vpack.c.b16 %v333, %v332
  %v345 = vpack.c.b16 %v335, %v334
  %v346 = vpack.c.b16 %v337, %v336
  %v347 = vpack.c.b16 %v339, %v338
  %356 = vmatprep.subr.bf16.mxu0 0
  %357 = vmatpush1.bf16.msra.mxu0 %v347
  %358 = vmatprep.subr.bf16.mxu0 0
  %359 = vmatpush1.bf16.msra.mxu0 %v346
  %360 = vmatprep.subr.bf16.mxu0 0
  %361 = vmatpush1.bf16.msra.mxu0 %v345
  %362 = vmatprep.subr.bf16.mxu0 0
  %363 = vmatpush1.bf16.msra.mxu0 %v344
  %364 = vmatprep.subr.bf16.mxu0 0
  %365 = vmatpush1.bf16.msra.mxu0 %v343
  %366 = vmatprep.subr.bf16.mxu0 0
  %367 = vmatpush1.bf16.msra.mxu0 %v342
  %368 = vmatprep.subr.bf16.mxu0 0
  %369 = vmatpush1.bf16.msra.mxu0 %v341
  %370 = vmatprep.subr.bf16.mxu0 0
  %371 = vmatpush1.bf16.msra.mxu0 %v340
  %372 = vmatprep.subr.bf16.mxu0 0
  %373 = vmatpush2.bf16.msra.mxu0 0
  %374 = vmatprep.subr.bf16.mxu0 0
  %375 = vmatpush2.bf16.msra.mxu0 0
  %376 = vmatprep.subr.bf16.mxu0 0
  %377 = vmatpush2.bf16.msra.mxu0 0
  %378 = vmatprep.subr.bf16.mxu0 0
  %379 = vmatpush2.bf16.msra.mxu0 0
  %380 = vmatprep.subr.bf16.mxu0 0
  %381 = vmatpush2.bf16.msra.mxu0 0
  %382 = vmatprep.subr.bf16.mxu0 0
  %383 = vmatpush2.bf16.msra.mxu0 0
  %384 = vmatprep.subr.bf16.mxu0 0
  %385 = vmatpush2.bf16.msra.mxu0 0
  %386 = vmatprep.subr.bf16.mxu0 0
  %387 = vmatpush2.bf16.msra.mxu0 0
  %388 = vmatprep.mubr.bf16.mxu0 0
  %389 = vmatmul.mubr.bf16.gmra.mxu0 %v284
  %v390 = vpop.f32.mrf.mxu0
  %v391 = vadd.f32 0.0, %v390
  %v392 = vpop.f32.mrf.mxu0
  %v393 = vpop.f32.mrf.mxu0
  %v394 = vadd.f32 0.0, %v393
  %v395 = vpop.f32.mrf.mxu0
  %396 = vmatprep.mubr.bf16.mxu0 0
  %397 = vmatmul.mubr.bf16.gmra.mxu0 %v285
  %v398 = vpop.f32.mrf.mxu0
  %v399 = vadd.f32 0.0, %v398
  %v400 = vpop.f32.mrf.mxu0
  %v401 = vpop.f32.mrf.mxu0
  %v402 = vadd.f32 0.0, %v401
  %v403 = vpop.f32.mrf.mxu0
  %404 = vmatprep.mubr.bf16.mxu0 0
  %405 = vmatmul.mubr.bf16.gmra.mxu0 %v286
  %v406 = vpop.f32.mrf.mxu0
  %v407 = vadd.f32 0.0, %v406
  %v408 = vpop.f32.mrf.mxu0
  %v409 = vpop.f32.mrf.mxu0
  %v410 = vadd.f32 0.0, %v409
  %v411 = vpop.f32.mrf.mxu0
  %412 = vmatprep.mubr.bf16.mxu0 0
  %413 = vmatmul.mubr.bf16.gmra.mxu0 %v287
  %v414 = vpop.f32.mrf.mxu0
  %v415 = vadd.f32 0.0, %v414
  %v416 = vpop.f32.mrf.mxu0
  %v417 = vpop.f32.mrf.mxu0
  %v418 = vadd.f32 0.0, %v417
  %v419 = vpop.f32.mrf.mxu0
  %420 = vmatprep.mubr.bf16.mxu0 0
  %421 = vmatmul.mubr.bf16.gmra.mxu0 %v288
  %v422 = vpop.f32.mrf.mxu0
  %v423 = vadd.f32 0.0, %v422
  %v424 = vpop.f32.mrf.mxu0
  %v425 = vpop.f32.mrf.mxu0
  %v426 = vadd.f32 0.0, %v425
  %v427 = vpop.f32.mrf.mxu0
  %428 = vmatprep.mubr.bf16.mxu0 0
  %429 = vmatmul.mubr.bf16.gmra.mxu0 %v289
  %v430 = vpop.f32.mrf.mxu0
  %v431 = vadd.f32 0.0, %v430
  %v432 = vpop.f32.mrf.mxu0
  %v433 = vpop.f32.mrf.mxu0
  %v434 = vadd.f32 0.0, %v433
  %v435 = vpop.f32.mrf.mxu0
  %436 = vmatprep.mubr.bf16.mxu0 0
  %437 = vmatmul.mubr.bf16.gmra.mxu0 %v290
  %v438 = vpop.f32.mrf.mxu0
  %v439 = vadd.f32 0.0, %v438
  %v440 = vpop.f32.mrf.mxu0
  %v441 = vpop.f32.mrf.mxu0
  %v442 = vadd.f32 0.0, %v441
  %v443 = vpop.f32.mrf.mxu0
  %444 = vmatprep.mubr.bf16.mxu0 0
  %445 = vmatmul.mubr.bf16.gmra.mxu0 %v291
  %v446 = vpop.f32.mrf.mxu0
  %v447 = vadd.f32 0.0, %v446
  %v448 = vpop.f32.mrf.mxu0
  %v449 = vpop.f32.mrf.mxu0
  %v450 = vadd.f32 0.0, %v449
  %v451 = vpop.f32.mrf.mxu0
  %452 = vdwg.mxu0
  %v453 = vpack.c.bf16 %v394, %v391
  %v454 = vpack.c.bf16 %v402, %v399
  %v455 = vpack.c.bf16 %v410, %v407
  %v456 = vpack.c.bf16 %v418, %v415
  %v457 = vpack.c.bf16 %v426, %v423
  %v458 = vpack.c.bf16 %v434, %v431
  %v459 = vpack.c.bf16 %v442, %v439
  %v460 = vpack.c.bf16 %v450, %v447
  %v469 = vunpack.c.l.b16 %v453
  %v470 = vunpack.c.h.b16 %v453
  %v471 = vunpack.c.l.b16 %v454
  %v472 = vunpack.c.h.b16 %v454
  %v473 = vunpack.c.l.b16 %v455
  %v474 = vunpack.c.h.b16 %v455
  %v475 = vunpack.c.l.b16 %v456
  %v476 = vunpack.c.h.b16 %v456
  %v477 = vunpack.c.l.b16 %v457
  %v478 = vunpack.c.h.b16 %v457
  %v479 = vunpack.c.l.b16 %v458
  %v480 = vunpack.c.h.b16 %v458
  %v481 = vunpack.c.l.b16 %v459
  %v482 = vunpack.c.h.b16 %v459
  %v483 = vunpack.c.l.b16 %v460
  %v484 = vunpack.c.h.b16 %v460
  %v485 = vpack.c.b16 %v469, %v469
  %v486 = vpack.c.b16 %v470, %v470
  %v487 = vpack.c.b16 %v471, %v471
  %v488 = vpack.c.b16 %v472, %v472
  %v489 = vpack.c.b16 %v473, %v473
  %v490 = vpack.c.b16 %v474, %v474
  %v491 = vpack.c.b16 %v475, %v475
  %v492 = vpack.c.b16 %v476, %v476
  %v493 = vpack.c.b16 %v477, %v477
  %v494 = vpack.c.b16 %v478, %v478
  %v495 = vpack.c.b16 %v479, %v479
  %v496 = vpack.c.b16 %v480, %v480
  %v497 = vpack.c.b16 %v481, %v481
  %v498 = vpack.c.b16 %v482, %v482
  %v499 = vpack.c.b16 %v483, %v483
  %v500 = vpack.c.b16 %v484, %v484
  %517 = vst [vmem:[%s5] sm:$0xf] %v485
  %518 = vst [vmem:[%s5 + $0x4] sm:$0xf] %v486
  %519 = vst [vmem:[%s5 + $0x8] sm:$0xf] %v487
  %520 = vst [vmem:[%s5 + $0xc] sm:$0xf] %v488
  %521 = vst [vmem:[%s5 + $0x10] sm:$0xf] %v489
  %522 = vst [vmem:[%s5 + $0x14] sm:$0xf] %v490
  %523 = vst [vmem:[%s5 + $0x18] sm:$0xf] %v491
  %524 = vst [vmem:[%s5 + $0x1c] sm:$0xf] %v492
  %525 = vst [vmem:[%s5 + $0x20] sm:$0xf] %v493
  %526 = vst [vmem:[%s5 + $0x24] sm:$0xf] %v494
  %527 = vst [vmem:[%s5 + $0x28] sm:$0xf] %v495
  %528 = vst [vmem:[%s5 + $0x2c] sm:$0xf] %v496
  %529 = vst [vmem:[%s5 + $0x30] sm:$0xf] %v497
  %530 = vst [vmem:[%s5 + $0x34] sm:$0xf] %v498
  %531 = vst [vmem:[%s5 + $0x38] sm:$0xf] %v499
  %532 = vst [vmem:[%s5 + $0x3c] sm:$0xf] %v500
  %s533 = scalar_lea.vmem %s3, 64
  %v534 = vld [vmem:[%s533] sm:$0xf]
  %v535 = vld [vmem:[%s533 + $0x4] sm:$0xf]
  %v536 = vld [vmem:[%s533 + $0x8] sm:$0xf]
  %v537 = vld [vmem:[%s533 + $0xc] sm:$0xf]
  %v538 = vld [vmem:[%s533 + $0x10] sm:$0xf]
  %v539 = vld [vmem:[%s533 + $0x14] sm:$0xf]
  %v540 = vld [vmem:[%s533 + $0x18] sm:$0xf]
  %v541 = vld [vmem:[%s533 + $0x1c] sm:$0xf]
  %v542 = vld [vmem:[%s533 + $0x20] sm:$0xf]
  %v543 = vld [vmem:[%s533 + $0x24] sm:$0xf]
  %v544 = vld [vmem:[%s533 + $0x28] sm:$0xf]
  %v545 = vld [vmem:[%s533 + $0x2c] sm:$0xf]
  %v546 = vld [vmem:[%s533 + $0x30] sm:$0xf]
  %v547 = vld [vmem:[%s533 + $0x34] sm:$0xf]
  %v548 = vld [vmem:[%s533 + $0x38] sm:$0xf]
  %v549 = vld [vmem:[%s533 + $0x3c] sm:$0xf]
  %v566 = vunpack.c.l.b16 %v534
  %v567 = vunpack.c.l.b16 %v535
  %v568 = vunpack.c.l.b16 %v536
  %v569 = vunpack.c.l.b16 %v537
  %v570 = vunpack.c.l.b16 %v538
  %v571 = vunpack.c.l.b16 %v539
  %v572 = vunpack.c.l.b16 %v540
  %v573 = vunpack.c.l.b16 %v541
  %v574 = vunpack.c.l.b16 %v542
  %v575 = vunpack.c.l.b16 %v543
  %v576 = vunpack.c.l.b16 %v544
  %v577 = vunpack.c.l.b16 %v545
  %v578 = vunpack.c.l.b16 %v546
  %v579 = vunpack.c.l.b16 %v547
  %v580 = vunpack.c.l.b16 %v548
  %v581 = vunpack.c.l.b16 %v549
  %v582 = vpack.c.b16 %v567, %v566
  %v583 = vpack.c.b16 %v569, %v568
  %v584 = vpack.c.b16 %v571, %v570
  %v585 = vpack.c.b16 %v573, %v572
  %v586 = vpack.c.b16 %v575, %v574
  %v587 = vpack.c.b16 %v577, %v576
  %v588 = vpack.c.b16 %v579, %v578
  %v589 = vpack.c.b16 %v581, %v580
  %598 = vmatprep.subr.bf16.mxu0 0
  %599 = vmatpush1.bf16.msra.mxu0 %v589
  %600 = vmatprep.subr.bf16.mxu0 0
  %601 = vmatpush1.bf16.msra.mxu0 %v588
  %602 = vmatprep.subr.bf16.mxu0 0
  %603 = vmatpush1.bf16.msra.mxu0 %v587
  %604 = vmatprep.subr.bf16.mxu0 0
  %605 = vmatpush1.bf16.msra.mxu0 %v586
  %606 = vmatprep.subr.bf16.mxu0 0
  %607 = vmatpush1.bf16.msra.mxu0 %v585
  %608 = vmatprep.subr.bf16.mxu0 0
  %609 = vmatpush1.bf16.msra.mxu0 %v584
  %610 = vmatprep.subr.bf16.mxu0 0
  %611 = vmatpush1.bf16.msra.mxu0 %v583
  %612 = vmatprep.subr.bf16.mxu0 0
  %613 = vmatpush1.bf16.msra.mxu0 %v582
  %614 = vmatprep.subr.bf16.mxu0 0
  %615 = vmatpush2.bf16.msra.mxu0 0
  %616 = vmatprep.subr.bf16.mxu0 0
  %617 = vmatpush2.bf16.msra.mxu0 0
  %618 = vmatprep.subr.bf16.mxu0 0
  %619 = vmatpush2.bf16.msra.mxu0 0
  %620 = vmatprep.subr.bf16.mxu0 0
  %621 = vmatpush2.bf16.msra.mxu0 0
  %622 = vmatprep.subr.bf16.mxu0 0
  %623 = vmatpush2.bf16.msra.mxu0 0
  %624 = vmatprep.subr.bf16.mxu0 0
  %625 = vmatpush2.bf16.msra.mxu0 0
  %626 = vmatprep.subr.bf16.mxu0 0
  %627 = vmatpush2.bf16.msra.mxu0 0
  %628 = vmatprep.subr.bf16.mxu0 0
  %629 = vmatpush2.bf16.msra.mxu0 0
  %630 = vmatprep.mubr.bf16.mxu0 0
  %631 = vmatmul.mubr.bf16.gmra.mxu0 %v284
  %v632 = vpop.f32.mrf.mxu0
  %v633 = vadd.f32 0.0, %v632
  %v634 = vpop.f32.mrf.mxu0
  %v635 = vpop.f32.mrf.mxu0
  %v636 = vadd.f32 0.0, %v635
  %v637 = vpop.f32.mrf.mxu0
  %638 = vmatprep.mubr.bf16.mxu0 0
  %639 = vmatmul.mubr.bf16.gmra.mxu0 %v285
  %v640 = vpop.f32.mrf.mxu0
  %v641 = vadd.f32 0.0, %v640
  %v642 = vpop.f32.mrf.mxu0
  %v643 = vpop.f32.mrf.mxu0
  %v644 = vadd.f32 0.0, %v643
  %v645 = vpop.f32.mrf.mxu0
  %646 = vmatprep.mubr.bf16.mxu0 0
  %647 = vmatmul.mubr.bf16.gmra.mxu0 %v286
  %v648 = vpop.f32.mrf.mxu0
  %v649 = vadd.f32 0.0, %v648
  %v650 = vpop.f32.mrf.mxu0
  %v651 = vpop.f32.mrf.mxu0
  %v652 = vadd.f32 0.0, %v651
  %v653 = vpop.f32.mrf.mxu0
  %654 = vmatprep.mubr.bf16.mxu0 0
  %655 = vmatmul.mubr.bf16.gmra.mxu0 %v287
  %v656 = vpop.f32.mrf.mxu0
  %v657 = vadd.f32 0.0, %v656
  %v658 = vpop.f32.mrf.mxu0
  %v659 = vpop.f32.mrf.mxu0
  %v660 = vadd.f32 0.0, %v659
  %v661 = vpop.f32.mrf.mxu0
  %662 = vmatprep.mubr.bf16.mxu0 0
  %663 = vmatmul.mubr.bf16.gmra.mxu0 %v288
  %v664 = vpop.f32.mrf.mxu0
  %v665 = vadd.f32 0.0, %v664
  %v666 = vpop.f32.mrf.mxu0
  %v667 = vpop.f32.mrf.mxu0
  %v668 = vadd.f32 0.0, %v667
  %v669 = vpop.f32.mrf.mxu0
  %670 = vmatprep.mubr.bf16.mxu0 0
  %671 = vmatmul.mubr.bf16.gmra.mxu0 %v289
  %v672 = vpop.f32.mrf.mxu0
  %v673 = vadd.f32 0.0, %v672
  %v674 = vpop.f32.mrf.mxu0
  %v675 = vpop.f32.mrf.mxu0
  %v676 = vadd.f32 0.0, %v675
  %v677 = vpop.f32.mrf.mxu0
  %678 = vmatprep.mubr.bf16.mxu0 0
  %679 = vmatmul.mubr.bf16.gmra.mxu0 %v290
  %v680 = vpop.f32.mrf.mxu0
  %v681 = vadd.f32 0.0, %v680
  %v682 = vpop.f32.mrf.mxu0
  %v683 = vpop.f32.mrf.mxu0
  %v684 = vadd.f32 0.0, %v683
  %v685 = vpop.f32.mrf.mxu0
  %686 = vmatprep.mubr.bf16.mxu0 0
  %687 = vmatmul.mubr.bf16.gmra.mxu0 %v291
  %v688 = vpop.f32.mrf.mxu0
  %v689 = vadd.f32 0.0, %v688
  %v690 = vpop.f32.mrf.mxu0
  %v691 = vpop.f32.mrf.mxu0
  %v692 = vadd.f32 0.0, %v691
  %v693 = vpop.f32.mrf.mxu0
  %694 = vdwg.mxu0
  %v695 = vpack.c.bf16 %v636, %v633
  %v696 = vpack.c.bf16 %v644, %v641
  %v697 = vpack.c.bf16 %v652, %v649
  %v698 = vpack.c.bf16 %v660, %v657
  %v699 = vpack.c.bf16 %v668, %v665
  %v700 = vpack.c.bf16 %v676, %v673
  %v701 = vpack.c.bf16 %v684, %v681
  %v702 = vpack.c.bf16 %v692, %v689
  %v711 = vunpack.c.l.b16 %v695
  %v712 = vunpack.c.h.b16 %v695
  %v713 = vunpack.c.l.b16 %v696
  %v714 = vunpack.c.h.b16 %v696
  %v715 = vunpack.c.l.b16 %v697
  %v716 = vunpack.c.h.b16 %v697
  %v717 = vunpack.c.l.b16 %v698
  %v718 = vunpack.c.h.b16 %v698
  %v719 = vunpack.c.l.b16 %v699
  %v720 = vunpack.c.h.b16 %v699
  %v721 = vunpack.c.l.b16 %v700
  %v722 = vunpack.c.h.b16 %v700
  %v723 = vunpack.c.l.b16 %v701
  %v724 = vunpack.c.h.b16 %v701
  %v725 = vunpack.c.l.b16 %v702
  %v726 = vunpack.c.h.b16 %v702
  %v727 = vpack.c.b16 %v711, %v711
  %v728 = vpack.c.b16 %v712, %v712
  %v729 = vpack.c.b16 %v713, %v713
  %v730 = vpack.c.b16 %v714, %v714
  %v731 = vpack.c.b16 %v715, %v715
  %v732 = vpack.c.b16 %v716, %v716
  %v733 = vpack.c.b16 %v717, %v717
  %v734 = vpack.c.b16 %v718, %v718
  %v735 = vpack.c.b16 %v719, %v719
  %v736 = vpack.c.b16 %v720, %v720
  %v737 = vpack.c.b16 %v721, %v721
  %v738 = vpack.c.b16 %v722, %v722
  %v739 = vpack.c.b16 %v723, %v723
  %v740 = vpack.c.b16 %v724, %v724
  %v741 = vpack.c.b16 %v725, %v725
  %v742 = vpack.c.b16 %v726, %v726
  %s759 = scalar_lea.vmem %s5, 64
  %760 = vst [vmem:[%s759] sm:$0xf] %v727
  %761 = vst [vmem:[%s759 + $0x4] sm:$0xf] %v728
  %762 = vst [vmem:[%s759 + $0x8] sm:$0xf] %v729
  %763 = vst [vmem:[%s759 + $0xc] sm:$0xf] %v730
  %764 = vst [vmem:[%s759 + $0x10] sm:$0xf] %v731
  %765 = vst [vmem:[%s759 + $0x14] sm:$0xf] %v732
  %766 = vst [vmem:[%s759 + $0x18] sm:$0xf] %v733
  %767 = vst [vmem:[%s759 + $0x1c] sm:$0xf] %v734
  %768 = vst [vmem:[%s759 + $0x20] sm:$0xf] %v735
  %769 = vst [vmem:[%s759 + $0x24] sm:$0xf] %v736
  %770 = vst [vmem:[%s759 + $0x28] sm:$0xf] %v737
  %771 = vst [vmem:[%s759 + $0x2c] sm:$0xf] %v738
  %772 = vst [vmem:[%s759 + $0x30] sm:$0xf] %v739
  %773 = vst [vmem:[%s759 + $0x34] sm:$0xf] %v740
  %774 = vst [vmem:[%s759 + $0x38] sm:$0xf] %v741
  %775 = vst [vmem:[%s759 + $0x3c] sm:$0xf] %v742
  %s776 = scalar_lea.vmem %s3, 128
  %v777 = vld [vmem:[%s776] sm:$0xf]
  %v778 = vld [vmem:[%s776 + $0x4] sm:$0xf]
  %v779 = vld [vmem:[%s776 + $0x8] sm:$0xf]
  %v780 = vld [vmem:[%s776 + $0xc] sm:$0xf]
  %v781 = vld [vmem:[%s776 + $0x10] sm:$0xf]
  %v782 = vld [vmem:[%s776 + $0x14] sm:$0xf]
  %v783 = vld [vmem:[%s776 + $0x18] sm:$0xf]
  %v784 = vld [vmem:[%s776 + $0x1c] sm:$0xf]
  %v785 = vld [vmem:[%s776 + $0x20] sm:$0xf]
  %v786 = vld [vmem:[%s776 + $0x24] sm:$0xf]
  %v787 = vld [vmem:[%s776 + $0x28] sm:$0xf]
  %v788 = vld [vmem:[%s776 + $0x2c] sm:$0xf]
  %v789 = vld [vmem:[%s776 + $0x30] sm:$0xf]
  %v790 = vld [vmem:[%s776 + $0x34] sm:$0xf]
  %v791 = vld [vmem:[%s776 + $0x38] sm:$0xf]
  %v792 = vld [vmem:[%s776 + $0x3c] sm:$0xf]
  %v809 = vunpack.c.l.b16 %v777
  %v810 = vunpack.c.l.b16 %v778
  %v811 = vunpack.c.l.b16 %v779
  %v812 = vunpack.c.l.b16 %v780
  %v813 = vunpack.c.l.b16 %v781
  %v814 = vunpack.c.l.b16 %v782
  %v815 = vunpack.c.l.b16 %v783
  %v816 = vunpack.c.l.b16 %v784
  %v817 = vunpack.c.l.b16 %v785
  %v818 = vunpack.c.l.b16 %v786
  %v819 = vunpack.c.l.b16 %v787
  %v820 = vunpack.c.l.b16 %v788
  %v821 = vunpack.c.l.b16 %v789
  %v822 = vunpack.c.l.b16 %v790
  %v823 = vunpack.c.l.b16 %v791
  %v824 = vunpack.c.l.b16 %v792
  %v825 = vpack.c.b16 %v810, %v809
  %v826 = vpack.c.b16 %v812, %v811
  %v827 = vpack.c.b16 %v814, %v813
  %v828 = vpack.c.b16 %v816, %v815
  %v829 = vpack.c.b16 %v818, %v817
  %v830 = vpack.c.b16 %v820, %v819
  %v831 = vpack.c.b16 %v822, %v821
  %v832 = vpack.c.b16 %v824, %v823
  %841 = vmatprep.subr.bf16.mxu0 0
  %842 = vmatpush1.bf16.msra.mxu0 %v832
  %843 = vmatprep.subr.bf16.mxu0 0
  %844 = vmatpush1.bf16.msra.mxu0 %v831
  %845 = vmatprep.subr.bf16.mxu0 0
  %846 = vmatpush1.bf16.msra.mxu0 %v830
  %847 = vmatprep.subr.bf16.mxu0 0
  %848 = vmatpush1.bf16.msra.mxu0 %v829
  %849 = vmatprep.subr.bf16.mxu0 0
  %850 = vmatpush1.bf16.msra.mxu0 %v828
  %851 = vmatprep.subr.bf16.mxu0 0
  %852 = vmatpush1.bf16.msra.mxu0 %v827
  %853 = vmatprep.subr.bf16.mxu0 0
  %854 = vmatpush1.bf16.msra.mxu0 %v826
  %855 = vmatprep.subr.bf16.mxu0 0
  %856 = vmatpush1.bf16.msra.mxu0 %v825
  %857 = vmatprep.subr.bf16.mxu0 0
  %858 = vmatpush2.bf16.msra.mxu0 0
  %859 = vmatprep.subr.bf16.mxu0 0
  %860 = vmatpush2.bf16.msra.mxu0 0
  %861 = vmatprep.subr.bf16.mxu0 0
  %862 = vmatpush2.bf16.msra.mxu0 0
  %863 = vmatprep.subr.bf16.mxu0 0
  %864 = vmatpush2.bf16.msra.mxu0 0
  %865 = vmatprep.subr.bf16.mxu0 0
  %866 = vmatpush2.bf16.msra.mxu0 0
  %867 = vmatprep.subr.bf16.mxu0 0
  %868 = vmatpush2.bf16.msra.mxu0 0
  %869 = vmatprep.subr.bf16.mxu0 0
  %870 = vmatpush2.bf16.msra.mxu0 0
  %871 = vmatprep.subr.bf16.mxu0 0
  %872 = vmatpush2.bf16.msra.mxu0 0
  %873 = vmatprep.mubr.bf16.mxu0 0
  %874 = vmatmul.mubr.bf16.gmra.mxu0 %v284
  %v875 = vpop.f32.mrf.mxu0
  %v876 = vadd.f32 0.0, %v875
  %v877 = vpop.f32.mrf.mxu0
  %v878 = vpop.f32.mrf.mxu0
  %v879 = vadd.f32 0.0, %v878
  %v880 = vpop.f32.mrf.mxu0
  %881 = vmatprep.mubr.bf16.mxu0 0
  %882 = vmatmul.mubr.bf16.gmra.mxu0 %v285
  %v883 = vpop.f32.mrf.mxu0
  %v884 = vadd.f32 0.0, %v883
  %v885 = vpop.f32.mrf.mxu0
  %v886 = vpop.f32.mrf.mxu0
  %v887 = vadd.f32 0.0, %v886
  %v888 = vpop.f32.mrf.mxu0
  %889 = vmatprep.mubr.bf16.mxu0 0
  %890 = vmatmul.mubr.bf16.gmra.mxu0 %v286
  %v891 = vpop.f32.mrf.mxu0
  %v892 = vadd.f32 0.0, %v891
  %v893 = vpop.f32.mrf.mxu0
  %v894 = vpop.f32.mrf.mxu0
  %v895 = vadd.f32 0.0, %v894
  %v896 = vpop.f32.mrf.mxu0
  %897 = vmatprep.mubr.bf16.mxu0 0
  %898 = vmatmul.mubr.bf16.gmra.mxu0 %v287
  %v899 = vpop.f32.mrf.mxu0
  %v900 = vadd.f32 0.0, %v899
  %v901 = vpop.f32.mrf.mxu0
  %v902 = vpop.f32.mrf.mxu0
  %v903 = vadd.f32 0.0, %v902
  %v904 = vpop.f32.mrf.mxu0
  %905 = vmatprep.mubr.bf16.mxu0 0
  %906 = vmatmul.mubr.bf16.gmra.mxu0 %v288
  %v907 = vpop.f32.mrf.mxu0
  %v908 = vadd.f32 0.0, %v907
  %v909 = vpop.f32.mrf.mxu0
  %v910 = vpop.f32.mrf.mxu0
  %v911 = vadd.f32 0.0, %v910
  %v912 = vpop.f32.mrf.mxu0
  %913 = vmatprep.mubr.bf16.mxu0 0
  %914 = vmatmul.mubr.bf16.gmra.mxu0 %v289
  %v915 = vpop.f32.mrf.mxu0
  %v916 = vadd.f32 0.0, %v915
  %v917 = vpop.f32.mrf.mxu0
  %v918 = vpop.f32.mrf.mxu0
  %v919 = vadd.f32 0.0, %v918
  %v920 = vpop.f32.mrf.mxu0
  %921 = vmatprep.mubr.bf16.mxu0 0
  %922 = vmatmul.mubr.bf16.gmra.mxu0 %v290
  %v923 = vpop.f32.mrf.mxu0
  %v924 = vadd.f32 0.0, %v923
  %v925 = vpop.f32.mrf.mxu0
  %v926 = vpop.f32.mrf.mxu0
  %v927 = vadd.f32 0.0, %v926
  %v928 = vpop.f32.mrf.mxu0
  %929 = vmatprep.mubr.bf16.mxu0 0
  %930 = vmatmul.mubr.bf16.gmra.mxu0 %v291
  %v931 = vpop.f32.mrf.mxu0
  %v932 = vadd.f32 0.0, %v931
  %v933 = vpop.f32.mrf.mxu0
  %v934 = vpop.f32.mrf.mxu0
  %v935 = vadd.f32 0.0, %v934
  %v936 = vpop.f32.mrf.mxu0
  %937 = vdwg.mxu0
  %v938 = vpack.c.bf16 %v879, %v876
  %v939 = vpack.c.bf16 %v887, %v884
  %v940 = vpack.c.bf16 %v895, %v892
  %v941 = vpack.c.bf16 %v903, %v900
  %v942 = vpack.c.bf16 %v911, %v908
  %v943 = vpack.c.bf16 %v919, %v916
  %v944 = vpack.c.bf16 %v927, %v924
  %v945 = vpack.c.bf16 %v935, %v932
  %v954 = vunpack.c.l.b16 %v938
  %v955 = vunpack.c.h.b16 %v938
  %v956 = vunpack.c.l.b16 %v939
  %v957 = vunpack.c.h.b16 %v939
  %v958 = vunpack.c.l.b16 %v940
  %v959 = vunpack.c.h.b16 %v940
  %v960 = vunpack.c.l.b16 %v941
  %v961 = vunpack.c.h.b16 %v941
  %v962 = vunpack.c.l.b16 %v942
  %v963 = vunpack.c.h.b16 %v942
  %v964 = vunpack.c.l.b16 %v943
  %v965 = vunpack.c.h.b16 %v943
  %v966 = vunpack.c.l.b16 %v944
  %v967 = vunpack.c.h.b16 %v944
  %v968 = vunpack.c.l.b16 %v945
  %v969 = vunpack.c.h.b16 %v945
  %v970 = vpack.c.b16 %v954, %v954
  %v971 = vpack.c.b16 %v955, %v955
  %v972 = vpack.c.b16 %v956, %v956
  %v973 = vpack.c.b16 %v957, %v957
  %v974 = vpack.c.b16 %v958, %v958
  %v975 = vpack.c.b16 %v959, %v959
  %v976 = vpack.c.b16 %v960, %v960
  %v977 = vpack.c.b16 %v961, %v961
  %v978 = vpack.c.b16 %v962, %v962
  %v979 = vpack.c.b16 %v963, %v963
  %v980 = vpack.c.b16 %v964, %v964
  %v981 = vpack.c.b16 %v965, %v965
  %v982 = vpack.c.b16 %v966, %v966
  %v983 = vpack.c.b16 %v967, %v967
  %v984 = vpack.c.b16 %v968, %v968
  %v985 = vpack.c.b16 %v969, %v969
  %s1002 = scalar_lea.vmem %s5, 128
  %1003 = vst [vmem:[%s1002] sm:$0xf] %v970
  %1004 = vst [vmem:[%s1002 + $0x4] sm:$0xf] %v971
  %1005 = vst [vmem:[%s1002 + $0x8] sm:$0xf] %v972
  %1006 = vst [vmem:[%s1002 + $0xc] sm:$0xf] %v973
  %1007 = vst [vmem:[%s1002 + $0x10] sm:$0xf] %v974
  %1008 = vst [vmem:[%s1002 + $0x14] sm:$0xf] %v975
  %1009 = vst [vmem:[%s1002 + $0x18] sm:$0xf] %v976
  %1010 = vst [vmem:[%s1002 + $0x1c] sm:$0xf] %v977
  %1011 = vst [vmem:[%s1002 + $0x20] sm:$0xf] %v978
  %1012 = vst [vmem:[%s1002 + $0x24] sm:$0xf] %v979
  %1013 = vst [vmem:[%s1002 + $0x28] sm:$0xf] %v980
  %1014 = vst [vmem:[%s1002 + $0x2c] sm:$0xf] %v981
  %1015 = vst [vmem:[%s1002 + $0x30] sm:$0xf] %v982
  %1016 = vst [vmem:[%s1002 + $0x34] sm:$0xf] %v983
  %1017 = vst [vmem:[%s1002 + $0x38] sm:$0xf] %v984
  %1018 = vst [vmem:[%s1002 + $0x3c] sm:$0xf] %v985
  %s1019 = scalar_lea.vmem %s3, 192
  %v1020 = vld [vmem:[%s1019] sm:$0xf]
  %v1021 = vld [vmem:[%s1019 + $0x4] sm:$0xf]
  %v1022 = vld [vmem:[%s1019 + $0x8] sm:$0xf]
  %v1023 = vld [vmem:[%s1019 + $0xc] sm:$0xf]
  %v1024 = vld [vmem:[%s1019 + $0x10] sm:$0xf]
  %v1025 = vld [vmem:[%s1019 + $0x14] sm:$0xf]
  %v1026 = vld [vmem:[%s1019 + $0x18] sm:$0xf]
  %v1027 = vld [vmem:[%s1019 + $0x1c] sm:$0xf]
  %v1028 = vld [vmem:[%s1019 + $0x20] sm:$0xf]
  %v1029 = vld [vmem:[%s1019 + $0x24] sm:$0xf]
  %v1030 = vld [vmem:[%s1019 + $0x28] sm:$0xf]
  %v1031 = vld [vmem:[%s1019 + $0x2c] sm:$0xf]
  %v1032 = vld [vmem:[%s1019 + $0x30] sm:$0xf]
  %v1033 = vld [vmem:[%s1019 + $0x34] sm:$0xf]
  %v1034 = vld [vmem:[%s1019 + $0x38] sm:$0xf]
  %v1035 = vld [vmem:[%s1019 + $0x3c] sm:$0xf]
  %v1052 = vunpack.c.l.b16 %v1020
  %v1053 = vunpack.c.l.b16 %v1021
  %v1054 = vunpack.c.l.b16 %v1022
  %v1055 = vunpack.c.l.b16 %v1023
  %v1056 = vunpack.c.l.b16 %v1024
  %v1057 = vunpack.c.l.b16 %v1025
  %v1058 = vunpack.c.l.b16 %v1026
  %v1059 = vunpack.c.l.b16 %v1027
  %v1060 = vunpack.c.l.b16 %v1028
  %v1061 = vunpack.c.l.b16 %v1029
  %v1062 = vunpack.c.l.b16 %v1030
  %v1063 = vunpack.c.l.b16 %v1031
  %v1064 = vunpack.c.l.b16 %v1032
  %v1065 = vunpack.c.l.b16 %v1033
  %v1066 = vunpack.c.l.b16 %v1034
  %v1067 = vunpack.c.l.b16 %v1035
  %v1068 = vpack.c.b16 %v1053, %v1052
  %v1069 = vpack.c.b16 %v1055, %v1054
  %v1070 = vpack.c.b16 %v1057, %v1056
  %v1071 = vpack.c.b16 %v1059, %v1058
  %v1072 = vpack.c.b16 %v1061, %v1060
  %v1073 = vpack.c.b16 %v1063, %v1062
  %v1074 = vpack.c.b16 %v1065, %v1064
  %v1075 = vpack.c.b16 %v1067, %v1066
  %1084 = vmatprep.subr.bf16.mxu0 0
  %1085 = vmatpush1.bf16.msra.mxu0 %v1075
  %1086 = vmatprep.subr.bf16.mxu0 0
  %1087 = vmatpush1.bf16.msra.mxu0 %v1074
  %1088 = vmatprep.subr.bf16.mxu0 0
  %1089 = vmatpush1.bf16.msra.mxu0 %v1073
  %1090 = vmatprep.subr.bf16.mxu0 0
  %1091 = vmatpush1.bf16.msra.mxu0 %v1072
  %1092 = vmatprep.subr.bf16.mxu0 0
  %1093 = vmatpush1.bf16.msra.mxu0 %v1071
  %1094 = vmatprep.subr.bf16.mxu0 0
  %1095 = vmatpush1.bf16.msra.mxu0 %v1070
  %1096 = vmatprep.subr.bf16.mxu0 0
  %1097 = vmatpush1.bf16.msra.mxu0 %v1069
  %1098 = vmatprep.subr.bf16.mxu0 0
  %1099 = vmatpush1.bf16.msra.mxu0 %v1068
  %1100 = vmatprep.subr.bf16.mxu0 0
  %1101 = vmatpush2.bf16.msra.mxu0 0
  %1102 = vmatprep.subr.bf16.mxu0 0
  %1103 = vmatpush2.bf16.msra.mxu0 0
  %1104 = vmatprep.subr.bf16.mxu0 0
  %1105 = vmatpush2.bf16.msra.mxu0 0
  %1106 = vmatprep.subr.bf16.mxu0 0
  %1107 = vmatpush2.bf16.msra.mxu0 0
  %1108 = vmatprep.subr.bf16.mxu0 0
  %1109 = vmatpush2.bf16.msra.mxu0 0
  %1110 = vmatprep.subr.bf16.mxu0 0
  %1111 = vmatpush2.bf16.msra.mxu0 0
  %1112 = vmatprep.subr.bf16.mxu0 0
  %1113 = vmatpush2.bf16.msra.mxu0 0
  %1114 = vmatprep.subr.bf16.mxu0 0
  %1115 = vmatpush2.bf16.msra.mxu0 0
  %1116 = vmatprep.mubr.bf16.mxu0 0
  %1117 = vmatmul.mubr.bf16.gmra.mxu0 %v284
  %v1118 = vpop.f32.mrf.mxu0
  %v1119 = vadd.f32 0.0, %v1118
  %v1120 = vpop.f32.mrf.mxu0
  %v1121 = vpop.f32.mrf.mxu0
  %v1122 = vadd.f32 0.0, %v1121
  %v1123 = vpop.f32.mrf.mxu0
  %1124 = vmatprep.mubr.bf16.mxu0 0
  %1125 = vmatmul.mubr.bf16.gmra.mxu0 %v285
  %v1126 = vpop.f32.mrf.mxu0
  %v1127 = vadd.f32 0.0, %v1126
  %v1128 = vpop.f32.mrf.mxu0
  %v1129 = vpop.f32.mrf.mxu0
  %v1130 = vadd.f32 0.0, %v1129
  %v1131 = vpop.f32.mrf.mxu0
  %1132 = vmatprep.mubr.bf16.mxu0 0
  %1133 = vmatmul.mubr.bf16.gmra.mxu0 %v286
  %v1134 = vpop.f32.mrf.mxu0
  %v1135 = vadd.f32 0.0, %v1134
  %v1136 = vpop.f32.mrf.mxu0
  %v1137 = vpop.f32.mrf.mxu0
  %v1138 = vadd.f32 0.0, %v1137
  %v1139 = vpop.f32.mrf.mxu0
  %1140 = vmatprep.mubr.bf16.mxu0 0
  %1141 = vmatmul.mubr.bf16.gmra.mxu0 %v287
  %v1142 = vpop.f32.mrf.mxu0
  %v1143 = vadd.f32 0.0, %v1142
  %v1144 = vpop.f32.mrf.mxu0
  %v1145 = vpop.f32.mrf.mxu0
  %v1146 = vadd.f32 0.0, %v1145
  %v1147 = vpop.f32.mrf.mxu0
  %1148 = vmatprep.mubr.bf16.mxu0 0
  %1149 = vmatmul.mubr.bf16.gmra.mxu0 %v288
  %v1150 = vpop.f32.mrf.mxu0
  %v1151 = vadd.f32 0.0, %v1150
  %v1152 = vpop.f32.mrf.mxu0
  %v1153 = vpop.f32.mrf.mxu0
  %v1154 = vadd.f32 0.0, %v1153
  %v1155 = vpop.f32.mrf.mxu0
  %1156 = vmatprep.mubr.bf16.mxu0 0
  %1157 = vmatmul.mubr.bf16.gmra.mxu0 %v289
  %v1158 = vpop.f32.mrf.mxu0
  %v1159 = vadd.f32 0.0, %v1158
  %v1160 = vpop.f32.mrf.mxu0
  %v1161 = vpop.f32.mrf.mxu0
  %v1162 = vadd.f32 0.0, %v1161
  %v1163 = vpop.f32.mrf.mxu0
  %1164 = vmatprep.mubr.bf16.mxu0 0
  %1165 = vmatmul.mubr.bf16.gmra.mxu0 %v290
  %v1166 = vpop.f32.mrf.mxu0
  %v1167 = vadd.f32 0.0, %v1166
  %v1168 = vpop.f32.mrf.mxu0
  %v1169 = vpop.f32.mrf.mxu0
  %v1170 = vadd.f32 0.0, %v1169
  %v1171 = vpop.f32.mrf.mxu0
  %1172 = vmatprep.mubr.bf16.mxu0 0
  %1173 = vmatmul.mubr.bf16.gmra.mxu0 %v291
  %v1174 = vpop.f32.mrf.mxu0
  %v1175 = vadd.f32 0.0, %v1174
  %v1176 = vpop.f32.mrf.mxu0
  %v1177 = vpop.f32.mrf.mxu0
  %v1178 = vadd.f32 0.0, %v1177
  %v1179 = vpop.f32.mrf.mxu0
  %1180 = vdwg.mxu0
  %v1181 = vpack.c.bf16 %v1122, %v1119
  %v1182 = vpack.c.bf16 %v1130, %v1127
  %v1183 = vpack.c.bf16 %v1138, %v1135
  %v1184 = vpack.c.bf16 %v1146, %v1143
  %v1185 = vpack.c.bf16 %v1154, %v1151
  %v1186 = vpack.c.bf16 %v1162, %v1159
  %v1187 = vpack.c.bf16 %v1170, %v1167
  %v1188 = vpack.c.bf16 %v1178, %v1175
  %v1197 = vunpack.c.l.b16 %v1181
  %v1198 = vunpack.c.h.b16 %v1181
  %v1199 = vunpack.c.l.b16 %v1182
  %v1200 = vunpack.c.h.b16 %v1182
  %v1201 = vunpack.c.l.b16 %v1183
  %v1202 = vunpack.c.h.b16 %v1183
  %v1203 = vunpack.c.l.b16 %v1184
  %v1204 = vunpack.c.h.b16 %v1184
  %v1205 = vunpack.c.l.b16 %v1185
  %v1206 = vunpack.c.h.b16 %v1185
  %v1207 = vunpack.c.l.b16 %v1186
  %v1208 = vunpack.c.h.b16 %v1186
  %v1209 = vunpack.c.l.b16 %v1187
  %v1210 = vunpack.c.h.b16 %v1187
  %v1211 = vunpack.c.l.b16 %v1188
  %v1212 = vunpack.c.h.b16 %v1188
  %v1213 = vpack.c.b16 %v1197, %v1197
  %v1214 = vpack.c.b16 %v1198, %v1198
  %v1215 = vpack.c.b16 %v1199, %v1199
  %v1216 = vpack.c.b16 %v1200, %v1200
  %v1217 = vpack.c.b16 %v1201, %v1201
  %v1218 = vpack.c.b16 %v1202, %v1202
  %v1219 = vpack.c.b16 %v1203, %v1203
  %v1220 = vpack.c.b16 %v1204, %v1204
  %v1221 = vpack.c.b16 %v1205, %v1205
  %v1222 = vpack.c.b16 %v1206, %v1206
  %v1223 = vpack.c.b16 %v1207, %v1207
  %v1224 = vpack.c.b16 %v1208, %v1208
  %v1225 = vpack.c.b16 %v1209, %v1209
  %v1226 = vpack.c.b16 %v1210, %v1210
  %v1227 = vpack.c.b16 %v1211, %v1211
  %v1228 = vpack.c.b16 %v1212, %v1212
  %s1245 = scalar_lea.vmem %s5, 192
  %1246 = vst [vmem:[%s1245] sm:$0xf] %v1213
  %1247 = vst [vmem:[%s1245 + $0x4] sm:$0xf] %v1214
  %1248 = vst [vmem:[%s1245 + $0x8] sm:$0xf] %v1215
  %1249 = vst [vmem:[%s1245 + $0xc] sm:$0xf] %v1216
  %1250 = vst [vmem:[%s1245 + $0x10] sm:$0xf] %v1217
  %1251 = vst [vmem:[%s1245 + $0x14] sm:$0xf] %v1218
  %1252 = vst [vmem:[%s1245 + $0x18] sm:$0xf] %v1219
  %1253 = vst [vmem:[%s1245 + $0x1c] sm:$0xf] %v1220
  %1254 = vst [vmem:[%s1245 + $0x20] sm:$0xf] %v1221
  %1255 = vst [vmem:[%s1245 + $0x24] sm:$0xf] %v1222
  %1256 = vst [vmem:[%s1245 + $0x28] sm:$0xf] %v1223
  %1257 = vst [vmem:[%s1245 + $0x2c] sm:$0xf] %v1224
  %1258 = vst [vmem:[%s1245 + $0x30] sm:$0xf] %v1225
  %1259 = vst [vmem:[%s1245 + $0x34] sm:$0xf] %v1226
  %1260 = vst [vmem:[%s1245 + $0x38] sm:$0xf] %v1227
  %1261 = vst [vmem:[%s1245 + $0x3c] sm:$0xf] %v1228
  // Predicated region
  $region18: #{phenomnn_forward.7} parent=0 // pred_check
    _
  $region19: #{phenomnn_forward.7} parent=0 // pred_check_branch
    %1263 = sbr.rel (0) target = $region21
  $region20: #{phenomnn_forward.7} parent=0 // pred_region
    _
  $region21: #{phenomnn_forward.7} parent=0 // pred_fallthru
    _
  // Predicated region
  $region22: #{phenomnn_forward.7} parent=0 // pred_check
    _
  $region23: #{phenomnn_forward.7} parent=0 // pred_check_branch
    %1265 = sbr.rel (0) target = $region25
  $region24: #{phenomnn_forward.7} parent=0 // pred_region
    _
  $region25: #{phenomnn_forward.7} parent=0 // pred_fallthru
    _
  // Predicated region
  $region26: #{phenomnn_forward.7} parent=0 // pred_check
    _
  $region27: #{phenomnn_forward.7} parent=0 // pred_check_branch
    %1267 = sbr.rel (0) target = $region29
  $region28: #{phenomnn_forward.7} parent=0 // pred_region
    _
  $region29: #{phenomnn_forward.7} parent=0 // pred_fallthru
    _
  // Predicated region
  $region30: #{phenomnn_forward.7} parent=0 // pred_check
    _
  $region31: #{phenomnn_forward.7} parent=0 // pred_check_branch
    %1269 = sbr.rel (0) target = $region33
  $region32: #{phenomnn_forward.7} parent=0 // pred_region
    _
  $region33: #{phenomnn_forward.7} parent=0 // pred_fallthru
    _

// kernel: phenomnn_forward.9
$region0: #{phenomnn_forward.9}
  #allocation0 [shape = 'u32[]', space=smem, size = 0x4, offset = 0x4, fixed_abs, tag = 'smem constant byte address 0x4 - core index']
  #allocation1 [shape = 'u32[144,128]{1,0:T(1,128)}', space=vmem, size = 0x12000, scoped, tag = 'internal scratch']
  #allocation2 [shape = 'f32[128,128]{1,0:T(8,128)}', space=vmem, size = 0x10000, scoped, tag = 'scratch operand']
  %s0 = inlined_call_operand.vmem [shape: bf16[4,128,128], index: 0, kind: input, shape index: {}]
  %s1 = inlined_call_operand.vmem [shape: bf16[4,128,128], index: 1, kind: input, shape index: {}]
  %s2 = inlined_call_operand.vmem [shape: f32[128,128], index: 2, kind: input, shape index: {}]
  %s3 = inlined_call_operand.vmem [shape: bf16[128,128], index: 3, kind: output, shape index: {}]
  %s4 = sld [smem:[#allocation0]]
  $region30: #{phenomnn_forward.9} parent=0
    _
  %s6 = ssub.s32 1, %s4
  %s7 = scalar_select 0, %s6, %s4
  // Predicated region
  $region2: #{phenomnn_forward.9} parent=0 // pred_check
    _
  $region3: #{phenomnn_forward.9} parent=0 // pred_check_branch
    %9 = sbr.rel (0) target = $region5
  $region4: #{phenomnn_forward.9} parent=0 // pred_region
    _
  $region5: #{phenomnn_forward.9} parent=0 // pred_fallthru
    _
  // Predicated region
  $region6: #{phenomnn_forward.9} parent=0 // pred_check
    _
  $region7: #{phenomnn_forward.9} parent=0 // pred_check_branch
    %11 = sbr.rel (0) target = $region9
  $region8: #{phenomnn_forward.9} parent=0 // pred_region
    _
  $region9: #{phenomnn_forward.9} parent=0 // pred_fallthru
    _
  // Predicated region
  $region10: #{phenomnn_forward.9} parent=0 // pred_check
    _
  $region11: #{phenomnn_forward.9} parent=0 // pred_check_branch
    %13 = sbr.rel (0) target = $region13
  $region12: #{phenomnn_forward.9} parent=0 // pred_region
    _
  $region13: #{phenomnn_forward.9} parent=0 // pred_fallthru
    _
  %p15 = scmp.eq.s32.totalorder 0, 0
  // Predicated region
  $region14: #{phenomnn_forward.9} parent=0 // pred_check
    %p16 = pneg %p15
  $region15: #{phenomnn_forward.9} parent=0 // pred_check_branch
    %18 = sbr.rel (%p16) target = $region17
  $region16: #{phenomnn_forward.9} parent=0 // pred_region
    %19 = vst [vmem:[#allocation2] sm:$0xff] 0.0
    %20 = vst [vmem:[#allocation2 + $0x8] sm:$0xff] 0.0
    %21 = vst [vmem:[#allocation2 + $0x10] sm:$0xff] 0.0
    %22 = vst [vmem:[#allocation2 + $0x18] sm:$0xff] 0.0
    %23 = vst [vmem:[#allocation2 + $0x20] sm:$0xff] 0.0
    %24 = vst [vmem:[#allocation2 + $0x28] sm:$0xff] 0.0
    %25 = vst [vmem:[#allocation2 + $0x30] sm:$0xff] 0.0
    %26 = vst [vmem:[#allocation2 + $0x38] sm:$0xff] 0.0
    %27 = vst [vmem:[#allocation2 + $0x40] sm:$0xff] 0.0
    %28 = vst [vmem:[#allocation2 + $0x48] sm:$0xff] 0.0
    %29 = vst [vmem:[#allocation2 + $0x50] sm:$0xff] 0.0
    %30 = vst [vmem:[#allocation2 + $0x58] sm:$0xff] 0.0
    %31 = vst [vmem:[#allocation2 + $0x60] sm:$0xff] 0.0
    %32 = vst [vmem:[#allocation2 + $0x68] sm:$0xff] 0.0
    %33 = vst [vmem:[#allocation2 + $0x70] sm:$0xff] 0.0
    %34 = vst [vmem:[#allocation2 + $0x78] sm:$0xff] 0.0
  $region17: #{phenomnn_forward.9} parent=0 // pred_fallthru
    _
  %v35 = vld [vmem:[#allocation2] sm:$0xff]
  %v36 = vld [vmem:[#allocation2 + $0x8] sm:$0xff]
  %v37 = vld [vmem:[#allocation2 + $0x10] sm:$0xff]
  %v38 = vld [vmem:[#allocation2 + $0x18] sm:$0xff]
  %v39 = vld [vmem:[#allocation2 + $0x20] sm:$0xff]
  %v40 = vld [vmem:[#allocation2 + $0x28] sm:$0xff]
  %v41 = vld [vmem:[#allocation2 + $0x30] sm:$0xff]
  %v42 = vld [vmem:[#allocation2 + $0x38] sm:$0xff]
  %v43 = vld [vmem:[#allocation2 + $0x40] sm:$0xff]
  %v44 = vld [vmem:[#allocation2 + $0x48] sm:$0xff]
  %v45 = vld [vmem:[#allocation2 + $0x50] sm:$0xff]
  %v46 = vld [vmem:[#allocation2 + $0x58] sm:$0xff]
  %v47 = vld [vmem:[#allocation2 + $0x60] sm:$0xff]
  %v48 = vld [vmem:[#allocation2 + $0x68] sm:$0xff]
  %v49 = vld [vmem:[#allocation2 + $0x70] sm:$0xff]
  %v50 = vld [vmem:[#allocation2 + $0x78] sm:$0xff]
  %v51 = vld [vmem:[%s0] sm:$0xf]
  %v52 = vld [vmem:[%s0 + $0x4] sm:$0xf]
  %v53 = vld [vmem:[%s0 + $0x8] sm:$0xf]
  %v54 = vld [vmem:[%s0 + $0xc] sm:$0xf]
  %v55 = vld [vmem:[%s0 + $0x10] sm:$0xf]
  %v56 = vld [vmem:[%s0 + $0x14] sm:$0xf]
  %v57 = vld [vmem:[%s0 + $0x18] sm:$0xf]
  %v58 = vld [vmem:[%s0 + $0x1c] sm:$0xf]
  %v59 = vld [vmem:[%s0 + $0x20] sm:$0xf]
  %v60 = vld [vmem:[%s0 + $0x24] sm:$0xf]
  %v61 = vld [vmem:[%s0 + $0x28] sm:$0xf]
  %v62 = vld [vmem:[%s0 + $0x2c] sm:$0xf]
  %v63 = vld [vmem:[%s0 + $0x30] sm:$0xf]
  %v64 = vld [vmem:[%s0 + $0x34] sm:$0xf]
  %v65 = vld [vmem:[%s0 + $0x38] sm:$0xf]
  %v66 = vld [vmem:[%s0 + $0x3c] sm:$0xf]
  %v67 = vld [vmem:[%s1] sm:$0xf]
  %v68 = vld [vmem:[%s1 + $0x4] sm:$0xf]
  %v69 = vld [vmem:[%s1 + $0x8] sm:$0xf]
  %v70 = vld [vmem:[%s1 + $0xc] sm:$0xf]
  %v71 = vld [vmem:[%s1 + $0x10] sm:$0xf]
  %v72 = vld [vmem:[%s1 + $0x14] sm:$0xf]
  %v73 = vld [vmem:[%s1 + $0x18] sm:$0xf]
  %v74 = vld [vmem:[%s1 + $0x1c] sm:$0xf]
  %v75 = vld [vmem:[%s1 + $0x20] sm:$0xf]
  %v76 = vld [vmem:[%s1 + $0x24] sm:$0xf]
  %v77 = vld [vmem:[%s1 + $0x28] sm:$0xf]
  %v78 = vld [vmem:[%s1 + $0x2c] sm:$0xf]
  %v79 = vld [vmem:[%s1 + $0x30] sm:$0xf]
  %v80 = vld [vmem:[%s1 + $0x34] sm:$0xf]
  %v81 = vld [vmem:[%s1 + $0x38] sm:$0xf]
  %v82 = vld [vmem:[%s1 + $0x3c] sm:$0xf]
  %s83 = scalar_lea.vmem %s0, 64
  %v84 = vld [vmem:[%s83] sm:$0xf]
  %v85 = vld [vmem:[%s83 + $0x4] sm:$0xf]
  %v86 = vld [vmem:[%s83 + $0x8] sm:$0xf]
  %v87 = vld [vmem:[%s83 + $0xc] sm:$0xf]
  %v88 = vld [vmem:[%s83 + $0x10] sm:$0xf]
  %v89 = vld [vmem:[%s83 + $0x14] sm:$0xf]
  %v90 = vld [vmem:[%s83 + $0x18] sm:$0xf]
  %v91 = vld [vmem:[%s83 + $0x1c] sm:$0xf]
  %v92 = vld [vmem:[%s83 + $0x20] sm:$0xf]
  %v93 = vld [vmem:[%s83 + $0x24] sm:$0xf]
  %v94 = vld [vmem:[%s83 + $0x28] sm:$0xf]
  %v95 = vld [vmem:[%s83 + $0x2c] sm:$0xf]
  %v96 = vld [vmem:[%s83 + $0x30] sm:$0xf]
  %v97 = vld [vmem:[%s83 + $0x34] sm:$0xf]
  %v98 = vld [vmem:[%s83 + $0x38] sm:$0xf]
  %v99 = vld [vmem:[%s83 + $0x3c] sm:$0xf]
  %s100 = scalar_lea.vmem %s1, 64
  %v101 = vld [vmem:[%s100] sm:$0xf]
  %v102 = vld [vmem:[%s100 + $0x4] sm:$0xf]
  %v103 = vld [vmem:[%s100 + $0x8] sm:$0xf]
  %v104 = vld [vmem:[%s100 + $0xc] sm:$0xf]
  %v105 = vld [vmem:[%s100 + $0x10] sm:$0xf]
  %v106 = vld [vmem:[%s100 + $0x14] sm:$0xf]
  %v107 = vld [vmem:[%s100 + $0x18] sm:$0xf]
  %v108 = vld [vmem:[%s100 + $0x1c] sm:$0xf]
  %v109 = vld [vmem:[%s100 + $0x20] sm:$0xf]
  %v110 = vld [vmem:[%s100 + $0x24] sm:$0xf]
  %v111 = vld [vmem:[%s100 + $0x28] sm:$0xf]
  %v112 = vld [vmem:[%s100 + $0x2c] sm:$0xf]
  %v113 = vld [vmem:[%s100 + $0x30] sm:$0xf]
  %v114 = vld [vmem:[%s100 + $0x34] sm:$0xf]
  %v115 = vld [vmem:[%s100 + $0x38] sm:$0xf]
  %v116 = vld [vmem:[%s100 + $0x3c] sm:$0xf]
  %v133 = vunpack.c.l.b16 %v84
  %v134 = vunpack.c.l.b16 %v85
  %v135 = vunpack.c.l.b16 %v86
  %v136 = vunpack.c.l.b16 %v87
  %v137 = vunpack.c.l.b16 %v88
  %v138 = vunpack.c.l.b16 %v89
  %v139 = vunpack.c.l.b16 %v90
  %v140 = vunpack.c.l.b16 %v91
  %v141 = vunpack.c.l.b16 %v92
  %v142 = vunpack.c.l.b16 %v93
  %v143 = vunpack.c.l.b16 %v94
  %v144 = vunpack.c.l.b16 %v95
  %v145 = vunpack.c.l.b16 %v96
  %v146 = vunpack.c.l.b16 %v97
  %v147 = vunpack.c.l.b16 %v98
  %v148 = vunpack.c.l.b16 %v99
  %v149 = vpack.c.b16 %v134, %v133
  %v150 = vpack.c.b16 %v136, %v135
  %v151 = vpack.c.b16 %v138, %v137
  %v152 = vpack.c.b16 %v140, %v139
  %v153 = vpack.c.b16 %v142, %v141
  %v154 = vpack.c.b16 %v144, %v143
  %v155 = vpack.c.b16 %v146, %v145
  %v156 = vpack.c.b16 %v148, %v147
  %v181 = vunpack.c.l.b16 %v101
  %v182 = vunpack.c.l.b16 %v102
  %v183 = vunpack.c.l.b16 %v103
  %v184 = vunpack.c.l.b16 %v104
  %v185 = vunpack.c.l.b16 %v105
  %v186 = vunpack.c.l.b16 %v106
  %v187 = vunpack.c.l.b16 %v107
  %v188 = vunpack.c.l.b16 %v108
  %v189 = vunpack.c.l.b16 %v109
  %v190 = vunpack.c.l.b16 %v110
  %v191 = vunpack.c.l.b16 %v111
  %v192 = vunpack.c.l.b16 %v112
  %v193 = vunpack.c.l.b16 %v113
  %v194 = vunpack.c.l.b16 %v114
  %v195 = vunpack.c.l.b16 %v115
  %v196 = vunpack.c.l.b16 %v116
  %v197 = vpack.c.b16 %v182, %v181
  %v198 = vpack.c.b16 %v184, %v183
  %v199 = vpack.c.b16 %v186, %v185
  %v200 = vpack.c.b16 %v188, %v187
  %v201 = vpack.c.b16 %v190, %v189
  %v202 = vpack.c.b16 %v192, %v191
  %v203 = vpack.c.b16 %v194, %v193
  %v204 = vpack.c.b16 %v196, %v195
  %213 = vmatprep.subr.bf16.mxu0 0
  %214 = vmatpush1.bf16.msra.mxu0 %v204
  %215 = vmatprep.subr.bf16.mxu0 0
  %216 = vmatpush1.bf16.msra.mxu0 %v203
  %217 = vmatprep.subr.bf16.mxu0 0
  %218 = vmatpush1.bf16.msra.mxu0 %v202
  %219 = vmatprep.subr.bf16.mxu0 0
  %220 = vmatpush1.bf16.msra.mxu0 %v201
  %221 = vmatprep.subr.bf16.mxu0 0
  %222 = vmatpush1.bf16.msra.mxu0 %v200
  %223 = vmatprep.subr.bf16.mxu0 0
  %224 = vmatpush1.bf16.msra.mxu0 %v199
  %225 = vmatprep.subr.bf16.mxu0 0
  %226 = vmatpush1.bf16.msra.mxu0 %v198
  %227 = vmatprep.subr.bf16.mxu0 0
  %228 = vmatpush1.bf16.msra.mxu0 %v197
  %229 = vmatprep.subr.bf16.mxu0 0
  %230 = vmatpush2.bf16.msra.mxu0 0
  %231 = vmatprep.subr.bf16.mxu0 0
  %232 = vmatpush2.bf16.msra.mxu0 0
  %233 = vmatprep.subr.bf16.mxu0 0
  %234 = vmatpush2.bf16.msra.mxu0 0
  %235 = vmatprep.subr.bf16.mxu0 0
  %236 = vmatpush2.bf16.msra.mxu0 0
  %237 = vmatprep.subr.bf16.mxu0 0
  %238 = vmatpush2.bf16.msra.mxu0 0
  %239 = vmatprep.subr.bf16.mxu0 0
  %240 = vmatpush2.bf16.msra.mxu0 0
  %241 = vmatprep.subr.bf16.mxu0 0
  %242 = vmatpush2.bf16.msra.mxu0 0
  %243 = vmatprep.subr.bf16.mxu0 0
  %244 = vmatpush2.bf16.msra.mxu0 0
  %245 = vmatprep.mubr.bf16.mxu0 0
  %246 = vmatmul.mubr.bf16.gmra.mxu0 %v149
  %v247 = vpop.f32.mrf.mxu0
  %v248 = vadd.f32 0.0, %v247
  %v249 = vpop.f32.mrf.mxu0
  %v250 = vpop.f32.mrf.mxu0
  %v251 = vadd.f32 0.0, %v250
  %v252 = vpop.f32.mrf.mxu0
  %253 = vmatprep.mubr.bf16.mxu0 0
  %254 = vmatmul.mubr.bf16.gmra.mxu0 %v150
  %v255 = vpop.f32.mrf.mxu0
  %v256 = vadd.f32 0.0, %v255
  %v257 = vpop.f32.mrf.mxu0
  %v258 = vpop.f32.mrf.mxu0
  %v259 = vadd.f32 0.0, %v258
  %v260 = vpop.f32.mrf.mxu0
  %261 = vmatprep.mubr.bf16.mxu0 0
  %262 = vmatmul.mubr.bf16.gmra.mxu0 %v151
  %v263 = vpop.f32.mrf.mxu0
  %v264 = vadd.f32 0.0, %v263
  %v265 = vpop.f32.mrf.mxu0
  %v266 = vpop.f32.mrf.mxu0
  %v267 = vadd.f32 0.0, %v266
  %v268 = vpop.f32.mrf.mxu0
  %269 = vmatprep.mubr.bf16.mxu0 0
  %270 = vmatmul.mubr.bf16.gmra.mxu0 %v152
  %v271 = vpop.f32.mrf.mxu0
  %v272 = vadd.f32 0.0, %v271
  %v273 = vpop.f32.mrf.mxu0
  %v274 = vpop.f32.mrf.mxu0
  %v275 = vadd.f32 0.0, %v274
  %v276 = vpop.f32.mrf.mxu0
  %277 = vmatprep.mubr.bf16.mxu0 0
  %278 = vmatmul.mubr.bf16.gmra.mxu0 %v153
  %v279 = vpop.f32.mrf.mxu0
  %v280 = vadd.f32 0.0, %v279
  %v281 = vpop.f32.mrf.mxu0
  %v282 = vpop.f32.mrf.mxu0
  %v283 = vadd.f32 0.0, %v282
  %v284 = vpop.f32.mrf.mxu0
  %285 = vmatprep.mubr.bf16.mxu0 0
  %286 = vmatmul.mubr.bf16.gmra.mxu0 %v154
  %v287 = vpop.f32.mrf.mxu0
  %v288 = vadd.f32 0.0, %v287
  %v289 = vpop.f32.mrf.mxu0
  %v290 = vpop.f32.mrf.mxu0
  %v291 = vadd.f32 0.0, %v290
  %v292 = vpop.f32.mrf.mxu0
  %293 = vmatprep.mubr.bf16.mxu0 0
  %294 = vmatmul.mubr.bf16.gmra.mxu0 %v155
  %v295 = vpop.f32.mrf.mxu0
  %v296 = vadd.f32 0.0, %v295
  %v297 = vpop.f32.mrf.mxu0
  %v298 = vpop.f32.mrf.mxu0
  %v299 = vadd.f32 0.0, %v298
  %v300 = vpop.f32.mrf.mxu0
  %301 = vmatprep.mubr.bf16.mxu0 0
  %302 = vmatmul.mubr.bf16.gmra.mxu0 %v156
  %v303 = vpop.f32.mrf.mxu0
  %v304 = vadd.f32 0.0, %v303
  %v305 = vpop.f32.mrf.mxu0
  %v306 = vpop.f32.mrf.mxu0
  %v307 = vadd.f32 0.0, %v306
  %v308 = vpop.f32.mrf.mxu0
  %309 = vdwg.mxu0
  %v326 = vunpack.c.l.b16 %v51
  %v327 = vunpack.c.l.b16 %v52
  %v328 = vunpack.c.l.b16 %v53
  %v329 = vunpack.c.l.b16 %v54
  %v330 = vunpack.c.l.b16 %v55
  %v331 = vunpack.c.l.b16 %v56
  %v332 = vunpack.c.l.b16 %v57
  %v333 = vunpack.c.l.b16 %v58
  %v334 = vunpack.c.l.b16 %v59
  %v335 = vunpack.c.l.b16 %v60
  %v336 = vunpack.c.l.b16 %v61
  %v337 = vunpack.c.l.b16 %v62
  %v338 = vunpack.c.l.b16 %v63
  %v339 = vunpack.c.l.b16 %v64
  %v340 = vunpack.c.l.b16 %v65
  %v341 = vunpack.c.l.b16 %v66
  %v342 = vpack.c.b16 %v327, %v326
  %v343 = vpack.c.b16 %v329, %v328
  %v344 = vpack.c.b16 %v331, %v330
  %v345 = vpack.c.b16 %v333, %v332
  %v346 = vpack.c.b16 %v335, %v334
  %v347 = vpack.c.b16 %v337, %v336
  %v348 = vpack.c.b16 %v339, %v338
  %v349 = vpack.c.b16 %v341, %v340
  %v374 = vunpack.c.l.b16 %v67
  %v375 = vunpack.c.l.b16 %v68
  %v376 = vunpack.c.l.b16 %v69
  %v377 = vunpack.c.l.b16 %v70
  %v378 = vunpack.c.l.b16 %v71
  %v379 = vunpack.c.l.b16 %v72
  %v380 = vunpack.c.l.b16 %v73
  %v381 = vunpack.c.l.b16 %v74
  %v382 = vunpack.c.l.b16 %v75
  %v383 = vunpack.c.l.b16 %v76
  %v384 = vunpack.c.l.b16 %v77
  %v385 = vunpack.c.l.b16 %v78
  %v386 = vunpack.c.l.b16 %v79
  %v387 = vunpack.c.l.b16 %v80
  %v388 = vunpack.c.l.b16 %v81
  %v389 = vunpack.c.l.b16 %v82
  %v390 = vpack.c.b16 %v375, %v374
  %v391 = vpack.c.b16 %v377, %v376
  %v392 = vpack.c.b16 %v379, %v378
  %v393 = vpack.c.b16 %v381, %v380
  %v394 = vpack.c.b16 %v383, %v382
  %v395 = vpack.c.b16 %v385, %v384
  %v396 = vpack.c.b16 %v387, %v386
  %v397 = vpack.c.b16 %v389, %v388
  %406 = vmatprep.subr.bf16.mxu0 0
  %407 = vmatpush1.bf16.msra.mxu0 %v397
  %408 = vmatprep.subr.bf16.mxu0 0
  %409 = vmatpush1.bf16.msra.mxu0 %v396
  %410 = vmatprep.subr.bf16.mxu0 0
  %411 = vmatpush1.bf16.msra.mxu0 %v395
  %412 = vmatprep.subr.bf16.mxu0 0
  %413 = vmatpush1.bf16.msra.mxu0 %v394
  %414 = vmatprep.subr.bf16.mxu0 0
  %415 = vmatpush1.bf16.msra.mxu0 %v393
  %416 = vmatprep.subr.bf16.mxu0 0
  %417 = vmatpush1.bf16.msra.mxu0 %v392
  %418 = vmatprep.subr.bf16.mxu0 0
  %419 = vmatpush1.bf16.msra.mxu0 %v391
  %420 = vmatprep.subr.bf16.mxu0 0
  %421 = vmatpush1.bf16.msra.mxu0 %v390
  %422 = vmatprep.subr.bf16.mxu0 0
  %423 = vmatpush2.bf16.msra.mxu0 0
  %424 = vmatprep.subr.bf16.mxu0 0
  %425 = vmatpush2.bf16.msra.mxu0 0
  %426 = vmatprep.subr.bf16.mxu0 0
  %427 = vmatpush2.bf16.msra.mxu0 0
  %428 = vmatprep.subr.bf16.mxu0 0
  %429 = vmatpush2.bf16.msra.mxu0 0
  %430 = vmatprep.subr.bf16.mxu0 0
  %431 = vmatpush2.bf16.msra.mxu0 0
  %432 = vmatprep.subr.bf16.mxu0 0
  %433 = vmatpush2.bf16.msra.mxu0 0
  %434 = vmatprep.subr.bf16.mxu0 0
  %435 = vmatpush2.bf16.msra.mxu0 0
  %436 = vmatprep.subr.bf16.mxu0 0
  %437 = vmatpush2.bf16.msra.mxu0 0
  %438 = vmatprep.mubr.bf16.mxu0 0
  %439 = vmatmul.mubr.bf16.gmra.mxu0 %v342
  %v440 = vpop.f32.mrf.mxu0
  %v441 = vadd.f32 %v248, %v440
  %v442 = vpop.f32.mrf.mxu0
  %v443 = vpop.f32.mrf.mxu0
  %v444 = vadd.f32 %v251, %v443
  %v445 = vpop.f32.mrf.mxu0
  %446 = vmatprep.mubr.bf16.mxu0 0
  %447 = vmatmul.mubr.bf16.gmra.mxu0 %v343
  %v448 = vpop.f32.mrf.mxu0
  %v449 = vadd.f32 %v256, %v448
  %v450 = vpop.f32.mrf.mxu0
  %v451 = vpop.f32.mrf.mxu0
  %v452 = vadd.f32 %v259, %v451
  %v453 = vpop.f32.mrf.mxu0
  %454 = vmatprep.mubr.bf16.mxu0 0
  %455 = vmatmul.mubr.bf16.gmra.mxu0 %v344
  %v456 = vpop.f32.mrf.mxu0
  %v457 = vadd.f32 %v264, %v456
  %v458 = vpop.f32.mrf.mxu0
  %v459 = vpop.f32.mrf.mxu0
  %v460 = vadd.f32 %v267, %v459
  %v461 = vpop.f32.mrf.mxu0
  %462 = vmatprep.mubr.bf16.mxu0 0
  %463 = vmatmul.mubr.bf16.gmra.mxu0 %v345
  %v464 = vpop.f32.mrf.mxu0
  %v465 = vadd.f32 %v272, %v464
  %v466 = vpop.f32.mrf.mxu0
  %v467 = vpop.f32.mrf.mxu0
  %v468 = vadd.f32 %v275, %v467
  %v469 = vpop.f32.mrf.mxu0
  %470 = vmatprep.mubr.bf16.mxu0 0
  %471 = vmatmul.mubr.bf16.gmra.mxu0 %v346
  %v472 = vpop.f32.mrf.mxu0
  %v473 = vadd.f32 %v280, %v472
  %v474 = vpop.f32.mrf.mxu0
  %v475 = vpop.f32.mrf.mxu0
  %v476 = vadd.f32 %v283, %v475
  %v477 = vpop.f32.mrf.mxu0
  %478 = vmatprep.mubr.bf16.mxu0 0
  %479 = vmatmul.mubr.bf16.gmra.mxu0 %v347
  %v480 = vpop.f32.mrf.mxu0
  %v481 = vadd.f32 %v288, %v480
  %v482 = vpop.f32.mrf.mxu0
  %v483 = vpop.f32.mrf.mxu0
  %v484 = vadd.f32 %v291, %v483
  %v485 = vpop.f32.mrf.mxu0
  %486 = vmatprep.mubr.bf16.mxu0 0
  %487 = vmatmul.mubr.bf16.gmra.mxu0 %v348
  %v488 = vpop.f32.mrf.mxu0
  %v489 = vadd.f32 %v296, %v488
  %v490 = vpop.f32.mrf.mxu0
  %v491 = vpop.f32.mrf.mxu0
  %v492 = vadd.f32 %v299, %v491
  %v493 = vpop.f32.mrf.mxu0
  %494 = vmatprep.mubr.bf16.mxu0 0
  %495 = vmatmul.mubr.bf16.gmra.mxu0 %v349
  %v496 = vpop.f32.mrf.mxu0
  %v497 = vadd.f32 %v304, %v496
  %v498 = vpop.f32.mrf.mxu0
  %v499 = vpop.f32.mrf.mxu0
  %v500 = vadd.f32 %v307, %v499
  %v501 = vpop.f32.mrf.mxu0
  %502 = vdwg.mxu0
  %s503 = scalar_lea.vmem %s0, 128
  %v504 = vld [vmem:[%s503] sm:$0xf]
  %v505 = vld [vmem:[%s503 + $0x4] sm:$0xf]
  %v506 = vld [vmem:[%s503 + $0x8] sm:$0xf]
  %v507 = vld [vmem:[%s503 + $0xc] sm:$0xf]
  %v508 = vld [vmem:[%s503 + $0x10] sm:$0xf]
  %v509 = vld [vmem:[%s503 + $0x14] sm:$0xf]
  %v510 = vld [vmem:[%s503 + $0x18] sm:$0xf]
  %v511 = vld [vmem:[%s503 + $0x1c] sm:$0xf]
  %v512 = vld [vmem:[%s503 + $0x20] sm:$0xf]
  %v513 = vld [vmem:[%s503 + $0x24] sm:$0xf]
  %v514 = vld [vmem:[%s503 + $0x28] sm:$0xf]
  %v515 = vld [vmem:[%s503 + $0x2c] sm:$0xf]
  %v516 = vld [vmem:[%s503 + $0x30] sm:$0xf]
  %v517 = vld [vmem:[%s503 + $0x34] sm:$0xf]
  %v518 = vld [vmem:[%s503 + $0x38] sm:$0xf]
  %v519 = vld [vmem:[%s503 + $0x3c] sm:$0xf]
  %s520 = scalar_lea.vmem %s1, 128
  %v521 = vld [vmem:[%s520] sm:$0xf]
  %v522 = vld [vmem:[%s520 + $0x4] sm:$0xf]
  %v523 = vld [vmem:[%s520 + $0x8] sm:$0xf]
  %v524 = vld [vmem:[%s520 + $0xc] sm:$0xf]
  %v525 = vld [vmem:[%s520 + $0x10] sm:$0xf]
  %v526 = vld [vmem:[%s520 + $0x14] sm:$0xf]
  %v527 = vld [vmem:[%s520 + $0x18] sm:$0xf]
  %v528 = vld [vmem:[%s520 + $0x1c] sm:$0xf]
  %v529 = vld [vmem:[%s520 + $0x20] sm:$0xf]
  %v530 = vld [vmem:[%s520 + $0x24] sm:$0xf]
  %v531 = vld [vmem:[%s520 + $0x28] sm:$0xf]
  %v532 = vld [vmem:[%s520 + $0x2c] sm:$0xf]
  %v533 = vld [vmem:[%s520 + $0x30] sm:$0xf]
  %v534 = vld [vmem:[%s520 + $0x34] sm:$0xf]
  %v535 = vld [vmem:[%s520 + $0x38] sm:$0xf]
  %v536 = vld [vmem:[%s520 + $0x3c] sm:$0xf]
  %v553 = vunpack.c.l.b16 %v504
  %v554 = vunpack.c.l.b16 %v505
  %v555 = vunpack.c.l.b16 %v506
  %v556 = vunpack.c.l.b16 %v507
  %v557 = vunpack.c.l.b16 %v508
  %v558 = vunpack.c.l.b16 %v509
  %v559 = vunpack.c.l.b16 %v510
  %v560 = vunpack.c.l.b16 %v511
  %v561 = vunpack.c.l.b16 %v512
  %v562 = vunpack.c.l.b16 %v513
  %v563 = vunpack.c.l.b16 %v514
  %v564 = vunpack.c.l.b16 %v515
  %v565 = vunpack.c.l.b16 %v516
  %v566 = vunpack.c.l.b16 %v517
  %v567 = vunpack.c.l.b16 %v518
  %v568 = vunpack.c.l.b16 %v519
  %v569 = vpack.c.b16 %v554, %v553
  %v570 = vpack.c.b16 %v556, %v555
  %v571 = vpack.c.b16 %v558, %v557
  %v572 = vpack.c.b16 %v560, %v559
  %v573 = vpack.c.b16 %v562, %v561
  %v574 = vpack.c.b16 %v564, %v563
  %v575 = vpack.c.b16 %v566, %v565
  %v576 = vpack.c.b16 %v568, %v567
  %v601 = vunpack.c.l.b16 %v521
  %v602 = vunpack.c.l.b16 %v522
  %v603 = vunpack.c.l.b16 %v523
  %v604 = vunpack.c.l.b16 %v524
  %v605 = vunpack.c.l.b16 %v525
  %v606 = vunpack.c.l.b16 %v526
  %v607 = vunpack.c.l.b16 %v527
  %v608 = vunpack.c.l.b16 %v528
  %v609 = vunpack.c.l.b16 %v529
  %v610 = vunpack.c.l.b16 %v530
  %v611 = vunpack.c.l.b16 %v531
  %v612 = vunpack.c.l.b16 %v532
  %v613 = vunpack.c.l.b16 %v533
  %v614 = vunpack.c.l.b16 %v534
  %v615 = vunpack.c.l.b16 %v535
  %v616 = vunpack.c.l.b16 %v536
  %v617 = vpack.c.b16 %v602, %v601
  %v618 = vpack.c.b16 %v604, %v603
  %v619 = vpack.c.b16 %v606, %v605
  %v620 = vpack.c.b16 %v608, %v607
  %v621 = vpack.c.b16 %v610, %v609
  %v622 = vpack.c.b16 %v612, %v611
  %v623 = vpack.c.b16 %v614, %v613
  %v624 = vpack.c.b16 %v616, %v615
  %633 = vmatprep.subr.bf16.mxu0 0
  %634 = vmatpush1.bf16.msra.mxu0 %v624
  %635 = vmatprep.subr.bf16.mxu0 0
  %636 = vmatpush1.bf16.msra.mxu0 %v623
  %637 = vmatprep.subr.bf16.mxu0 0
  %638 = vmatpush1.bf16.msra.mxu0 %v622
  %639 = vmatprep.subr.bf16.mxu0 0
  %640 = vmatpush1.bf16.msra.mxu0 %v621
  %641 = vmatprep.subr.bf16.mxu0 0
  %642 = vmatpush1.bf16.msra.mxu0 %v620
  %643 = vmatprep.subr.bf16.mxu0 0
  %644 = vmatpush1.bf16.msra.mxu0 %v619
  %645 = vmatprep.subr.bf16.mxu0 0
  %646 = vmatpush1.bf16.msra.mxu0 %v618
  %647 = vmatprep.subr.bf16.mxu0 0
  %648 = vmatpush1.bf16.msra.mxu0 %v617
  %649 = vmatprep.subr.bf16.mxu0 0
  %650 = vmatpush2.bf16.msra.mxu0 0
  %651 = vmatprep.subr.bf16.mxu0 0
  %652 = vmatpush2.bf16.msra.mxu0 0
  %653 = vmatprep.subr.bf16.mxu0 0
  %654 = vmatpush2.bf16.msra.mxu0 0
  %655 = vmatprep.subr.bf16.mxu0 0
  %656 = vmatpush2.bf16.msra.mxu0 0
  %657 = vmatprep.subr.bf16.mxu0 0
  %658 = vmatpush2.bf16.msra.mxu0 0
  %659 = vmatprep.subr.bf16.mxu0 0
  %660 = vmatpush2.bf16.msra.mxu0 0
  %661 = vmatprep.subr.bf16.mxu0 0
  %662 = vmatpush2.bf16.msra.mxu0 0
  %663 = vmatprep.subr.bf16.mxu0 0
  %664 = vmatpush2.bf16.msra.mxu0 0
  %665 = vmatprep.mubr.bf16.mxu0 0
  %666 = vmatmul.mubr.bf16.gmra.mxu0 %v569
  %v667 = vpop.f32.mrf.mxu0
  %v668 = vadd.f32 0.0, %v667
  %v669 = vpop.f32.mrf.mxu0
  %v670 = vpop.f32.mrf.mxu0
  %v671 = vadd.f32 0.0, %v670
  %v672 = vpop.f32.mrf.mxu0
  %673 = vmatprep.mubr.bf16.mxu0 0
  %674 = vmatmul.mubr.bf16.gmra.mxu0 %v570
  %v675 = vpop.f32.mrf.mxu0
  %v676 = vadd.f32 0.0, %v675
  %v677 = vpop.f32.mrf.mxu0
  %v678 = vpop.f32.mrf.mxu0
  %v679 = vadd.f32 0.0, %v678
  %v680 = vpop.f32.mrf.mxu0
  %681 = vmatprep.mubr.bf16.mxu0 0
  %682 = vmatmul.mubr.bf16.gmra.mxu0 %v571
  %v683 = vpop.f32.mrf.mxu0
  %v684 = vadd.f32 0.0, %v683
  %v685 = vpop.f32.mrf.mxu0
  %v686 = vpop.f32.mrf.mxu0
  %v687 = vadd.f32 0.0, %v686
  %v688 = vpop.f32.mrf.mxu0
  %689 = vmatprep.mubr.bf16.mxu0 0
  %690 = vmatmul.mubr.bf16.gmra.mxu0 %v572
  %v691 = vpop.f32.mrf.mxu0
  %v692 = vadd.f32 0.0, %v691
  %v693 = vpop.f32.mrf.mxu0
  %v694 = vpop.f32.mrf.mxu0
  %v695 = vadd.f32 0.0, %v694
  %v696 = vpop.f32.mrf.mxu0
  %697 = vmatprep.mubr.bf16.mxu0 0
  %698 = vmatmul.mubr.bf16.gmra.mxu0 %v573
  %v699 = vpop.f32.mrf.mxu0
  %v700 = vadd.f32 0.0, %v699
  %v701 = vpop.f32.mrf.mxu0
  %v702 = vpop.f32.mrf.mxu0
  %v703 = vadd.f32 0.0, %v702
  %v704 = vpop.f32.mrf.mxu0
  %705 = vmatprep.mubr.bf16.mxu0 0
  %706 = vmatmul.mubr.bf16.gmra.mxu0 %v574
  %v707 = vpop.f32.mrf.mxu0
  %v708 = vadd.f32 0.0, %v707
  %v709 = vpop.f32.mrf.mxu0
  %v710 = vpop.f32.mrf.mxu0
  %v711 = vadd.f32 0.0, %v710
  %v712 = vpop.f32.mrf.mxu0
  %713 = vmatprep.mubr.bf16.mxu0 0
  %714 = vmatmul.mubr.bf16.gmra.mxu0 %v575
  %v715 = vpop.f32.mrf.mxu0
  %v716 = vadd.f32 0.0, %v715
  %v717 = vpop.f32.mrf.mxu0
  %v718 = vpop.f32.mrf.mxu0
  %v719 = vadd.f32 0.0, %v718
  %v720 = vpop.f32.mrf.mxu0
  %721 = vmatprep.mubr.bf16.mxu0 0
  %722 = vmatmul.mubr.bf16.gmra.mxu0 %v576
  %v723 = vpop.f32.mrf.mxu0
  %v724 = vadd.f32 0.0, %v723
  %v725 = vpop.f32.mrf.mxu0
  %v726 = vpop.f32.mrf.mxu0
  %v727 = vadd.f32 0.0, %v726
  %v728 = vpop.f32.mrf.mxu0
  %729 = vdwg.mxu0
  %v730 = vadd.f32 %v441, %v668
  %v731 = vadd.f32 %v444, %v671
  %v732 = vadd.f32 %v449, %v676
  %v733 = vadd.f32 %v452, %v679
  %v734 = vadd.f32 %v457, %v684
  %v735 = vadd.f32 %v460, %v687
  %v736 = vadd.f32 %v465, %v692
  %v737 = vadd.f32 %v468, %v695
  %v738 = vadd.f32 %v473, %v700
  %v739 = vadd.f32 %v476, %v703
  %v740 = vadd.f32 %v481, %v708
  %v741 = vadd.f32 %v484, %v711
  %v742 = vadd.f32 %v489, %v716
  %v743 = vadd.f32 %v492, %v719
  %v744 = vadd.f32 %v497, %v724
  %v745 = vadd.f32 %v500, %v727
  %s746 = scalar_lea.vmem %s0, 192
  %v747 = vld [vmem:[%s746] sm:$0xf]
  %v748 = vld [vmem:[%s746 + $0x4] sm:$0xf]
  %v749 = vld [vmem:[%s746 + $0x8] sm:$0xf]
  %v750 = vld [vmem:[%s746 + $0xc] sm:$0xf]
  %v751 = vld [vmem:[%s746 + $0x10] sm:$0xf]
  %v752 = vld [vmem:[%s746 + $0x14] sm:$0xf]
  %v753 = vld [vmem:[%s746 + $0x18] sm:$0xf]
  %v754 = vld [vmem:[%s746 + $0x1c] sm:$0xf]
  %v755 = vld [vmem:[%s746 + $0x20] sm:$0xf]
  %v756 = vld [vmem:[%s746 + $0x24] sm:$0xf]
  %v757 = vld [vmem:[%s746 + $0x28] sm:$0xf]
  %v758 = vld [vmem:[%s746 + $0x2c] sm:$0xf]
  %v759 = vld [vmem:[%s746 + $0x30] sm:$0xf]
  %v760 = vld [vmem:[%s746 + $0x34] sm:$0xf]
  %v761 = vld [vmem:[%s746 + $0x38] sm:$0xf]
  %v762 = vld [vmem:[%s746 + $0x3c] sm:$0xf]
  %s763 = scalar_lea.vmem %s1, 192
  %v764 = vld [vmem:[%s763] sm:$0xf]
  %v765 = vld [vmem:[%s763 + $0x4] sm:$0xf]
  %v766 = vld [vmem:[%s763 + $0x8] sm:$0xf]
  %v767 = vld [vmem:[%s763 + $0xc] sm:$0xf]
  %v768 = vld [vmem:[%s763 + $0x10] sm:$0xf]
  %v769 = vld [vmem:[%s763 + $0x14] sm:$0xf]
  %v770 = vld [vmem:[%s763 + $0x18] sm:$0xf]
  %v771 = vld [vmem:[%s763 + $0x1c] sm:$0xf]
  %v772 = vld [vmem:[%s763 + $0x20] sm:$0xf]
  %v773 = vld [vmem:[%s763 + $0x24] sm:$0xf]
  %v774 = vld [vmem:[%s763 + $0x28] sm:$0xf]
  %v775 = vld [vmem:[%s763 + $0x2c] sm:$0xf]
  %v776 = vld [vmem:[%s763 + $0x30] sm:$0xf]
  %v777 = vld [vmem:[%s763 + $0x34] sm:$0xf]
  %v778 = vld [vmem:[%s763 + $0x38] sm:$0xf]
  %v779 = vld [vmem:[%s763 + $0x3c] sm:$0xf]
  %v796 = vunpack.c.l.b16 %v747
  %v797 = vunpack.c.l.b16 %v748
  %v798 = vunpack.c.l.b16 %v749
  %v799 = vunpack.c.l.b16 %v750
  %v800 = vunpack.c.l.b16 %v751
  %v801 = vunpack.c.l.b16 %v752
  %v802 = vunpack.c.l.b16 %v753
  %v803 = vunpack.c.l.b16 %v754
  %v804 = vunpack.c.l.b16 %v755
  %v805 = vunpack.c.l.b16 %v756
  %v806 = vunpack.c.l.b16 %v757
  %v807 = vunpack.c.l.b16 %v758
  %v808 = vunpack.c.l.b16 %v759
  %v809 = vunpack.c.l.b16 %v760
  %v810 = vunpack.c.l.b16 %v761
  %v811 = vunpack.c.l.b16 %v762
  %v812 = vpack.c.b16 %v797, %v796
  %v813 = vpack.c.b16 %v799, %v798
  %v814 = vpack.c.b16 %v801, %v800
  %v815 = vpack.c.b16 %v803, %v802
  %v816 = vpack.c.b16 %v805, %v804
  %v817 = vpack.c.b16 %v807, %v806
  %v818 = vpack.c.b16 %v809, %v808
  %v819 = vpack.c.b16 %v811, %v810
  %v844 = vunpack.c.l.b16 %v764
  %v845 = vunpack.c.l.b16 %v765
  %v846 = vunpack.c.l.b16 %v766
  %v847 = vunpack.c.l.b16 %v767
  %v848 = vunpack.c.l.b16 %v768
  %v849 = vunpack.c.l.b16 %v769
  %v850 = vunpack.c.l.b16 %v770
  %v851 = vunpack.c.l.b16 %v771
  %v852 = vunpack.c.l.b16 %v772
  %v853 = vunpack.c.l.b16 %v773
  %v854 = vunpack.c.l.b16 %v774
  %v855 = vunpack.c.l.b16 %v775
  %v856 = vunpack.c.l.b16 %v776
  %v857 = vunpack.c.l.b16 %v777
  %v858 = vunpack.c.l.b16 %v778
  %v859 = vunpack.c.l.b16 %v779
  %v860 = vpack.c.b16 %v845, %v844
  %v861 = vpack.c.b16 %v847, %v846
  %v862 = vpack.c.b16 %v849, %v848
  %v863 = vpack.c.b16 %v851, %v850
  %v864 = vpack.c.b16 %v853, %v852
  %v865 = vpack.c.b16 %v855, %v854
  %v866 = vpack.c.b16 %v857, %v856
  %v867 = vpack.c.b16 %v859, %v858
  %876 = vmatprep.subr.bf16.mxu0 0
  %877 = vmatpush1.bf16.msra.mxu0 %v867
  %878 = vmatprep.subr.bf16.mxu0 0
  %879 = vmatpush1.bf16.msra.mxu0 %v866
  %880 = vmatprep.subr.bf16.mxu0 0
  %881 = vmatpush1.bf16.msra.mxu0 %v865
  %882 = vmatprep.subr.bf16.mxu0 0
  %883 = vmatpush1.bf16.msra.mxu0 %v864
  %884 = vmatprep.subr.bf16.mxu0 0
  %885 = vmatpush1.bf16.msra.mxu0 %v863
  %886 = vmatprep.subr.bf16.mxu0 0
  %887 = vmatpush1.bf16.msra.mxu0 %v862
  %888 = vmatprep.subr.bf16.mxu0 0
  %889 = vmatpush1.bf16.msra.mxu0 %v861
  %890 = vmatprep.subr.bf16.mxu0 0
  %891 = vmatpush1.bf16.msra.mxu0 %v860
  %892 = vmatprep.subr.bf16.mxu0 0
  %893 = vmatpush2.bf16.msra.mxu0 0
  %894 = vmatprep.subr.bf16.mxu0 0
  %895 = vmatpush2.bf16.msra.mxu0 0
  %896 = vmatprep.subr.bf16.mxu0 0
  %897 = vmatpush2.bf16.msra.mxu0 0
  %898 = vmatprep.subr.bf16.mxu0 0
  %899 = vmatpush2.bf16.msra.mxu0 0
  %900 = vmatprep.subr.bf16.mxu0 0
  %901 = vmatpush2.bf16.msra.mxu0 0
  %902 = vmatprep.subr.bf16.mxu0 0
  %903 = vmatpush2.bf16.msra.mxu0 0
  %904 = vmatprep.subr.bf16.mxu0 0
  %905 = vmatpush2.bf16.msra.mxu0 0
  %906 = vmatprep.subr.bf16.mxu0 0
  %907 = vmatpush2.bf16.msra.mxu0 0
  %908 = vmatprep.mubr.bf16.mxu0 0
  %909 = vmatmul.mubr.bf16.gmra.mxu0 %v812
  %v910 = vpop.f32.mrf.mxu0
  %v911 = vadd.f32 0.0, %v910
  %v912 = vpop.f32.mrf.mxu0
  %v913 = vpop.f32.mrf.mxu0
  %v914 = vadd.f32 0.0, %v913
  %v915 = vpop.f32.mrf.mxu0
  %916 = vmatprep.mubr.bf16.mxu0 0
  %917 = vmatmul.mubr.bf16.gmra.mxu0 %v813
  %v918 = vpop.f32.mrf.mxu0
  %v919 = vadd.f32 0.0, %v918
  %v920 = vpop.f32.mrf.mxu0
  %v921 = vpop.f32.mrf.mxu0
  %v922 = vadd.f32 0.0, %v921
  %v923 = vpop.f32.mrf.mxu0
  %924 = vmatprep.mubr.bf16.mxu0 0
  %925 = vmatmul.mubr.bf16.gmra.mxu0 %v814
  %v926 = vpop.f32.mrf.mxu0
  %v927 = vadd.f32 0.0, %v926
  %v928 = vpop.f32.mrf.mxu0
  %v929 = vpop.f32.mrf.mxu0
  %v930 = vadd.f32 0.0, %v929
  %v931 = vpop.f32.mrf.mxu0
  %932 = vmatprep.mubr.bf16.mxu0 0
  %933 = vmatmul.mubr.bf16.gmra.mxu0 %v815
  %v934 = vpop.f32.mrf.mxu0
  %v935 = vadd.f32 0.0, %v934
  %v936 = vpop.f32.mrf.mxu0
  %v937 = vpop.f32.mrf.mxu0
  %v938 = vadd.f32 0.0, %v937
  %v939 = vpop.f32.mrf.mxu0
  %940 = vmatprep.mubr.bf16.mxu0 0
  %941 = vmatmul.mubr.bf16.gmra.mxu0 %v816
  %v942 = vpop.f32.mrf.mxu0
  %v943 = vadd.f32 0.0, %v942
  %v944 = vpop.f32.mrf.mxu0
  %v945 = vpop.f32.mrf.mxu0
  %v946 = vadd.f32 0.0, %v945
  %v947 = vpop.f32.mrf.mxu0
  %948 = vmatprep.mubr.bf16.mxu0 0
  %949 = vmatmul.mubr.bf16.gmra.mxu0 %v817
  %v950 = vpop.f32.mrf.mxu0
  %v951 = vadd.f32 0.0, %v950
  %v952 = vpop.f32.mrf.mxu0
  %v953 = vpop.f32.mrf.mxu0
  %v954 = vadd.f32 0.0, %v953
  %v955 = vpop.f32.mrf.mxu0
  %956 = vmatprep.mubr.bf16.mxu0 0
  %957 = vmatmul.mubr.bf16.gmra.mxu0 %v818
  %v958 = vpop.f32.mrf.mxu0
  %v959 = vadd.f32 0.0, %v958
  %v960 = vpop.f32.mrf.mxu0
  %v961 = vpop.f32.mrf.mxu0
  %v962 = vadd.f32 0.0, %v961
  %v963 = vpop.f32.mrf.mxu0
  %964 = vmatprep.mubr.bf16.mxu0 0
  %965 = vmatmul.mubr.bf16.gmra.mxu0 %v819
  %v966 = vpop.f32.mrf.mxu0
  %v967 = vadd.f32 0.0, %v966
  %v968 = vpop.f32.mrf.mxu0
  %v969 = vpop.f32.mrf.mxu0
  %v970 = vadd.f32 0.0, %v969
  %v971 = vpop.f32.mrf.mxu0
  %972 = vdwg.mxu0
  %v973 = vadd.f32 %v730, %v911
  %v974 = vadd.f32 %v731, %v914
  %v975 = vadd.f32 %v732, %v919
  %v976 = vadd.f32 %v733, %v922
  %v977 = vadd.f32 %v734, %v927
  %v978 = vadd.f32 %v735, %v930
  %v979 = vadd.f32 %v736, %v935
  %v980 = vadd.f32 %v737, %v938
  %v981 = vadd.f32 %v738, %v943
  %v982 = vadd.f32 %v739, %v946
  %v983 = vadd.f32 %v740, %v951
  %v984 = vadd.f32 %v741, %v954
  %v985 = vadd.f32 %v742, %v959
  %v986 = vadd.f32 %v743, %v962
  %v987 = vadd.f32 %v744, %v967
  %v988 = vadd.f32 %v745, %v970
  %v989 = vadd.f32 %v35, %v973
  %v990 = vadd.f32 %v36, %v974
  %v991 = vadd.f32 %v37, %v975
  %v992 = vadd.f32 %v38, %v976
  %v993 = vadd.f32 %v39, %v977
  %v994 = vadd.f32 %v40, %v978
  %v995 = vadd.f32 %v41, %v979
  %v996 = vadd.f32 %v42, %v980
  %v997 = vadd.f32 %v43, %v981
  %v998 = vadd.f32 %v44, %v982
  %v999 = vadd.f32 %v45, %v983
  %v1000 = vadd.f32 %v46, %v984
  %v1001 = vadd.f32 %v47, %v985
  %v1002 = vadd.f32 %v48, %v986
  %v1003 = vadd.f32 %v49, %v987
  %v1004 = vadd.f32 %v50, %v988
  %1005 = vst [vmem:[#allocation2] sm:$0xff] %v989
  %1006 = vst [vmem:[#allocation2 + $0x8] sm:$0xff] %v990
  %1007 = vst [vmem:[#allocation2 + $0x10] sm:$0xff] %v991
  %1008 = vst [vmem:[#allocation2 + $0x18] sm:$0xff] %v992
  %1009 = vst [vmem:[#allocation2 + $0x20] sm:$0xff] %v993
  %1010 = vst [vmem:[#allocation2 + $0x28] sm:$0xff] %v994
  %1011 = vst [vmem:[#allocation2 + $0x30] sm:$0xff] %v995
  %1012 = vst [vmem:[#allocation2 + $0x38] sm:$0xff] %v996
  %1013 = vst [vmem:[#allocation2 + $0x40] sm:$0xff] %v997
  %1014 = vst [vmem:[#allocation2 + $0x48] sm:$0xff] %v998
  %1015 = vst [vmem:[#allocation2 + $0x50] sm:$0xff] %v999
  %1016 = vst [vmem:[#allocation2 + $0x58] sm:$0xff] %v1000
  %1017 = vst [vmem:[#allocation2 + $0x60] sm:$0xff] %v1001
  %1018 = vst [vmem:[#allocation2 + $0x68] sm:$0xff] %v1002
  %1019 = vst [vmem:[#allocation2 + $0x70] sm:$0xff] %v1003
  %1020 = vst [vmem:[#allocation2 + $0x78] sm:$0xff] %v1004
  // Predicated region
  $region18: #{phenomnn_forward.9} parent=0 // pred_check
    %p1021 = pneg %p15
  $region19: #{phenomnn_forward.9} parent=0 // pred_check_branch
    %1023 = sbr.rel (%p1021) target = $region21
  $region20: #{phenomnn_forward.9} parent=0 // pred_region
    %v1024 = vld [vmem:[#allocation2] sm:$0xff]
    %v1025 = vld [vmem:[#allocation2 + $0x8] sm:$0xff]
    %v1026 = vld [vmem:[#allocation2 + $0x10] sm:$0xff]
    %v1027 = vld [vmem:[#allocation2 + $0x18] sm:$0xff]
    %v1028 = vld [vmem:[#allocation2 + $0x20] sm:$0xff]
    %v1029 = vld [vmem:[#allocation2 + $0x28] sm:$0xff]
    %v1030 = vld [vmem:[#allocation2 + $0x30] sm:$0xff]
    %v1031 = vld [vmem:[#allocation2 + $0x38] sm:$0xff]
    %v1032 = vld [vmem:[#allocation2 + $0x40] sm:$0xff]
    %v1033 = vld [vmem:[#allocation2 + $0x48] sm:$0xff]
    %v1034 = vld [vmem:[#allocation2 + $0x50] sm:$0xff]
    %v1035 = vld [vmem:[#allocation2 + $0x58] sm:$0xff]
    %v1036 = vld [vmem:[#allocation2 + $0x60] sm:$0xff]
    %v1037 = vld [vmem:[#allocation2 + $0x68] sm:$0xff]
    %v1038 = vld [vmem:[#allocation2 + $0x70] sm:$0xff]
    %v1039 = vld [vmem:[#allocation2 + $0x78] sm:$0xff]
    %v1040 = vld [vmem:[%s2] sm:$0xff]
    %v1041 = vld [vmem:[%s2 + $0x8] sm:$0xff]
    %v1042 = vld [vmem:[%s2 + $0x10] sm:$0xff]
    %v1043 = vld [vmem:[%s2 + $0x18] sm:$0xff]
    %v1044 = vld [vmem:[%s2 + $0x20] sm:$0xff]
    %v1045 = vld [vmem:[%s2 + $0x28] sm:$0xff]
    %v1046 = vld [vmem:[%s2 + $0x30] sm:$0xff]
    %v1047 = vld [vmem:[%s2 + $0x38] sm:$0xff]
    %v1048 = vld [vmem:[%s2 + $0x40] sm:$0xff]
    %v1049 = vld [vmem:[%s2 + $0x48] sm:$0xff]
    %v1050 = vld [vmem:[%s2 + $0x50] sm:$0xff]
    %v1051 = vld [vmem:[%s2 + $0x58] sm:$0xff]
    %v1052 = vld [vmem:[%s2 + $0x60] sm:$0xff]
    %v1053 = vld [vmem:[%s2 + $0x68] sm:$0xff]
    %v1054 = vld [vmem:[%s2 + $0x70] sm:$0xff]
    %v1055 = vld [vmem:[%s2 + $0x78] sm:$0xff]
    %v1056 = vadd.f32 %v1024, %v1040
    %v1057 = vadd.f32 %v1025, %v1041
    %v1058 = vadd.f32 %v1026, %v1042
    %v1059 = vadd.f32 %v1027, %v1043
    %v1060 = vadd.f32 %v1028, %v1044
    %v1061 = vadd.f32 %v1029, %v1045
    %v1062 = vadd.f32 %v1030, %v1046
    %v1063 = vadd.f32 %v1031, %v1047
    %v1064 = vadd.f32 %v1032, %v1048
    %v1065 = vadd.f32 %v1033, %v1049
    %v1066 = vadd.f32 %v1034, %v1050
    %v1067 = vadd.f32 %v1035, %v1051
    %v1068 = vadd.f32 %v1036, %v1052
    %v1069 = vadd.f32 %v1037, %v1053
    %v1070 = vadd.f32 %v1038, %v1054
    %v1071 = vadd.f32 %v1039, %v1055
    %v1072 = vpack.c.bf16 %v1057, %v1056
    %v1073 = vpack.c.bf16 %v1059, %v1058
    %v1074 = vpack.c.bf16 %v1061, %v1060
    %v1075 = vpack.c.bf16 %v1063, %v1062
    %v1076 = vpack.c.bf16 %v1065, %v1064
    %v1077 = vpack.c.bf16 %v1067, %v1066
    %v1078 = vpack.c.bf16 %v1069, %v1068
    %v1079 = vpack.c.bf16 %v1071, %v1070
    %v1088 = vunpack.c.l.b16 %v1072
    %v1089 = vunpack.c.h.b16 %v1072
    %v1090 = vunpack.c.l.b16 %v1073
    %v1091 = vunpack.c.h.b16 %v1073
    %v1092 = vunpack.c.l.b16 %v1074
    %v1093 = vunpack.c.h.b16 %v1074
    %v1094 = vunpack.c.l.b16 %v1075
    %v1095 = vunpack.c.h.b16 %v1075
    %v1096 = vunpack.c.l.b16 %v1076
    %v1097 = vunpack.c.h.b16 %v1076
    %v1098 = vunpack.c.l.b16 %v1077
    %v1099 = vunpack.c.h.b16 %v1077
    %v1100 = vunpack.c.l.b16 %v1078
    %v1101 = vunpack.c.h.b16 %v1078
    %v1102 = vunpack.c.l.b16 %v1079
    %v1103 = vunpack.c.h.b16 %v1079
    %v1104 = vpack.c.b16 %v1088, %v1088
    %v1105 = vpack.c.b16 %v1089, %v1089
    %v1106 = vpack.c.b16 %v1090, %v1090
    %v1107 = vpack.c.b16 %v1091, %v1091
    %v1108 = vpack.c.b16 %v1092, %v1092
    %v1109 = vpack.c.b16 %v1093, %v1093
    %v1110 = vpack.c.b16 %v1094, %v1094
    %v1111 = vpack.c.b16 %v1095, %v1095
    %v1112 = vpack.c.b16 %v1096, %v1096
    %v1113 = vpack.c.b16 %v1097, %v1097
    %v1114 = vpack.c.b16 %v1098, %v1098
    %v1115 = vpack.c.b16 %v1099, %v1099
    %v1116 = vpack.c.b16 %v1100, %v1100
    %v1117 = vpack.c.b16 %v1101, %v1101
    %v1118 = vpack.c.b16 %v1102, %v1102
    %v1119 = vpack.c.b16 %v1103, %v1103
    %1136 = vst [vmem:[%s3] sm:$0xf] %v1104
    %1137 = vst [vmem:[%s3 + $0x4] sm:$0xf] %v1105
    %1138 = vst [vmem:[%s3 + $0x8] sm:$0xf] %v1106
    %1139 = vst [vmem:[%s3 + $0xc] sm:$0xf] %v1107
    %1140 = vst [vmem:[%s3 + $0x10] sm:$0xf] %v1108
    %1141 = vst [vmem:[%s3 + $0x14] sm:$0xf] %v1109
    %1142 = vst [vmem:[%s3 + $0x18] sm:$0xf] %v1110
    %1143 = vst [vmem:[%s3 + $0x1c] sm:$0xf] %v1111
    %1144 = vst [vmem:[%s3 + $0x20] sm:$0xf] %v1112
    %1145 = vst [vmem:[%s3 + $0x24] sm:$0xf] %v1113
    %1146 = vst [vmem:[%s3 + $0x28] sm:$0xf] %v1114
    %1147 = vst [vmem:[%s3 + $0x2c] sm:$0xf] %v1115
    %1148 = vst [vmem:[%s3 + $0x30] sm:$0xf] %v1116
    %1149 = vst [vmem:[%s3 + $0x34] sm:$0xf] %v1117
    %1150 = vst [vmem:[%s3 + $0x38] sm:$0xf] %v1118
    %1151 = vst [vmem:[%s3 + $0x3c] sm:$0xf] %v1119
  $region21: #{phenomnn_forward.9} parent=0 // pred_fallthru
    _
  // Predicated region
  $region22: #{phenomnn_forward.9} parent=0 // pred_check
    _
  $region23: #{phenomnn_forward.9} parent=0 // pred_check_branch
    %1153 = sbr.rel (0) target = $region25
  $region24: #{phenomnn_forward.9} parent=0 // pred_region
    _
  $region25: #{phenomnn_forward.9} parent=0 // pred_fallthru
    _
  // Predicated region
  $region26: #{phenomnn_forward.9} parent=0 // pred_check
    _
  $region27: #{phenomnn_forward.9} parent=0 // pred_check_branch
    %1155 = sbr.rel (0) target = $region29
  $region28: #{phenomnn_forward.9} parent=0 // pred_region
    _
  $region29: #{phenomnn_forward.9} parent=0 // pred_fallthru
    _

// kernel: phenomnn_forward.10
$region0: #{phenomnn_forward.10}
  #allocation0 [shape = 'u32[]', space=smem, size = 0x4, offset = 0x4, fixed_abs, tag = 'smem constant byte address 0x4 - core index']
  #allocation1 [shape = 'u32[144,128]{1,0:T(1,128)}', space=vmem, size = 0x12000, scoped, tag = 'internal scratch']
  #allocation2 [shape = 'f32[128,128]{1,0:T(8,128)}', space=vmem, size = 0x10000, scoped, tag = 'scratch operand']
  %s0 = inlined_call_operand.vmem [shape: bf16[128,128], index: 0, kind: input, shape index: {}]
  %s1 = inlined_call_operand.vmem [shape: bf16[128,128], index: 1, kind: input, shape index: {}]
  %s2 = inlined_call_operand.vmem [shape: f32[128,128], index: 2, kind: input, shape index: {}]
  %s3 = inlined_call_operand.vmem [shape: bf16[4,128,128], index: 3, kind: input, shape index: {}]
  %s4 = inlined_call_operand.vmem [shape: f32[128,128], index: 4, kind: output, shape index: {0}]
  %s5 = inlined_call_operand.vmem [shape: bf16[4,128,128], index: 5, kind: output, shape index: {1}]
  %6 = xla_tuple %s4, %s5
  %s7 = sld [smem:[#allocation0]]
  $region42: #{phenomnn_forward.10} parent=0
    _
  %s9 = ssub.s32 1, %s7
  %s10 = scalar_select 0, %s9, %s7
  // Predicated region
  $region2: #{phenomnn_forward.10} parent=0 // pred_check
    _
  $region3: #{phenomnn_forward.10} parent=0 // pred_check_branch
    %12 = sbr.rel (0) target = $region5
  $region4: #{phenomnn_forward.10} parent=0 // pred_region
    _
  $region5: #{phenomnn_forward.10} parent=0 // pred_fallthru
    _
  // Predicated region
  $region6: #{phenomnn_forward.10} parent=0 // pred_check
    _
  $region7: #{phenomnn_forward.10} parent=0 // pred_check_branch
    %14 = sbr.rel (0) target = $region9
  $region8: #{phenomnn_forward.10} parent=0 // pred_region
    _
  $region9: #{phenomnn_forward.10} parent=0 // pred_fallthru
    _
  // Predicated region
  $region10: #{phenomnn_forward.10} parent=0 // pred_check
    _
  $region11: #{phenomnn_forward.10} parent=0 // pred_check_branch
    %16 = sbr.rel (0) target = $region13
  $region12: #{phenomnn_forward.10} parent=0 // pred_region
    _
  $region13: #{phenomnn_forward.10} parent=0 // pred_fallthru
    _
  // Predicated region
  $region14: #{phenomnn_forward.10} parent=0 // pred_check
    _
  $region15: #{phenomnn_forward.10} parent=0 // pred_check_branch
    %18 = sbr.rel (0) target = $region17
  $region16: #{phenomnn_forward.10} parent=0 // pred_region
    _
  $region17: #{phenomnn_forward.10} parent=0 // pred_fallthru
    _
  %p20 = scmp.eq.s32.totalorder 0, 0
  // Predicated region
  $region18: #{phenomnn_forward.10} parent=0 // pred_check
    %p21 = pneg %p20
  $region19: #{phenomnn_forward.10} parent=0 // pred_check_branch
    %23 = sbr.rel (%p21) target = $region21
  $region20: #{phenomnn_forward.10} parent=0 // pred_region
    %24 = vst [vmem:[#allocation2] sm:$0xff] 0.0
    %25 = vst [vmem:[#allocation2 + $0x8] sm:$0xff] 0.0
    %26 = vst [vmem:[#allocation2 + $0x10] sm:$0xff] 0.0
    %27 = vst [vmem:[#allocation2 + $0x18] sm:$0xff] 0.0
    %28 = vst [vmem:[#allocation2 + $0x20] sm:$0xff] 0.0
    %29 = vst [vmem:[#allocation2 + $0x28] sm:$0xff] 0.0
    %30 = vst [vmem:[#allocation2 + $0x30] sm:$0xff] 0.0
    %31 = vst [vmem:[#allocation2 + $0x38] sm:$0xff] 0.0
    %32 = vst [vmem:[#allocation2 + $0x40] sm:$0xff] 0.0
    %33 = vst [vmem:[#allocation2 + $0x48] sm:$0xff] 0.0
    %34 = vst [vmem:[#allocation2 + $0x50] sm:$0xff] 0.0
    %35 = vst [vmem:[#allocation2 + $0x58] sm:$0xff] 0.0
    %36 = vst [vmem:[#allocation2 + $0x60] sm:$0xff] 0.0
    %37 = vst [vmem:[#allocation2 + $0x68] sm:$0xff] 0.0
    %38 = vst [vmem:[#allocation2 + $0x70] sm:$0xff] 0.0
    %39 = vst [vmem:[#allocation2 + $0x78] sm:$0xff] 0.0
  $region21: #{phenomnn_forward.10} parent=0 // pred_fallthru
    _
  %v40 = vld [vmem:[#allocation2] sm:$0xff]
  %v41 = vld [vmem:[#allocation2 + $0x8] sm:$0xff]
  %v42 = vld [vmem:[#allocation2 + $0x10] sm:$0xff]
  %v43 = vld [vmem:[#allocation2 + $0x18] sm:$0xff]
  %v44 = vld [vmem:[#allocation2 + $0x20] sm:$0xff]
  %v45 = vld [vmem:[#allocation2 + $0x28] sm:$0xff]
  %v46 = vld [vmem:[#allocation2 + $0x30] sm:$0xff]
  %v47 = vld [vmem:[#allocation2 + $0x38] sm:$0xff]
  %v48 = vld [vmem:[#allocation2 + $0x40] sm:$0xff]
  %v49 = vld [vmem:[#allocation2 + $0x48] sm:$0xff]
  %v50 = vld [vmem:[#allocation2 + $0x50] sm:$0xff]
  %v51 = vld [vmem:[#allocation2 + $0x58] sm:$0xff]
  %v52 = vld [vmem:[#allocation2 + $0x60] sm:$0xff]
  %v53 = vld [vmem:[#allocation2 + $0x68] sm:$0xff]
  %v54 = vld [vmem:[#allocation2 + $0x70] sm:$0xff]
  %v55 = vld [vmem:[#allocation2 + $0x78] sm:$0xff]
  %v56 = vld [vmem:[%s0] sm:$0xf]
  %v57 = vld [vmem:[%s0 + $0x4] sm:$0xf]
  %v58 = vld [vmem:[%s0 + $0x8] sm:$0xf]
  %v59 = vld [vmem:[%s0 + $0xc] sm:$0xf]
  %v60 = vld [vmem:[%s0 + $0x10] sm:$0xf]
  %v61 = vld [vmem:[%s0 + $0x14] sm:$0xf]
  %v62 = vld [vmem:[%s0 + $0x18] sm:$0xf]
  %v63 = vld [vmem:[%s0 + $0x1c] sm:$0xf]
  %v64 = vld [vmem:[%s0 + $0x20] sm:$0xf]
  %v65 = vld [vmem:[%s0 + $0x24] sm:$0xf]
  %v66 = vld [vmem:[%s0 + $0x28] sm:$0xf]
  %v67 = vld [vmem:[%s0 + $0x2c] sm:$0xf]
  %v68 = vld [vmem:[%s0 + $0x30] sm:$0xf]
  %v69 = vld [vmem:[%s0 + $0x34] sm:$0xf]
  %v70 = vld [vmem:[%s0 + $0x38] sm:$0xf]
  %v71 = vld [vmem:[%s0 + $0x3c] sm:$0xf]
  %v72 = vld [vmem:[%s1] sm:$0xf]
  %v73 = vld [vmem:[%s1 + $0x4] sm:$0xf]
  %v74 = vld [vmem:[%s1 + $0x8] sm:$0xf]
  %v75 = vld [vmem:[%s1 + $0xc] sm:$0xf]
  %v76 = vld [vmem:[%s1 + $0x10] sm:$0xf]
  %v77 = vld [vmem:[%s1 + $0x14] sm:$0xf]
  %v78 = vld [vmem:[%s1 + $0x18] sm:$0xf]
  %v79 = vld [vmem:[%s1 + $0x1c] sm:$0xf]
  %v80 = vld [vmem:[%s1 + $0x20] sm:$0xf]
  %v81 = vld [vmem:[%s1 + $0x24] sm:$0xf]
  %v82 = vld [vmem:[%s1 + $0x28] sm:$0xf]
  %v83 = vld [vmem:[%s1 + $0x2c] sm:$0xf]
  %v84 = vld [vmem:[%s1 + $0x30] sm:$0xf]
  %v85 = vld [vmem:[%s1 + $0x34] sm:$0xf]
  %v86 = vld [vmem:[%s1 + $0x38] sm:$0xf]
  %v87 = vld [vmem:[%s1 + $0x3c] sm:$0xf]
  %v104 = vunpack.c.l.b16 %v56
  %v105 = vunpack.c.l.b16 %v57
  %v106 = vunpack.c.l.b16 %v58
  %v107 = vunpack.c.l.b16 %v59
  %v108 = vunpack.c.l.b16 %v60
  %v109 = vunpack.c.l.b16 %v61
  %v110 = vunpack.c.l.b16 %v62
  %v111 = vunpack.c.l.b16 %v63
  %v112 = vunpack.c.l.b16 %v64
  %v113 = vunpack.c.l.b16 %v65
  %v114 = vunpack.c.l.b16 %v66
  %v115 = vunpack.c.l.b16 %v67
  %v116 = vunpack.c.l.b16 %v68
  %v117 = vunpack.c.l.b16 %v69
  %v118 = vunpack.c.l.b16 %v70
  %v119 = vunpack.c.l.b16 %v71
  %v120 = vpack.c.b16 %v105, %v104
  %v121 = vpack.c.b16 %v107, %v106
  %v122 = vpack.c.b16 %v109, %v108
  %v123 = vpack.c.b16 %v111, %v110
  %v124 = vpack.c.b16 %v113, %v112
  %v125 = vpack.c.b16 %v115, %v114
  %v126 = vpack.c.b16 %v117, %v116
  %v127 = vpack.c.b16 %v119, %v118
  %v152 = vunpack.c.l.b16 %v72
  %v153 = vunpack.c.l.b16 %v73
  %v154 = vunpack.c.l.b16 %v74
  %v155 = vunpack.c.l.b16 %v75
  %v156 = vunpack.c.l.b16 %v76
  %v157 = vunpack.c.l.b16 %v77
  %v158 = vunpack.c.l.b16 %v78
  %v159 = vunpack.c.l.b16 %v79
  %v160 = vunpack.c.l.b16 %v80
  %v161 = vunpack.c.l.b16 %v81
  %v162 = vunpack.c.l.b16 %v82
  %v163 = vunpack.c.l.b16 %v83
  %v164 = vunpack.c.l.b16 %v84
  %v165 = vunpack.c.l.b16 %v85
  %v166 = vunpack.c.l.b16 %v86
  %v167 = vunpack.c.l.b16 %v87
  %v168 = vpack.c.b16 %v153, %v152
  %v169 = vpack.c.b16 %v155, %v154
  %v170 = vpack.c.b16 %v157, %v156
  %v171 = vpack.c.b16 %v159, %v158
  %v172 = vpack.c.b16 %v161, %v160
  %v173 = vpack.c.b16 %v163, %v162
  %v174 = vpack.c.b16 %v165, %v164
  %v175 = vpack.c.b16 %v167, %v166
  %184 = vmatprep.subr.bf16.mxu0 0
  %185 = vmatpush1.bf16.msra.mxu0 %v175
  %186 = vmatprep.subr.bf16.mxu0 0
  %187 = vmatpush1.bf16.msra.mxu0 %v174
  %188 = vmatprep.subr.bf16.mxu0 0
  %189 = vmatpush1.bf16.msra.mxu0 %v173
  %190 = vmatprep.subr.bf16.mxu0 0
  %191 = vmatpush1.bf16.msra.mxu0 %v172
  %192 = vmatprep.subr.bf16.mxu0 0
  %193 = vmatpush1.bf16.msra.mxu0 %v171
  %194 = vmatprep.subr.bf16.mxu0 0
  %195 = vmatpush1.bf16.msra.mxu0 %v170
  %196 = vmatprep.subr.bf16.mxu0 0
  %197 = vmatpush1.bf16.msra.mxu0 %v169
  %198 = vmatprep.subr.bf16.mxu0 0
  %199 = vmatpush1.bf16.msra.mxu0 %v168
  %200 = vmatprep.subr.bf16.mxu0 0
  %201 = vmatpush2.bf16.msra.mxu0 0
  %202 = vmatprep.subr.bf16.mxu0 0
  %203 = vmatpush2.bf16.msra.mxu0 0
  %204 = vmatprep.subr.bf16.mxu0 0
  %205 = vmatpush2.bf16.msra.mxu0 0
  %206 = vmatprep.subr.bf16.mxu0 0
  %207 = vmatpush2.bf16.msra.mxu0 0
  %208 = vmatprep.subr.bf16.mxu0 0
  %209 = vmatpush2.bf16.msra.mxu0 0
  %210 = vmatprep.subr.bf16.mxu0 0
  %211 = vmatpush2.bf16.msra.mxu0 0
  %212 = vmatprep.subr.bf16.mxu0 0
  %213 = vmatpush2.bf16.msra.mxu0 0
  %214 = vmatprep.subr.bf16.mxu0 0
  %215 = vmatpush2.bf16.msra.mxu0 0
  %216 = vmatprep.mubr.bf16.mxu0 0
  %217 = vmatmul.mubr.bf16.gmra.mxu0 %v120
  %v218 = vpop.f32.mrf.mxu0
  %v219 = vadd.f32 0.0, %v218
  %v220 = vpop.f32.mrf.mxu0
  %v221 = vpop.f32.mrf.mxu0
  %v222 = vadd.f32 0.0, %v221
  %v223 = vpop.f32.mrf.mxu0
  %224 = vmatprep.mubr.bf16.mxu0 0
  %225 = vmatmul.mubr.bf16.gmra.mxu0 %v121
  %v226 = vpop.f32.mrf.mxu0
  %v227 = vadd.f32 0.0, %v226
  %v228 = vpop.f32.mrf.mxu0
  %v229 = vpop.f32.mrf.mxu0
  %v230 = vadd.f32 0.0, %v229
  %v231 = vpop.f32.mrf.mxu0
  %232 = vmatprep.mubr.bf16.mxu0 0
  %233 = vmatmul.mubr.bf16.gmra.mxu0 %v122
  %v234 = vpop.f32.mrf.mxu0
  %v235 = vadd.f32 0.0, %v234
  %v236 = vpop.f32.mrf.mxu0
  %v237 = vpop.f32.mrf.mxu0
  %v238 = vadd.f32 0.0, %v237
  %v239 = vpop.f32.mrf.mxu0
  %240 = vmatprep.mubr.bf16.mxu0 0
  %241 = vmatmul.mubr.bf16.gmra.mxu0 %v123
  %v242 = vpop.f32.mrf.mxu0
  %v243 = vadd.f32 0.0, %v242
  %v244 = vpop.f32.mrf.mxu0
  %v245 = vpop.f32.mrf.mxu0
  %v246 = vadd.f32 0.0, %v245
  %v247 = vpop.f32.mrf.mxu0
  %248 = vmatprep.mubr.bf16.mxu0 0
  %249 = vmatmul.mubr.bf16.gmra.mxu0 %v124
  %v250 = vpop.f32.mrf.mxu0
  %v251 = vadd.f32 0.0, %v250
  %v252 = vpop.f32.mrf.mxu0
  %v253 = vpop.f32.mrf.mxu0
  %v254 = vadd.f32 0.0, %v253
  %v255 = vpop.f32.mrf.mxu0
  %256 = vmatprep.mubr.bf16.mxu0 0
  %257 = vmatmul.mubr.bf16.gmra.mxu0 %v125
  %v258 = vpop.f32.mrf.mxu0
  %v259 = vadd.f32 0.0, %v258
  %v260 = vpop.f32.mrf.mxu0
  %v261 = vpop.f32.mrf.mxu0
  %v262 = vadd.f32 0.0, %v261
  %v263 = vpop.f32.mrf.mxu0
  %264 = vmatprep.mubr.bf16.mxu0 0
  %265 = vmatmul.mubr.bf16.gmra.mxu0 %v126
  %v266 = vpop.f32.mrf.mxu0
  %v267 = vadd.f32 0.0, %v266
  %v268 = vpop.f32.mrf.mxu0
  %v269 = vpop.f32.mrf.mxu0
  %v270 = vadd.f32 0.0, %v269
  %v271 = vpop.f32.mrf.mxu0
  %272 = vmatprep.mubr.bf16.mxu0 0
  %273 = vmatmul.mubr.bf16.gmra.mxu0 %v127
  %v274 = vpop.f32.mrf.mxu0
  %v275 = vadd.f32 0.0, %v274
  %v276 = vpop.f32.mrf.mxu0
  %v277 = vpop.f32.mrf.mxu0
  %v278 = vadd.f32 0.0, %v277
  %v279 = vpop.f32.mrf.mxu0
  %280 = vdwg.mxu0
  %v281 = vadd.f32 %v40, %v219
  %v282 = vadd.f32 %v41, %v222
  %v283 = vadd.f32 %v42, %v227
  %v284 = vadd.f32 %v43, %v230
  %v285 = vadd.f32 %v44, %v235
  %v286 = vadd.f32 %v45, %v238
  %v287 = vadd.f32 %v46, %v243
  %v288 = vadd.f32 %v47, %v246
  %v289 = vadd.f32 %v48, %v251
  %v290 = vadd.f32 %v49, %v254
  %v291 = vadd.f32 %v50, %v259
  %v292 = vadd.f32 %v51, %v262
  %v293 = vadd.f32 %v52, %v267
  %v294 = vadd.f32 %v53, %v270
  %v295 = vadd.f32 %v54, %v275
  %v296 = vadd.f32 %v55, %v278
  %297 = vst [vmem:[#allocation2] sm:$0xff] %v281
  %298 = vst [vmem:[#allocation2 + $0x8] sm:$0xff] %v282
  %299 = vst [vmem:[#allocation2 + $0x10] sm:$0xff] %v283
  %300 = vst [vmem:[#allocation2 + $0x18] sm:$0xff] %v284
  %301 = vst [vmem:[#allocation2 + $0x20] sm:$0xff] %v285
  %302 = vst [vmem:[#allocation2 + $0x28] sm:$0xff] %v286
  %303 = vst [vmem:[#allocation2 + $0x30] sm:$0xff] %v287
  %304 = vst [vmem:[#allocation2 + $0x38] sm:$0xff] %v288
  %305 = vst [vmem:[#allocation2 + $0x40] sm:$0xff] %v289
  %306 = vst [vmem:[#allocation2 + $0x48] sm:$0xff] %v290
  %307 = vst [vmem:[#allocation2 + $0x50] sm:$0xff] %v291
  %308 = vst [vmem:[#allocation2 + $0x58] sm:$0xff] %v292
  %309 = vst [vmem:[#allocation2 + $0x60] sm:$0xff] %v293
  %310 = vst [vmem:[#allocation2 + $0x68] sm:$0xff] %v294
  %311 = vst [vmem:[#allocation2 + $0x70] sm:$0xff] %v295
  %312 = vst [vmem:[#allocation2 + $0x78] sm:$0xff] %v296
  // Predicated region
  $region22: #{phenomnn_forward.10} parent=0 // pred_check
    %p313 = pneg %p20
  $region23: #{phenomnn_forward.10} parent=0 // pred_check_branch
    %315 = sbr.rel (%p313) target = $region25
  $region24: #{phenomnn_forward.10} parent=0 // pred_region
    %v316 = vld [vmem:[%s2] sm:$0xff]
    %v317 = vld [vmem:[%s2 + $0x8] sm:$0xff]
    %v318 = vld [vmem:[%s2 + $0x10] sm:$0xff]
    %v319 = vld [vmem:[%s2 + $0x18] sm:$0xff]
    %v320 = vld [vmem:[%s2 + $0x20] sm:$0xff]
    %v321 = vld [vmem:[%s2 + $0x28] sm:$0xff]
    %v322 = vld [vmem:[%s2 + $0x30] sm:$0xff]
    %v323 = vld [vmem:[%s2 + $0x38] sm:$0xff]
    %v324 = vld [vmem:[%s2 + $0x40] sm:$0xff]
    %v325 = vld [vmem:[%s2 + $0x48] sm:$0xff]
    %v326 = vld [vmem:[%s2 + $0x50] sm:$0xff]
    %v327 = vld [vmem:[%s2 + $0x58] sm:$0xff]
    %v328 = vld [vmem:[%s2 + $0x60] sm:$0xff]
    %v329 = vld [vmem:[%s2 + $0x68] sm:$0xff]
    %v330 = vld [vmem:[%s2 + $0x70] sm:$0xff]
    %v331 = vld [vmem:[%s2 + $0x78] sm:$0xff]
    %v332 = vmul.f32 %v316, 0.6666667
    %v333 = vmul.f32 %v317, 0.6666667
    %v334 = vmul.f32 %v318, 0.6666667
    %v335 = vmul.f32 %v319, 0.6666667
    %v336 = vmul.f32 %v320, 0.6666667
    %v337 = vmul.f32 %v321, 0.6666667
    %v338 = vmul.f32 %v322, 0.6666667
    %v339 = vmul.f32 %v323, 0.6666667
    %v340 = vmul.f32 %v324, 0.6666667
    %v341 = vmul.f32 %v325, 0.6666667
    %v342 = vmul.f32 %v326, 0.6666667
    %v343 = vmul.f32 %v327, 0.6666667
    %v344 = vmul.f32 %v328, 0.6666667
    %v345 = vmul.f32 %v329, 0.6666667
    %v346 = vmul.f32 %v330, 0.6666667
    %v347 = vmul.f32 %v331, 0.6666667
    %v348 = vld [vmem:[#allocation2] sm:$0xff]
    %v349 = vld [vmem:[#allocation2 + $0x8] sm:$0xff]
    %v350 = vld [vmem:[#allocation2 + $0x10] sm:$0xff]
    %v351 = vld [vmem:[#allocation2 + $0x18] sm:$0xff]
    %v352 = vld [vmem:[#allocation2 + $0x20] sm:$0xff]
    %v353 = vld [vmem:[#allocation2 + $0x28] sm:$0xff]
    %v354 = vld [vmem:[#allocation2 + $0x30] sm:$0xff]
    %v355 = vld [vmem:[#allocation2 + $0x38] sm:$0xff]
    %v356 = vld [vmem:[#allocation2 + $0x40] sm:$0xff]
    %v357 = vld [vmem:[#allocation2 + $0x48] sm:$0xff]
    %v358 = vld [vmem:[#allocation2 + $0x50] sm:$0xff]
    %v359 = vld [vmem:[#allocation2 + $0x58] sm:$0xff]
    %v360 = vld [vmem:[#allocation2 + $0x60] sm:$0xff]
    %v361 = vld [vmem:[#allocation2 + $0x68] sm:$0xff]
    %v362 = vld [vmem:[#allocation2 + $0x70] sm:$0xff]
    %v363 = vld [vmem:[#allocation2 + $0x78] sm:$0xff]
    %v364 = vadd.f32 %v332, %v348
    %v365 = vadd.f32 %v333, %v349
    %v366 = vadd.f32 %v334, %v350
    %v367 = vadd.f32 %v335, %v351
    %v368 = vadd.f32 %v336, %v352
    %v369 = vadd.f32 %v337, %v353
    %v370 = vadd.f32 %v338, %v354
    %v371 = vadd.f32 %v339, %v355
    %v372 = vadd.f32 %v340, %v356
    %v373 = vadd.f32 %v341, %v357
    %v374 = vadd.f32 %v342, %v358
    %v375 = vadd.f32 %v343, %v359
    %v376 = vadd.f32 %v344, %v360
    %v377 = vadd.f32 %v345, %v361
    %v378 = vadd.f32 %v346, %v362
    %v379 = vadd.f32 %v347, %v363
    %380 = vst [vmem:[%s4] sm:$0xff] %v364
    %381 = vst [vmem:[%s4 + $0x8] sm:$0xff] %v365
    %382 = vst [vmem:[%s4 + $0x10] sm:$0xff] %v366
    %383 = vst [vmem:[%s4 + $0x18] sm:$0xff] %v367
    %384 = vst [vmem:[%s4 + $0x20] sm:$0xff] %v368
    %385 = vst [vmem:[%s4 + $0x28] sm:$0xff] %v369
    %386 = vst [vmem:[%s4 + $0x30] sm:$0xff] %v370
    %387 = vst [vmem:[%s4 + $0x38] sm:$0xff] %v371
    %388 = vst [vmem:[%s4 + $0x40] sm:$0xff] %v372
    %389 = vst [vmem:[%s4 + $0x48] sm:$0xff] %v373
    %390 = vst [vmem:[%s4 + $0x50] sm:$0xff] %v374
    %391 = vst [vmem:[%s4 + $0x58] sm:$0xff] %v375
    %392 = vst [vmem:[%s4 + $0x60] sm:$0xff] %v376
    %393 = vst [vmem:[%s4 + $0x68] sm:$0xff] %v377
    %394 = vst [vmem:[%s4 + $0x70] sm:$0xff] %v378
    %395 = vst [vmem:[%s4 + $0x78] sm:$0xff] %v379
    %v396 = vpack.c.bf16 %v365, %v364
    %v397 = vpack.c.bf16 %v367, %v366
    %v398 = vpack.c.bf16 %v369, %v368
    %v399 = vpack.c.bf16 %v371, %v370
    %v400 = vpack.c.bf16 %v373, %v372
    %v401 = vpack.c.bf16 %v375, %v374
    %v402 = vpack.c.bf16 %v377, %v376
    %v403 = vpack.c.bf16 %v379, %v378
    %v404 = vld [vmem:[%s3] sm:$0xf]
    %v405 = vld [vmem:[%s3 + $0x4] sm:$0xf]
    %v406 = vld [vmem:[%s3 + $0x8] sm:$0xf]
    %v407 = vld [vmem:[%s3 + $0xc] sm:$0xf]
    %v408 = vld [vmem:[%s3 + $0x10] sm:$0xf]
    %v409 = vld [vmem:[%s3 + $0x14] sm:$0xf]
    %v410 = vld [vmem:[%s3 + $0x18] sm:$0xf]
    %v411 = vld [vmem:[%s3 + $0x1c] sm:$0xf]
    %v412 = vld [vmem:[%s3 + $0x20] sm:$0xf]
    %v413 = vld [vmem:[%s3 + $0x24] sm:$0xf]
    %v414 = vld [vmem:[%s3 + $0x28] sm:$0xf]
    %v415 = vld [vmem:[%s3 + $0x2c] sm:$0xf]
    %v416 = vld [vmem:[%s3 + $0x30] sm:$0xf]
    %v417 = vld [vmem:[%s3 + $0x34] sm:$0xf]
    %v418 = vld [vmem:[%s3 + $0x38] sm:$0xf]
    %v419 = vld [vmem:[%s3 + $0x3c] sm:$0xf]
    %v436 = vunpack.c.l.b16 %v404
    %v437 = vunpack.c.l.b16 %v405
    %v438 = vunpack.c.l.b16 %v406
    %v439 = vunpack.c.l.b16 %v407
    %v440 = vunpack.c.l.b16 %v408
    %v441 = vunpack.c.l.b16 %v409
    %v442 = vunpack.c.l.b16 %v410
    %v443 = vunpack.c.l.b16 %v411
    %v444 = vunpack.c.l.b16 %v412
    %v445 = vunpack.c.l.b16 %v413
    %v446 = vunpack.c.l.b16 %v414
    %v447 = vunpack.c.l.b16 %v415
    %v448 = vunpack.c.l.b16 %v416
    %v449 = vunpack.c.l.b16 %v417
    %v450 = vunpack.c.l.b16 %v418
    %v451 = vunpack.c.l.b16 %v419
    %v452 = vpack.c.b16 %v437, %v436
    %v453 = vpack.c.b16 %v439, %v438
    %v454 = vpack.c.b16 %v441, %v440
    %v455 = vpack.c.b16 %v443, %v442
    %v456 = vpack.c.b16 %v445, %v444
    %v457 = vpack.c.b16 %v447, %v446
    %v458 = vpack.c.b16 %v449, %v448
    %v459 = vpack.c.b16 %v451, %v450
    %468 = vmatprep.subr.bf16.mxu0 0
    %469 = vmatpush1.bf16.msra.mxu0 %v459
    %470 = vmatprep.subr.bf16.mxu0 0
    %471 = vmatpush1.bf16.msra.mxu0 %v458
    %472 = vmatprep.subr.bf16.mxu0 0
    %473 = vmatpush1.bf16.msra.mxu0 %v457
    %474 = vmatprep.subr.bf16.mxu0 0
    %475 = vmatpush1.bf16.msra.mxu0 %v456
    %476 = vmatprep.subr.bf16.mxu0 0
    %477 = vmatpush1.bf16.msra.mxu0 %v455
    %478 = vmatprep.subr.bf16.mxu0 0
    %479 = vmatpush1.bf16.msra.mxu0 %v454
    %480 = vmatprep.subr.bf16.mxu0 0
    %481 = vmatpush1.bf16.msra.mxu0 %v453
    %482 = vmatprep.subr.bf16.mxu0 0
    %483 = vmatpush1.bf16.msra.mxu0 %v452
    %484 = vmatprep.subr.bf16.mxu0 0
    %485 = vmatpush2.bf16.msra.mxu0 0
    %486 = vmatprep.subr.bf16.mxu0 0
    %487 = vmatpush2.bf16.msra.mxu0 0
    %488 = vmatprep.subr.bf16.mxu0 0
    %489 = vmatpush2.bf16.msra.mxu0 0
    %490 = vmatprep.subr.bf16.mxu0 0
    %491 = vmatpush2.bf16.msra.mxu0 0
    %492 = vmatprep.subr.bf16.mxu0 0
    %493 = vmatpush2.bf16.msra.mxu0 0
    %494 = vmatprep.subr.bf16.mxu0 0
    %495 = vmatpush2.bf16.msra.mxu0 0
    %496 = vmatprep.subr.bf16.mxu0 0
    %497 = vmatpush2.bf16.msra.mxu0 0
    %498 = vmatprep.subr.bf16.mxu0 0
    %499 = vmatpush2.bf16.msra.mxu0 0
    %500 = vmatprep.mubr.bf16.mxu0 0
    %501 = vmatmul.mubr.bf16.gmra.mxu0 %v396
    %v502 = vpop.f32.mrf.mxu0
    %v503 = vadd.f32 0.0, %v502
    %v504 = vpop.f32.mrf.mxu0
    %v505 = vpop.f32.mrf.mxu0
    %v506 = vadd.f32 0.0, %v505
    %v507 = vpop.f32.mrf.mxu0
    %508 = vmatprep.mubr.bf16.mxu0 0
    %509 = vmatmul.mubr.bf16.gmra.mxu0 %v397
    %v510 = vpop.f32.mrf.mxu0
    %v511 = vadd.f32 0.0, %v510
    %v512 = vpop.f32.mrf.mxu0
    %v513 = vpop.f32.mrf.mxu0
    %v514 = vadd.f32 0.0, %v513
    %v515 = vpop.f32.mrf.mxu0
    %516 = vmatprep.mubr.bf16.mxu0 0
    %517 = vmatmul.mubr.bf16.gmra.mxu0 %v398
    %v518 = vpop.f32.mrf.mxu0
    %v519 = vadd.f32 0.0, %v518
    %v520 = vpop.f32.mrf.mxu0
    %v521 = vpop.f32.mrf.mxu0
    %v522 = vadd.f32 0.0, %v521
    %v523 = vpop.f32.mrf.mxu0
    %524 = vmatprep.mubr.bf16.mxu0 0
    %525 = vmatmul.mubr.bf16.gmra.mxu0 %v399
    %v526 = vpop.f32.mrf.mxu0
    %v527 = vadd.f32 0.0, %v526
    %v528 = vpop.f32.mrf.mxu0
    %v529 = vpop.f32.mrf.mxu0
    %v530 = vadd.f32 0.0, %v529
    %v531 = vpop.f32.mrf.mxu0
    %532 = vmatprep.mubr.bf16.mxu0 0
    %533 = vmatmul.mubr.bf16.gmra.mxu0 %v400
    %v534 = vpop.f32.mrf.mxu0
    %v535 = vadd.f32 0.0, %v534
    %v536 = vpop.f32.mrf.mxu0
    %v537 = vpop.f32.mrf.mxu0
    %v538 = vadd.f32 0.0, %v537
    %v539 = vpop.f32.mrf.mxu0
    %540 = vmatprep.mubr.bf16.mxu0 0
    %541 = vmatmul.mubr.bf16.gmra.mxu0 %v401
    %v542 = vpop.f32.mrf.mxu0
    %v543 = vadd.f32 0.0, %v542
    %v544 = vpop.f32.mrf.mxu0
    %v545 = vpop.f32.mrf.mxu0
    %v546 = vadd.f32 0.0, %v545
    %v547 = vpop.f32.mrf.mxu0
    %548 = vmatprep.mubr.bf16.mxu0 0
    %549 = vmatmul.mubr.bf16.gmra.mxu0 %v402
    %v550 = vpop.f32.mrf.mxu0
    %v551 = vadd.f32 0.0, %v550
    %v552 = vpop.f32.mrf.mxu0
    %v553 = vpop.f32.mrf.mxu0
    %v554 = vadd.f32 0.0, %v553
    %v555 = vpop.f32.mrf.mxu0
    %556 = vmatprep.mubr.bf16.mxu0 0
    %557 = vmatmul.mubr.bf16.gmra.mxu0 %v403
    %v558 = vpop.f32.mrf.mxu0
    %v559 = vadd.f32 0.0, %v558
    %v560 = vpop.f32.mrf.mxu0
    %v561 = vpop.f32.mrf.mxu0
    %v562 = vadd.f32 0.0, %v561
    %v563 = vpop.f32.mrf.mxu0
    %564 = vdwg.mxu0
    %v565 = vpack.c.bf16 %v506, %v503
    %v566 = vpack.c.bf16 %v514, %v511
    %v567 = vpack.c.bf16 %v522, %v519
    %v568 = vpack.c.bf16 %v530, %v527
    %v569 = vpack.c.bf16 %v538, %v535
    %v570 = vpack.c.bf16 %v546, %v543
    %v571 = vpack.c.bf16 %v554, %v551
    %v572 = vpack.c.bf16 %v562, %v559
    %v581 = vunpack.c.l.b16 %v565
    %v582 = vunpack.c.h.b16 %v565
    %v583 = vunpack.c.l.b16 %v566
    %v584 = vunpack.c.h.b16 %v566
    %v585 = vunpack.c.l.b16 %v567
    %v586 = vunpack.c.h.b16 %v567
    %v587 = vunpack.c.l.b16 %v568
    %v588 = vunpack.c.h.b16 %v568
    %v589 = vunpack.c.l.b16 %v569
    %v590 = vunpack.c.h.b16 %v569
    %v591 = vunpack.c.l.b16 %v570
    %v592 = vunpack.c.h.b16 %v570
    %v593 = vunpack.c.l.b16 %v571
    %v594 = vunpack.c.h.b16 %v571
    %v595 = vunpack.c.l.b16 %v572
    %v596 = vunpack.c.h.b16 %v572
    %v597 = vpack.c.b16 %v581, %v581
    %v598 = vpack.c.b16 %v582, %v582
    %v599 = vpack.c.b16 %v583, %v583
    %v600 = vpack.c.b16 %v584, %v584
    %v601 = vpack.c.b16 %v585, %v585
    %v602 = vpack.c.b16 %v586, %v586
    %v603 = vpack.c.b16 %v587, %v587
    %v604 = vpack.c.b16 %v588, %v588
    %v605 = vpack.c.b16 %v589, %v589
    %v606 = vpack.c.b16 %v590, %v590
    %v607 = vpack.c.b16 %v591, %v591
    %v608 = vpack.c.b16 %v592, %v592
    %v609 = vpack.c.b16 %v593, %v593
    %v610 = vpack.c.b16 %v594, %v594
    %v611 = vpack.c.b16 %v595, %v595
    %v612 = vpack.c.b16 %v596, %v596
    %629 = vst [vmem:[%s5] sm:$0xf] %v597
    %630 = vst [vmem:[%s5 + $0x4] sm:$0xf] %v598
    %631 = vst [vmem:[%s5 + $0x8] sm:$0xf] %v599
    %632 = vst [vmem:[%s5 + $0xc] sm:$0xf] %v600
    %633 = vst [vmem:[%s5 + $0x10] sm:$0xf] %v601
    %634 = vst [vmem:[%s5 + $0x14] sm:$0xf] %v602
    %635 = vst [vmem:[%s5 + $0x18] sm:$0xf] %v603
    %636 = vst [vmem:[%s5 + $0x1c] sm:$0xf] %v604
    %637 = vst [vmem:[%s5 + $0x20] sm:$0xf] %v605
    %638 = vst [vmem:[%s5 + $0x24] sm:$0xf] %v606
    %639 = vst [vmem:[%s5 + $0x28] sm:$0xf] %v607
    %640 = vst [vmem:[%s5 + $0x2c] sm:$0xf] %v608
    %641 = vst [vmem:[%s5 + $0x30] sm:$0xf] %v609
    %642 = vst [vmem:[%s5 + $0x34] sm:$0xf] %v610
    %643 = vst [vmem:[%s5 + $0x38] sm:$0xf] %v611
    %644 = vst [vmem:[%s5 + $0x3c] sm:$0xf] %v612
    %s645 = scalar_lea.vmem %s3, 64
    %v646 = vld [vmem:[%s645] sm:$0xf]
    %v647 = vld [vmem:[%s645 + $0x4] sm:$0xf]
    %v648 = vld [vmem:[%s645 + $0x8] sm:$0xf]
    %v649 = vld [vmem:[%s645 + $0xc] sm:$0xf]
    %v650 = vld [vmem:[%s645 + $0x10] sm:$0xf]
    %v651 = vld [vmem:[%s645 + $0x14] sm:$0xf]
    %v652 = vld [vmem:[%s645 + $0x18] sm:$0xf]
    %v653 = vld [vmem:[%s645 + $0x1c] sm:$0xf]
    %v654 = vld [vmem:[%s645 + $0x20] sm:$0xf]
    %v655 = vld [vmem:[%s645 + $0x24] sm:$0xf]
    %v656 = vld [vmem:[%s645 + $0x28] sm:$0xf]
    %v657 = vld [vmem:[%s645 + $0x2c] sm:$0xf]
    %v658 = vld [vmem:[%s645 + $0x30] sm:$0xf]
    %v659 = vld [vmem:[%s645 + $0x34] sm:$0xf]
    %v660 = vld [vmem:[%s645 + $0x38] sm:$0xf]
    %v661 = vld [vmem:[%s645 + $0x3c] sm:$0xf]
    %v678 = vunpack.c.l.b16 %v646
    %v679 = vunpack.c.l.b16 %v647
    %v680 = vunpack.c.l.b16 %v648
    %v681 = vunpack.c.l.b16 %v649
    %v682 = vunpack.c.l.b16 %v650
    %v683 = vunpack.c.l.b16 %v651
    %v684 = vunpack.c.l.b16 %v652
    %v685 = vunpack.c.l.b16 %v653
    %v686 = vunpack.c.l.b16 %v654
    %v687 = vunpack.c.l.b16 %v655
    %v688 = vunpack.c.l.b16 %v656
    %v689 = vunpack.c.l.b16 %v657
    %v690 = vunpack.c.l.b16 %v658
    %v691 = vunpack.c.l.b16 %v659
    %v692 = vunpack.c.l.b16 %v660
    %v693 = vunpack.c.l.b16 %v661
    %v694 = vpack.c.b16 %v679, %v678
    %v695 = vpack.c.b16 %v681, %v680
    %v696 = vpack.c.b16 %v683, %v682
    %v697 = vpack.c.b16 %v685, %v684
    %v698 = vpack.c.b16 %v687, %v686
    %v699 = vpack.c.b16 %v689, %v688
    %v700 = vpack.c.b16 %v691, %v690
    %v701 = vpack.c.b16 %v693, %v692
    %710 = vmatprep.subr.bf16.mxu0 0
    %711 = vmatpush1.bf16.msra.mxu0 %v701
    %712 = vmatprep.subr.bf16.mxu0 0
    %713 = vmatpush1.bf16.msra.mxu0 %v700
    %714 = vmatprep.subr.bf16.mxu0 0
    %715 = vmatpush1.bf16.msra.mxu0 %v699
    %716 = vmatprep.subr.bf16.mxu0 0
    %717 = vmatpush1.bf16.msra.mxu0 %v698
    %718 = vmatprep.subr.bf16.mxu0 0
    %719 = vmatpush1.bf16.msra.mxu0 %v697
    %720 = vmatprep.subr.bf16.mxu0 0
    %721 = vmatpush1.bf16.msra.mxu0 %v696
    %722 = vmatprep.subr.bf16.mxu0 0
    %723 = vmatpush1.bf16.msra.mxu0 %v695
    %724 = vmatprep.subr.bf16.mxu0 0
    %725 = vmatpush1.bf16.msra.mxu0 %v694
    %726 = vmatprep.subr.bf16.mxu0 0
    %727 = vmatpush2.bf16.msra.mxu0 0
    %728 = vmatprep.subr.bf16.mxu0 0
    %729 = vmatpush2.bf16.msra.mxu0 0
    %730 = vmatprep.subr.bf16.mxu0 0
    %731 = vmatpush2.bf16.msra.mxu0 0
    %732 = vmatprep.subr.bf16.mxu0 0
    %733 = vmatpush2.bf16.msra.mxu0 0
    %734 = vmatprep.subr.bf16.mxu0 0
    %735 = vmatpush2.bf16.msra.mxu0 0
    %736 = vmatprep.subr.bf16.mxu0 0
    %737 = vmatpush2.bf16.msra.mxu0 0
    %738 = vmatprep.subr.bf16.mxu0 0
    %739 = vmatpush2.bf16.msra.mxu0 0
    %740 = vmatprep.subr.bf16.mxu0 0
    %741 = vmatpush2.bf16.msra.mxu0 0
    %742 = vmatprep.mubr.bf16.mxu0 0
    %743 = vmatmul.mubr.bf16.gmra.mxu0 %v396
    %v744 = vpop.f32.mrf.mxu0
    %v745 = vadd.f32 0.0, %v744
    %v746 = vpop.f32.mrf.mxu0
    %v747 = vpop.f32.mrf.mxu0
    %v748 = vadd.f32 0.0, %v747
    %v749 = vpop.f32.mrf.mxu0
    %750 = vmatprep.mubr.bf16.mxu0 0
    %751 = vmatmul.mubr.bf16.gmra.mxu0 %v397
    %v752 = vpop.f32.mrf.mxu0
    %v753 = vadd.f32 0.0, %v752
    %v754 = vpop.f32.mrf.mxu0
    %v755 = vpop.f32.mrf.mxu0
    %v756 = vadd.f32 0.0, %v755
    %v757 = vpop.f32.mrf.mxu0
    %758 = vmatprep.mubr.bf16.mxu0 0
    %759 = vmatmul.mubr.bf16.gmra.mxu0 %v398
    %v760 = vpop.f32.mrf.mxu0
    %v761 = vadd.f32 0.0, %v760
    %v762 = vpop.f32.mrf.mxu0
    %v763 = vpop.f32.mrf.mxu0
    %v764 = vadd.f32 0.0, %v763
    %v765 = vpop.f32.mrf.mxu0
    %766 = vmatprep.mubr.bf16.mxu0 0
    %767 = vmatmul.mubr.bf16.gmra.mxu0 %v399
    %v768 = vpop.f32.mrf.mxu0
    %v769 = vadd.f32 0.0, %v768
    %v770 = vpop.f32.mrf.mxu0
    %v771 = vpop.f32.mrf.mxu0
    %v772 = vadd.f32 0.0, %v771
    %v773 = vpop.f32.mrf.mxu0
    %774 = vmatprep.mubr.bf16.mxu0 0
    %775 = vmatmul.mubr.bf16.gmra.mxu0 %v400
    %v776 = vpop.f32.mrf.mxu0
    %v777 = vadd.f32 0.0, %v776
    %v778 = vpop.f32.mrf.mxu0
    %v779 = vpop.f32.mrf.mxu0
    %v780 = vadd.f32 0.0, %v779
    %v781 = vpop.f32.mrf.mxu0
    %782 = vmatprep.mubr.bf16.mxu0 0
    %783 = vmatmul.mubr.bf16.gmra.mxu0 %v401
    %v784 = vpop.f32.mrf.mxu0
    %v785 = vadd.f32 0.0, %v784
    %v786 = vpop.f32.mrf.mxu0
    %v787 = vpop.f32.mrf.mxu0
    %v788 = vadd.f32 0.0, %v787
    %v789 = vpop.f32.mrf.mxu0
    %790 = vmatprep.mubr.bf16.mxu0 0
    %791 = vmatmul.mubr.bf16.gmra.mxu0 %v402
    %v792 = vpop.f32.mrf.mxu0
    %v793 = vadd.f32 0.0, %v792
    %v794 = vpop.f32.mrf.mxu0
    %v795 = vpop.f32.mrf.mxu0
    %v796 = vadd.f32 0.0, %v795
    %v797 = vpop.f32.mrf.mxu0
    %798 = vmatprep.mubr.bf16.mxu0 0
    %799 = vmatmul.mubr.bf16.gmra.mxu0 %v403
    %v800 = vpop.f32.mrf.mxu0
    %v801 = vadd.f32 0.0, %v800
    %v802 = vpop.f32.mrf.mxu0
    %v803 = vpop.f32.mrf.mxu0
    %v804 = vadd.f32 0.0, %v803
    %v805 = vpop.f32.mrf.mxu0
    %806 = vdwg.mxu0
    %v807 = vpack.c.bf16 %v748, %v745
    %v808 = vpack.c.bf16 %v756, %v753
    %v809 = vpack.c.bf16 %v764, %v761
    %v810 = vpack.c.bf16 %v772, %v769
    %v811 = vpack.c.bf16 %v780, %v777
    %v812 = vpack.c.bf16 %v788, %v785
    %v813 = vpack.c.bf16 %v796, %v793
    %v814 = vpack.c.bf16 %v804, %v801
    %v823 = vunpack.c.l.b16 %v807
    %v824 = vunpack.c.h.b16 %v807
    %v825 = vunpack.c.l.b16 %v808
    %v826 = vunpack.c.h.b16 %v808
    %v827 = vunpack.c.l.b16 %v809
    %v828 = vunpack.c.h.b16 %v809
    %v829 = vunpack.c.l.b16 %v810
    %v830 = vunpack.c.h.b16 %v810
    %v831 = vunpack.c.l.b16 %v811
    %v832 = vunpack.c.h.b16 %v811
    %v833 = vunpack.c.l.b16 %v812
    %v834 = vunpack.c.h.b16 %v812
    %v835 = vunpack.c.l.b16 %v813
    %v836 = vunpack.c.h.b16 %v813
    %v837 = vunpack.c.l.b16 %v814
    %v838 = vunpack.c.h.b16 %v814
    %v839 = vpack.c.b16 %v823, %v823
    %v840 = vpack.c.b16 %v824, %v824
    %v841 = vpack.c.b16 %v825, %v825
    %v842 = vpack.c.b16 %v826, %v826
    %v843 = vpack.c.b16 %v827, %v827
    %v844 = vpack.c.b16 %v828, %v828
    %v845 = vpack.c.b16 %v829, %v829
    %v846 = vpack.c.b16 %v830, %v830
    %v847 = vpack.c.b16 %v831, %v831
    %v848 = vpack.c.b16 %v832, %v832
    %v849 = vpack.c.b16 %v833, %v833
    %v850 = vpack.c.b16 %v834, %v834
    %v851 = vpack.c.b16 %v835, %v835
    %v852 = vpack.c.b16 %v836, %v836
    %v853 = vpack.c.b16 %v837, %v837
    %v854 = vpack.c.b16 %v838, %v838
    %s871 = scalar_lea.vmem %s5, 64
    %872 = vst [vmem:[%s871] sm:$0xf] %v839
    %873 = vst [vmem:[%s871 + $0x4] sm:$0xf] %v840
    %874 = vst [vmem:[%s871 + $0x8] sm:$0xf] %v841
    %875 = vst [vmem:[%s871 + $0xc] sm:$0xf] %v842
    %876 = vst [vmem:[%s871 + $0x10] sm:$0xf] %v843
    %877 = vst [vmem:[%s871 + $0x14] sm:$0xf] %v844
    %878 = vst [vmem:[%s871 + $0x18] sm:$0xf] %v845
    %879 = vst [vmem:[%s871 + $0x1c] sm:$0xf] %v846
    %880 = vst [vmem:[%s871 + $0x20] sm:$0xf] %v847
    %881 = vst [vmem:[%s871 + $0x24] sm:$0xf] %v848
    %882 = vst [vmem:[%s871 + $0x28] sm:$0xf] %v849
    %883 = vst [vmem:[%s871 + $0x2c] sm:$0xf] %v850
    %884 = vst [vmem:[%s871 + $0x30] sm:$0xf] %v851
    %885 = vst [vmem:[%s871 + $0x34] sm:$0xf] %v852
    %886 = vst [vmem:[%s871 + $0x38] sm:$0xf] %v853
    %887 = vst [vmem:[%s871 + $0x3c] sm:$0xf] %v854
    %s888 = scalar_lea.vmem %s3, 128
    %v889 = vld [vmem:[%s888] sm:$0xf]
    %v890 = vld [vmem:[%s888 + $0x4] sm:$0xf]
    %v891 = vld [vmem:[%s888 + $0x8] sm:$0xf]
    %v892 = vld [vmem:[%s888 + $0xc] sm:$0xf]
    %v893 = vld [vmem:[%s888 + $0x10] sm:$0xf]
    %v894 = vld [vmem:[%s888 + $0x14] sm:$0xf]
    %v895 = vld [vmem:[%s888 + $0x18] sm:$0xf]
    %v896 = vld [vmem:[%s888 + $0x1c] sm:$0xf]
    %v897 = vld [vmem:[%s888 + $0x20] sm:$0xf]
    %v898 = vld [vmem:[%s888 + $0x24] sm:$0xf]
    %v899 = vld [vmem:[%s888 + $0x28] sm:$0xf]
    %v900 = vld [vmem:[%s888 + $0x2c] sm:$0xf]
    %v901 = vld [vmem:[%s888 + $0x30] sm:$0xf]
    %v902 = vld [vmem:[%s888 + $0x34] sm:$0xf]
    %v903 = vld [vmem:[%s888 + $0x38] sm:$0xf]
    %v904 = vld [vmem:[%s888 + $0x3c] sm:$0xf]
    %v921 = vunpack.c.l.b16 %v889
    %v922 = vunpack.c.l.b16 %v890
    %v923 = vunpack.c.l.b16 %v891
    %v924 = vunpack.c.l.b16 %v892
    %v925 = vunpack.c.l.b16 %v893
    %v926 = vunpack.c.l.b16 %v894
    %v927 = vunpack.c.l.b16 %v895
    %v928 = vunpack.c.l.b16 %v896
    %v929 = vunpack.c.l.b16 %v897
    %v930 = vunpack.c.l.b16 %v898
    %v931 = vunpack.c.l.b16 %v899
    %v932 = vunpack.c.l.b16 %v900
    %v933 = vunpack.c.l.b16 %v901
    %v934 = vunpack.c.l.b16 %v902
    %v935 = vunpack.c.l.b16 %v903
    %v936 = vunpack.c.l.b16 %v904
    %v937 = vpack.c.b16 %v922, %v921
    %v938 = vpack.c.b16 %v924, %v923
    %v939 = vpack.c.b16 %v926, %v925
    %v940 = vpack.c.b16 %v928, %v927
    %v941 = vpack.c.b16 %v930, %v929
    %v942 = vpack.c.b16 %v932, %v931
    %v943 = vpack.c.b16 %v934, %v933
    %v944 = vpack.c.b16 %v936, %v935
    %953 = vmatprep.subr.bf16.mxu0 0
    %954 = vmatpush1.bf16.msra.mxu0 %v944
    %955 = vmatprep.subr.bf16.mxu0 0
    %956 = vmatpush1.bf16.msra.mxu0 %v943
    %957 = vmatprep.subr.bf16.mxu0 0
    %958 = vmatpush1.bf16.msra.mxu0 %v942
    %959 = vmatprep.subr.bf16.mxu0 0
    %960 = vmatpush1.bf16.msra.mxu0 %v941
    %961 = vmatprep.subr.bf16.mxu0 0
    %962 = vmatpush1.bf16.msra.mxu0 %v940
    %963 = vmatprep.subr.bf16.mxu0 0
    %964 = vmatpush1.bf16.msra.mxu0 %v939
    %965 = vmatprep.subr.bf16.mxu0 0
    %966 = vmatpush1.bf16.msra.mxu0 %v938
    %967 = vmatprep.subr.bf16.mxu0 0
    %968 = vmatpush1.bf16.msra.mxu0 %v937
    %969 = vmatprep.subr.bf16.mxu0 0
    %970 = vmatpush2.bf16.msra.mxu0 0
    %971 = vmatprep.subr.bf16.mxu0 0
    %972 = vmatpush2.bf16.msra.mxu0 0
    %973 = vmatprep.subr.bf16.mxu0 0
    %974 = vmatpush2.bf16.msra.mxu0 0
    %975 = vmatprep.subr.bf16.mxu0 0
    %976 = vmatpush2.bf16.msra.mxu0 0
    %977 = vmatprep.subr.bf16.mxu0 0
    %978 = vmatpush2.bf16.msra.mxu0 0
    %979 = vmatprep.subr.bf16.mxu0 0
    %980 = vmatpush2.bf16.msra.mxu0 0
    %981 = vmatprep.subr.bf16.mxu0 0
    %982 = vmatpush2.bf16.msra.mxu0 0
    %983 = vmatprep.subr.bf16.mxu0 0
    %984 = vmatpush2.bf16.msra.mxu0 0
    %985 = vmatprep.mubr.bf16.mxu0 0
    %986 = vmatmul.mubr.bf16.gmra.mxu0 %v396
    %v987 = vpop.f32.mrf.mxu0
    %v988 = vadd.f32 0.0, %v987
    %v989 = vpop.f32.mrf.mxu0
    %v990 = vpop.f32.mrf.mxu0
    %v991 = vadd.f32 0.0, %v990
    %v992 = vpop.f32.mrf.mxu0
    %993 = vmatprep.mubr.bf16.mxu0 0
    %994 = vmatmul.mubr.bf16.gmra.mxu0 %v397
    %v995 = vpop.f32.mrf.mxu0
    %v996 = vadd.f32 0.0, %v995
    %v997 = vpop.f32.mrf.mxu0
    %v998 = vpop.f32.mrf.mxu0
    %v999 = vadd.f32 0.0, %v998
    %v1000 = vpop.f32.mrf.mxu0
    %1001 = vmatprep.mubr.bf16.mxu0 0
    %1002 = vmatmul.mubr.bf16.gmra.mxu0 %v398
    %v1003 = vpop.f32.mrf.mxu0
    %v1004 = vadd.f32 0.0, %v1003
    %v1005 = vpop.f32.mrf.mxu0
    %v1006 = vpop.f32.mrf.mxu0
    %v1007 = vadd.f32 0.0, %v1006
    %v1008 = vpop.f32.mrf.mxu0
    %1009 = vmatprep.mubr.bf16.mxu0 0
    %1010 = vmatmul.mubr.bf16.gmra.mxu0 %v399
    %v1011 = vpop.f32.mrf.mxu0
    %v1012 = vadd.f32 0.0, %v1011
    %v1013 = vpop.f32.mrf.mxu0
    %v1014 = vpop.f32.mrf.mxu0
    %v1015 = vadd.f32 0.0, %v1014
    %v1016 = vpop.f32.mrf.mxu0
    %1017 = vmatprep.mubr.bf16.mxu0 0
    %1018 = vmatmul.mubr.bf16.gmra.mxu0 %v400
    %v1019 = vpop.f32.mrf.mxu0
    %v1020 = vadd.f32 0.0, %v1019
    %v1021 = vpop.f32.mrf.mxu0
    %v1022 = vpop.f32.mrf.mxu0
    %v1023 = vadd.f32 0.0, %v1022
    %v1024 = vpop.f32.mrf.mxu0
    %1025 = vmatprep.mubr.bf16.mxu0 0
    %1026 = vmatmul.mubr.bf16.gmra.mxu0 %v401
    %v1027 = vpop.f32.mrf.mxu0
    %v1028 = vadd.f32 0.0, %v1027
    %v1029 = vpop.f32.mrf.mxu0
    %v1030 = vpop.f32.mrf.mxu0
    %v1031 = vadd.f32 0.0, %v1030
    %v1032 = vpop.f32.mrf.mxu0
    %1033 = vmatprep.mubr.bf16.mxu0 0
    %1034 = vmatmul.mubr.bf16.gmra.mxu0 %v402
    %v1035 = vpop.f32.mrf.mxu0
    %v1036 = vadd.f32 0.0, %v1035
    %v1037 = vpop.f32.mrf.mxu0
    %v1038 = vpop.f32.mrf.mxu0
    %v1039 = vadd.f32 0.0, %v1038
    %v1040 = vpop.f32.mrf.mxu0
    %1041 = vmatprep.mubr.bf16.mxu0 0
    %1042 = vmatmul.mubr.bf16.gmra.mxu0 %v403
    %v1043 = vpop.f32.mrf.mxu0
    %v1044 = vadd.f32 0.0, %v1043
    %v1045 = vpop.f32.mrf.mxu0
    %v1046 = vpop.f32.mrf.mxu0
    %v1047 = vadd.f32 0.0, %v1046
    %v1048 = vpop.f32.mrf.mxu0
    %1049 = vdwg.mxu0
    %v1050 = vpack.c.bf16 %v991, %v988
    %v1051 = vpack.c.bf16 %v999, %v996
    %v1052 = vpack.c.bf16 %v1007, %v1004
    %v1053 = vpack.c.bf16 %v1015, %v1012
    %v1054 = vpack.c.bf16 %v1023, %v1020
    %v1055 = vpack.c.bf16 %v1031, %v1028
    %v1056 = vpack.c.bf16 %v1039, %v1036
    %v1057 = vpack.c.bf16 %v1047, %v1044
    %v1066 = vunpack.c.l.b16 %v1050
    %v1067 = vunpack.c.h.b16 %v1050
    %v1068 = vunpack.c.l.b16 %v1051
    %v1069 = vunpack.c.h.b16 %v1051
    %v1070 = vunpack.c.l.b16 %v1052
    %v1071 = vunpack.c.h.b16 %v1052
    %v1072 = vunpack.c.l.b16 %v1053
    %v1073 = vunpack.c.h.b16 %v1053
    %v1074 = vunpack.c.l.b16 %v1054
    %v1075 = vunpack.c.h.b16 %v1054
    %v1076 = vunpack.c.l.b16 %v1055
    %v1077 = vunpack.c.h.b16 %v1055
    %v1078 = vunpack.c.l.b16 %v1056
    %v1079 = vunpack.c.h.b16 %v1056
    %v1080 = vunpack.c.l.b16 %v1057
    %v1081 = vunpack.c.h.b16 %v1057
    %v1082 = vpack.c.b16 %v1066, %v1066
    %v1083 = vpack.c.b16 %v1067, %v1067
    %v1084 = vpack.c.b16 %v1068, %v1068
    %v1085 = vpack.c.b16 %v1069, %v1069
    %v1086 = vpack.c.b16 %v1070, %v1070
    %v1087 = vpack.c.b16 %v1071, %v1071
    %v1088 = vpack.c.b16 %v1072, %v1072
    %v1089 = vpack.c.b16 %v1073, %v1073
    %v1090 = vpack.c.b16 %v1074, %v1074
    %v1091 = vpack.c.b16 %v1075, %v1075
    %v1092 = vpack.c.b16 %v1076, %v1076
    %v1093 = vpack.c.b16 %v1077, %v1077
    %v1094 = vpack.c.b16 %v1078, %v1078
    %v1095 = vpack.c.b16 %v1079, %v1079
    %v1096 = vpack.c.b16 %v1080, %v1080
    %v1097 = vpack.c.b16 %v1081, %v1081
    %s1114 = scalar_lea.vmem %s5, 128
    %1115 = vst [vmem:[%s1114] sm:$0xf] %v1082
    %1116 = vst [vmem:[%s1114 + $0x4] sm:$0xf] %v1083
    %1117 = vst [vmem:[%s1114 + $0x8] sm:$0xf] %v1084
    %1118 = vst [vmem:[%s1114 + $0xc] sm:$0xf] %v1085
    %1119 = vst [vmem:[%s1114 + $0x10] sm:$0xf] %v1086
    %1120 = vst [vmem:[%s1114 + $0x14] sm:$0xf] %v1087
    %1121 = vst [vmem:[%s1114 + $0x18] sm:$0xf] %v1088
    %1122 = vst [vmem:[%s1114 + $0x1c] sm:$0xf] %v1089
    %1123 = vst [vmem:[%s1114 + $0x20] sm:$0xf] %v1090
    %1124 = vst [vmem:[%s1114 + $0x24] sm:$0xf] %v1091
    %1125 = vst [vmem:[%s1114 + $0x28] sm:$0xf] %v1092
    %1126 = vst [vmem:[%s1114 + $0x2c] sm:$0xf] %v1093
    %1127 = vst [vmem:[%s1114 + $0x30] sm:$0xf] %v1094
    %1128 = vst [vmem:[%s1114 + $0x34] sm:$0xf] %v1095
    %1129 = vst [vmem:[%s1114 + $0x38] sm:$0xf] %v1096
    %1130 = vst [vmem:[%s1114 + $0x3c] sm:$0xf] %v1097
    %s1131 = scalar_lea.vmem %s3, 192
    %v1132 = vld [vmem:[%s1131] sm:$0xf]
    %v1133 = vld [vmem:[%s1131 + $0x4] sm:$0xf]
    %v1134 = vld [vmem:[%s1131 + $0x8] sm:$0xf]
    %v1135 = vld [vmem:[%s1131 + $0xc] sm:$0xf]
    %v1136 = vld [vmem:[%s1131 + $0x10] sm:$0xf]
    %v1137 = vld [vmem:[%s1131 + $0x14] sm:$0xf]
    %v1138 = vld [vmem:[%s1131 + $0x18] sm:$0xf]
    %v1139 = vld [vmem:[%s1131 + $0x1c] sm:$0xf]
    %v1140 = vld [vmem:[%s1131 + $0x20] sm:$0xf]
    %v1141 = vld [vmem:[%s1131 + $0x24] sm:$0xf]
    %v1142 = vld [vmem:[%s1131 + $0x28] sm:$0xf]
    %v1143 = vld [vmem:[%s1131 + $0x2c] sm:$0xf]
    %v1144 = vld [vmem:[%s1131 + $0x30] sm:$0xf]
    %v1145 = vld [vmem:[%s1131 + $0x34] sm:$0xf]
    %v1146 = vld [vmem:[%s1131 + $0x38] sm:$0xf]
    %v1147 = vld [vmem:[%s1131 + $0x3c] sm:$0xf]
    %v1164 = vunpack.c.l.b16 %v1132
    %v1165 = vunpack.c.l.b16 %v1133
    %v1166 = vunpack.c.l.b16 %v1134
    %v1167 = vunpack.c.l.b16 %v1135
    %v1168 = vunpack.c.l.b16 %v1136
    %v1169 = vunpack.c.l.b16 %v1137
    %v1170 = vunpack.c.l.b16 %v1138
    %v1171 = vunpack.c.l.b16 %v1139
    %v1172 = vunpack.c.l.b16 %v1140
    %v1173 = vunpack.c.l.b16 %v1141
    %v1174 = vunpack.c.l.b16 %v1142
    %v1175 = vunpack.c.l.b16 %v1143
    %v1176 = vunpack.c.l.b16 %v1144
    %v1177 = vunpack.c.l.b16 %v1145
    %v1178 = vunpack.c.l.b16 %v1146
    %v1179 = vunpack.c.l.b16 %v1147
    %v1180 = vpack.c.b16 %v1165, %v1164
    %v1181 = vpack.c.b16 %v1167, %v1166
    %v1182 = vpack.c.b16 %v1169, %v1168
    %v1183 = vpack.c.b16 %v1171, %v1170
    %v1184 = vpack.c.b16 %v1173, %v1172
    %v1185 = vpack.c.b16 %v1175, %v1174
    %v1186 = vpack.c.b16 %v1177, %v1176
    %v1187 = vpack.c.b16 %v1179, %v1178
    %1196 = vmatprep.subr.bf16.mxu0 0
    %1197 = vmatpush1.bf16.msra.mxu0 %v1187
    %1198 = vmatprep.subr.bf16.mxu0 0
    %1199 = vmatpush1.bf16.msra.mxu0 %v1186
    %1200 = vmatprep.subr.bf16.mxu0 0
    %1201 = vmatpush1.bf16.msra.mxu0 %v1185
    %1202 = vmatprep.subr.bf16.mxu0 0
    %1203 = vmatpush1.bf16.msra.mxu0 %v1184
    %1204 = vmatprep.subr.bf16.mxu0 0
    %1205 = vmatpush1.bf16.msra.mxu0 %v1183
    %1206 = vmatprep.subr.bf16.mxu0 0
    %1207 = vmatpush1.bf16.msra.mxu0 %v1182
    %1208 = vmatprep.subr.bf16.mxu0 0
    %1209 = vmatpush1.bf16.msra.mxu0 %v1181
    %1210 = vmatprep.subr.bf16.mxu0 0
    %1211 = vmatpush1.bf16.msra.mxu0 %v1180
    %1212 = vmatprep.subr.bf16.mxu0 0
    %1213 = vmatpush2.bf16.msra.mxu0 0
    %1214 = vmatprep.subr.bf16.mxu0 0
    %1215 = vmatpush2.bf16.msra.mxu0 0
    %1216 = vmatprep.subr.bf16.mxu0 0
    %1217 = vmatpush2.bf16.msra.mxu0 0
    %1218 = vmatprep.subr.bf16.mxu0 0
    %1219 = vmatpush2.bf16.msra.mxu0 0
    %1220 = vmatprep.subr.bf16.mxu0 0
    %1221 = vmatpush2.bf16.msra.mxu0 0
    %1222 = vmatprep.subr.bf16.mxu0 0
    %1223 = vmatpush2.bf16.msra.mxu0 0
    %1224 = vmatprep.subr.bf16.mxu0 0
    %1225 = vmatpush2.bf16.msra.mxu0 0
    %1226 = vmatprep.subr.bf16.mxu0 0
    %1227 = vmatpush2.bf16.msra.mxu0 0
    %1228 = vmatprep.mubr.bf16.mxu0 0
    %1229 = vmatmul.mubr.bf16.gmra.mxu0 %v396
    %v1230 = vpop.f32.mrf.mxu0
    %v1231 = vadd.f32 0.0, %v1230
    %v1232 = vpop.f32.mrf.mxu0
    %v1233 = vpop.f32.mrf.mxu0
    %v1234 = vadd.f32 0.0, %v1233
    %v1235 = vpop.f32.mrf.mxu0
    %1236 = vmatprep.mubr.bf16.mxu0 0
    %1237 = vmatmul.mubr.bf16.gmra.mxu0 %v397
    %v1238 = vpop.f32.mrf.mxu0
    %v1239 = vadd.f32 0.0, %v1238
    %v1240 = vpop.f32.mrf.mxu0
    %v1241 = vpop.f32.mrf.mxu0
    %v1242 = vadd.f32 0.0, %v1241
    %v1243 = vpop.f32.mrf.mxu0
    %1244 = vmatprep.mubr.bf16.mxu0 0
    %1245 = vmatmul.mubr.bf16.gmra.mxu0 %v398
    %v1246 = vpop.f32.mrf.mxu0
    %v1247 = vadd.f32 0.0, %v1246
    %v1248 = vpop.f32.mrf.mxu0
    %v1249 = vpop.f32.mrf.mxu0
    %v1250 = vadd.f32 0.0, %v1249
    %v1251 = vpop.f32.mrf.mxu0
    %1252 = vmatprep.mubr.bf16.mxu0 0
    %1253 = vmatmul.mubr.bf16.gmra.mxu0 %v399
    %v1254 = vpop.f32.mrf.mxu0
    %v1255 = vadd.f32 0.0, %v1254
    %v1256 = vpop.f32.mrf.mxu0
    %v1257 = vpop.f32.mrf.mxu0
    %v1258 = vadd.f32 0.0, %v1257
    %v1259 = vpop.f32.mrf.mxu0
    %1260 = vmatprep.mubr.bf16.mxu0 0
    %1261 = vmatmul.mubr.bf16.gmra.mxu0 %v400
    %v1262 = vpop.f32.mrf.mxu0
    %v1263 = vadd.f32 0.0, %v1262
    %v1264 = vpop.f32.mrf.mxu0
    %v1265 = vpop.f32.mrf.mxu0
    %v1266 = vadd.f32 0.0, %v1265
    %v1267 = vpop.f32.mrf.mxu0
    %1268 = vmatprep.mubr.bf16.mxu0 0
    %1269 = vmatmul.mubr.bf16.gmra.mxu0 %v401
    %v1270 = vpop.f32.mrf.mxu0
    %v1271 = vadd.f32 0.0, %v1270
    %v1272 = vpop.f32.mrf.mxu0
    %v1273 = vpop.f32.mrf.mxu0
    %v1274 = vadd.f32 0.0, %v1273
    %v1275 = vpop.f32.mrf.mxu0
    %1276 = vmatprep.mubr.bf16.mxu0 0
    %1277 = vmatmul.mubr.bf16.gmra.mxu0 %v402
    %v1278 = vpop.f32.mrf.mxu0
    %v1279 = vadd.f32 0.0, %v1278
    %v1280 = vpop.f32.mrf.mxu0
    %v1281 = vpop.f32.mrf.mxu0
    %v1282 = vadd.f32 0.0, %v1281
    %v1283 = vpop.f32.mrf.mxu0
    %1284 = vmatprep.mubr.bf16.mxu0 0
    %1285 = vmatmul.mubr.bf16.gmra.mxu0 %v403
    %v1286 = vpop.f32.mrf.mxu0
    %v1287 = vadd.f32 0.0, %v1286
    %v1288 = vpop.f32.mrf.mxu0
    %v1289 = vpop.f32.mrf.mxu0
    %v1290 = vadd.f32 0.0, %v1289
    %v1291 = vpop.f32.mrf.mxu0
    %1292 = vdwg.mxu0
    %v1293 = vpack.c.bf16 %v1234, %v1231
    %v1294 = vpack.c.bf16 %v1242, %v1239
    %v1295 = vpack.c.bf16 %v1250, %v1247
    %v1296 = vpack.c.bf16 %v1258, %v1255
    %v1297 = vpack.c.bf16 %v1266, %v1263
    %v1298 = vpack.c.bf16 %v1274, %v1271
    %v1299 = vpack.c.bf16 %v1282, %v1279
    %v1300 = vpack.c.bf16 %v1290, %v1287
    %v1309 = vunpack.c.l.b16 %v1293
    %v1310 = vunpack.c.h.b16 %v1293
    %v1311 = vunpack.c.l.b16 %v1294
    %v1312 = vunpack.c.h.b16 %v1294
    %v1313 = vunpack.c.l.b16 %v1295
    %v1314 = vunpack.c.h.b16 %v1295
    %v1315 = vunpack.c.l.b16 %v1296
    %v1316 = vunpack.c.h.b16 %v1296
    %v1317 = vunpack.c.l.b16 %v1297
    %v1318 = vunpack.c.h.b16 %v1297
    %v1319 = vunpack.c.l.b16 %v1298
    %v1320 = vunpack.c.h.b16 %v1298
    %v1321 = vunpack.c.l.b16 %v1299
    %v1322 = vunpack.c.h.b16 %v1299
    %v1323 = vunpack.c.l.b16 %v1300
    %v1324 = vunpack.c.h.b16 %v1300
    %v1325 = vpack.c.b16 %v1309, %v1309
    %v1326 = vpack.c.b16 %v1310, %v1310
    %v1327 = vpack.c.b16 %v1311, %v1311
    %v1328 = vpack.c.b16 %v1312, %v1312
    %v1329 = vpack.c.b16 %v1313, %v1313
    %v1330 = vpack.c.b16 %v1314, %v1314
    %v1331 = vpack.c.b16 %v1315, %v1315
    %v1332 = vpack.c.b16 %v1316, %v1316
    %v1333 = vpack.c.b16 %v1317, %v1317
    %v1334 = vpack.c.b16 %v1318, %v1318
    %v1335 = vpack.c.b16 %v1319, %v1319
    %v1336 = vpack.c.b16 %v1320, %v1320
    %v1337 = vpack.c.b16 %v1321, %v1321
    %v1338 = vpack.c.b16 %v1322, %v1322
    %v1339 = vpack.c.b16 %v1323, %v1323
    %v1340 = vpack.c.b16 %v1324, %v1324
    %s1357 = scalar_lea.vmem %s5, 192
    %1358 = vst [vmem:[%s1357] sm:$0xf] %v1325
    %1359 = vst [vmem:[%s1357 + $0x4] sm:$0xf] %v1326
    %1360 = vst [vmem:[%s1357 + $0x8] sm:$0xf] %v1327
    %1361 = vst [vmem:[%s1357 + $0xc] sm:$0xf] %v1328
    %1362 = vst [vmem:[%s1357 + $0x10] sm:$0xf] %v1329
    %1363 = vst [vmem:[%s1357 + $0x14] sm:$0xf] %v1330
    %1364 = vst [vmem:[%s1357 + $0x18] sm:$0xf] %v1331
    %1365 = vst [vmem:[%s1357 + $0x1c] sm:$0xf] %v1332
    %1366 = vst [vmem:[%s1357 + $0x20] sm:$0xf] %v1333
    %1367 = vst [vmem:[%s1357 + $0x24] sm:$0xf] %v1334
    %1368 = vst [vmem:[%s1357 + $0x28] sm:$0xf] %v1335
    %1369 = vst [vmem:[%s1357 + $0x2c] sm:$0xf] %v1336
    %1370 = vst [vmem:[%s1357 + $0x30] sm:$0xf] %v1337
    %1371 = vst [vmem:[%s1357 + $0x34] sm:$0xf] %v1338
    %1372 = vst [vmem:[%s1357 + $0x38] sm:$0xf] %v1339
    %1373 = vst [vmem:[%s1357 + $0x3c] sm:$0xf] %v1340
  $region25: #{phenomnn_forward.10} parent=0 // pred_fallthru
    _
  // Predicated region
  $region26: #{phenomnn_forward.10} parent=0 // pred_check
    _
  $region27: #{phenomnn_forward.10} parent=0 // pred_check_branch
    %1375 = sbr.rel (0) target = $region29
  $region28: #{phenomnn_forward.10} parent=0 // pred_region
    _
  $region29: #{phenomnn_forward.10} parent=0 // pred_fallthru
    _
  // Predicated region
  $region30: #{phenomnn_forward.10} parent=0 // pred_check
    _
  $region31: #{phenomnn_forward.10} parent=0 // pred_check_branch
    %1377 = sbr.rel (0) target = $region33
  $region32: #{phenomnn_forward.10} parent=0 // pred_region
    _
  $region33: #{phenomnn_forward.10} parent=0 // pred_fallthru
    _
  // Predicated region
  $region34: #{phenomnn_forward.10} parent=0 // pred_check
    _
  $region35: #{phenomnn_forward.10} parent=0 // pred_check_branch
    %1379 = sbr.rel (0) target = $region37
  $region36: #{phenomnn_forward.10} parent=0 // pred_region
    _
  $region37: #{phenomnn_forward.10} parent=0 // pred_fallthru
    _
  // Predicated region
  $region38: #{phenomnn_forward.10} parent=0 // pred_check
    _
  $region39: #{phenomnn_forward.10} parent=0 // pred_check_branch
    %1381 = sbr.rel (0) target = $region41
  $region40: #{phenomnn_forward.10} parent=0 // pred_region
    _
  $region41: #{phenomnn_forward.10} parent=0 // pred_fallthru
    _

// kernel: phenomnn_forward.13
$region0: #{phenomnn_forward.13}
  #allocation0 [shape = 'u32[]', space=smem, size = 0x4, offset = 0x4, fixed_abs, tag = 'smem constant byte address 0x4 - core index']
  #allocation1 [shape = 'u32[144,128]{1,0:T(1,128)}', space=vmem, size = 0x12000, scoped, tag = 'internal scratch']
  %s0 = inlined_call_operand.vmem [shape: f32[128,128], index: 0, kind: input, shape index: {}]
  %s1 = inlined_call_operand.vmem [shape: bf16[128,128], index: 1, kind: input, shape index: {}]
  %s2 = inlined_call_operand.vmem [shape: f32[1,128], index: 2, kind: input, shape index: {}]
  %s3 = inlined_call_operand.vmem [shape: f32[128,128], index: 3, kind: output, shape index: {}]
  %s4 = sld [smem:[#allocation0]]
  $region22: #{phenomnn_forward.13} parent=0
    _
  %s6 = ssub.s32 1, %s4
  %s7 = scalar_select 0, %s6, %s4
  // Predicated region
  $region2: #{phenomnn_forward.13} parent=0 // pred_check
    _
  $region3: #{phenomnn_forward.13} parent=0 // pred_check_branch
    %9 = sbr.rel (0) target = $region5
  $region4: #{phenomnn_forward.13} parent=0 // pred_region
    _
  $region5: #{phenomnn_forward.13} parent=0 // pred_fallthru
    _
  // Predicated region
  $region6: #{phenomnn_forward.13} parent=0 // pred_check
    _
  $region7: #{phenomnn_forward.13} parent=0 // pred_check_branch
    %11 = sbr.rel (0) target = $region9
  $region8: #{phenomnn_forward.13} parent=0 // pred_region
    _
  $region9: #{phenomnn_forward.13} parent=0 // pred_fallthru
    _
  // Predicated region
  $region10: #{phenomnn_forward.13} parent=0 // pred_check
    _
  $region11: #{phenomnn_forward.13} parent=0 // pred_check_branch
    %13 = sbr.rel (0) target = $region13
  $region12: #{phenomnn_forward.13} parent=0 // pred_region
    _
  $region13: #{phenomnn_forward.13} parent=0 // pred_fallthru
    _
  %v15 = vld [vmem:[%s0] sm:$0xff]
  %v16 = vld [vmem:[%s0 + $0x8] sm:$0xff]
  %v17 = vld [vmem:[%s0 + $0x10] sm:$0xff]
  %v18 = vld [vmem:[%s0 + $0x18] sm:$0xff]
  %v19 = vld [vmem:[%s0 + $0x20] sm:$0xff]
  %v20 = vld [vmem:[%s0 + $0x28] sm:$0xff]
  %v21 = vld [vmem:[%s0 + $0x30] sm:$0xff]
  %v22 = vld [vmem:[%s0 + $0x38] sm:$0xff]
  %v23 = vld [vmem:[%s0 + $0x40] sm:$0xff]
  %v24 = vld [vmem:[%s0 + $0x48] sm:$0xff]
  %v25 = vld [vmem:[%s0 + $0x50] sm:$0xff]
  %v26 = vld [vmem:[%s0 + $0x58] sm:$0xff]
  %v27 = vld [vmem:[%s0 + $0x60] sm:$0xff]
  %v28 = vld [vmem:[%s0 + $0x68] sm:$0xff]
  %v29 = vld [vmem:[%s0 + $0x70] sm:$0xff]
  %v30 = vld [vmem:[%s0 + $0x78] sm:$0xff]
  %v31 = vmax.f32 %v15, 0.0
  %v32 = vmax.f32 %v16, 0.0
  %v33 = vmax.f32 %v17, 0.0
  %v34 = vmax.f32 %v18, 0.0
  %v35 = vmax.f32 %v19, 0.0
  %v36 = vmax.f32 %v20, 0.0
  %v37 = vmax.f32 %v21, 0.0
  %v38 = vmax.f32 %v22, 0.0
  %v39 = vmax.f32 %v23, 0.0
  %v40 = vmax.f32 %v24, 0.0
  %v41 = vmax.f32 %v25, 0.0
  %v42 = vmax.f32 %v26, 0.0
  %v43 = vmax.f32 %v27, 0.0
  %v44 = vmax.f32 %v28, 0.0
  %v45 = vmax.f32 %v29, 0.0
  %v46 = vmax.f32 %v30, 0.0
  %v47 = vpack.c.bf16 %v32, %v31
  %v48 = vpack.c.bf16 %v34, %v33
  %v49 = vpack.c.bf16 %v36, %v35
  %v50 = vpack.c.bf16 %v38, %v37
  %v51 = vpack.c.bf16 %v40, %v39
  %v52 = vpack.c.bf16 %v42, %v41
  %v53 = vpack.c.bf16 %v44, %v43
  %v54 = vpack.c.bf16 %v46, %v45
  %v55 = vld [vmem:[%s1] sm:$0xf]
  %v56 = vld [vmem:[%s1 + $0x4] sm:$0xf]
  %v57 = vld [vmem:[%s1 + $0x8] sm:$0xf]
  %v58 = vld [vmem:[%s1 + $0xc] sm:$0xf]
  %v59 = vld [vmem:[%s1 + $0x10] sm:$0xf]
  %v60 = vld [vmem:[%s1 + $0x14] sm:$0xf]
  %v61 = vld [vmem:[%s1 + $0x18] sm:$0xf]
  %v62 = vld [vmem:[%s1 + $0x1c] sm:$0xf]
  %v63 = vld [vmem:[%s1 + $0x20] sm:$0xf]
  %v64 = vld [vmem:[%s1 + $0x24] sm:$0xf]
  %v65 = vld [vmem:[%s1 + $0x28] sm:$0xf]
  %v66 = vld [vmem:[%s1 + $0x2c] sm:$0xf]
  %v67 = vld [vmem:[%s1 + $0x30] sm:$0xf]
  %v68 = vld [vmem:[%s1 + $0x34] sm:$0xf]
  %v69 = vld [vmem:[%s1 + $0x38] sm:$0xf]
  %v70 = vld [vmem:[%s1 + $0x3c] sm:$0xf]
  %v71 = vld [vmem:[%s2] sm:$0x1]
  %v73 = vlaneseq
  %v74 = vshrl.u32 %v73, 7
  %v75 = vsub.s32 0, %v74
  %v76 = vrot.slane %v71, %v75
  %v94 = vunpack.c.l.b16 %v55
  %v95 = vunpack.c.l.b16 %v56
  %v96 = vunpack.c.l.b16 %v57
  %v97 = vunpack.c.l.b16 %v58
  %v98 = vunpack.c.l.b16 %v59
  %v99 = vunpack.c.l.b16 %v60
  %v100 = vunpack.c.l.b16 %v61
  %v101 = vunpack.c.l.b16 %v62
  %v102 = vunpack.c.l.b16 %v63
  %v103 = vunpack.c.l.b16 %v64
  %v104 = vunpack.c.l.b16 %v65
  %v105 = vunpack.c.l.b16 %v66
  %v106 = vunpack.c.l.b16 %v67
  %v107 = vunpack.c.l.b16 %v68
  %v108 = vunpack.c.l.b16 %v69
  %v109 = vunpack.c.l.b16 %v70
  %v110 = vpack.c.b16 %v95, %v94
  %v111 = vpack.c.b16 %v97, %v96
  %v112 = vpack.c.b16 %v99, %v98
  %v113 = vpack.c.b16 %v101, %v100
  %v114 = vpack.c.b16 %v103, %v102
  %v115 = vpack.c.b16 %v105, %v104
  %v116 = vpack.c.b16 %v107, %v106
  %v117 = vpack.c.b16 %v109, %v108
  %126 = vmatprep.subr.bf16.mxu0 0
  %127 = vmatpush1.bf16.msra.mxu0 %v117
  %128 = vmatprep.subr.bf16.mxu0 0
  %129 = vmatpush1.bf16.msra.mxu0 %v116
  %130 = vmatprep.subr.bf16.mxu0 0
  %131 = vmatpush1.bf16.msra.mxu0 %v115
  %132 = vmatprep.subr.bf16.mxu0 0
  %133 = vmatpush1.bf16.msra.mxu0 %v114
  %134 = vmatprep.subr.bf16.mxu0 0
  %135 = vmatpush1.bf16.msra.mxu0 %v113
  %136 = vmatprep.subr.bf16.mxu0 0
  %137 = vmatpush1.bf16.msra.mxu0 %v112
  %138 = vmatprep.subr.bf16.mxu0 0
  %139 = vmatpush1.bf16.msra.mxu0 %v111
  %140 = vmatprep.subr.bf16.mxu0 0
  %141 = vmatpush1.bf16.msra.mxu0 %v110
  %142 = vmatprep.subr.bf16.mxu0 0
  %143 = vmatpush2.bf16.msra.mxu0 0
  %144 = vmatprep.subr.bf16.mxu0 0
  %145 = vmatpush2.bf16.msra.mxu0 0
  %146 = vmatprep.subr.bf16.mxu0 0
  %147 = vmatpush2.bf16.msra.mxu0 0
  %148 = vmatprep.subr.bf16.mxu0 0
  %149 = vmatpush2.bf16.msra.mxu0 0
  %150 = vmatprep.subr.bf16.mxu0 0
  %151 = vmatpush2.bf16.msra.mxu0 0
  %152 = vmatprep.subr.bf16.mxu0 0
  %153 = vmatpush2.bf16.msra.mxu0 0
  %154 = vmatprep.subr.bf16.mxu0 0
  %155 = vmatpush2.bf16.msra.mxu0 0
  %156 = vmatprep.subr.bf16.mxu0 0
  %157 = vmatpush2.bf16.msra.mxu0 0
  %158 = vmatprep.mubr.bf16.mxu0 0
  %159 = vmatmul.mubr.bf16.gmra.mxu0 %v47
  %v160 = vpop.f32.mrf.mxu0
  %v161 = vadd.f32 %v76, %v160
  %v162 = vpop.f32.mrf.mxu0
  %v163 = vpop.f32.mrf.mxu0
  %v164 = vadd.f32 %v76, %v163
  %v165 = vpop.f32.mrf.mxu0
  %166 = vmatprep.mubr.bf16.mxu0 0
  %167 = vmatmul.mubr.bf16.gmra.mxu0 %v48
  %v168 = vpop.f32.mrf.mxu0
  %v169 = vadd.f32 %v76, %v168
  %v170 = vpop.f32.mrf.mxu0
  %v171 = vpop.f32.mrf.mxu0
  %v172 = vadd.f32 %v76, %v171
  %v173 = vpop.f32.mrf.mxu0
  %174 = vmatprep.mubr.bf16.mxu0 0
  %175 = vmatmul.mubr.bf16.gmra.mxu0 %v49
  %v176 = vpop.f32.mrf.mxu0
  %v177 = vadd.f32 %v76, %v176
  %v178 = vpop.f32.mrf.mxu0
  %v179 = vpop.f32.mrf.mxu0
  %v180 = vadd.f32 %v76, %v179
  %v181 = vpop.f32.mrf.mxu0
  %182 = vmatprep.mubr.bf16.mxu0 0
  %183 = vmatmul.mubr.bf16.gmra.mxu0 %v50
  %v184 = vpop.f32.mrf.mxu0
  %v185 = vadd.f32 %v76, %v184
  %v186 = vpop.f32.mrf.mxu0
  %v187 = vpop.f32.mrf.mxu0
  %v188 = vadd.f32 %v76, %v187
  %v189 = vpop.f32.mrf.mxu0
  %190 = vmatprep.mubr.bf16.mxu0 0
  %191 = vmatmul.mubr.bf16.gmra.mxu0 %v51
  %v192 = vpop.f32.mrf.mxu0
  %v193 = vadd.f32 %v76, %v192
  %v194 = vpop.f32.mrf.mxu0
  %v195 = vpop.f32.mrf.mxu0
  %v196 = vadd.f32 %v76, %v195
  %v197 = vpop.f32.mrf.mxu0
  %198 = vmatprep.mubr.bf16.mxu0 0
  %199 = vmatmul.mubr.bf16.gmra.mxu0 %v52
  %v200 = vpop.f32.mrf.mxu0
  %v201 = vadd.f32 %v76, %v200
  %v202 = vpop.f32.mrf.mxu0
  %v203 = vpop.f32.mrf.mxu0
  %v204 = vadd.f32 %v76, %v203
  %v205 = vpop.f32.mrf.mxu0
  %206 = vmatprep.mubr.bf16.mxu0 0
  %207 = vmatmul.mubr.bf16.gmra.mxu0 %v53
  %v208 = vpop.f32.mrf.mxu0
  %v209 = vadd.f32 %v76, %v208
  %v210 = vpop.f32.mrf.mxu0
  %v211 = vpop.f32.mrf.mxu0
  %v212 = vadd.f32 %v76, %v211
  %v213 = vpop.f32.mrf.mxu0
  %214 = vmatprep.mubr.bf16.mxu0 0
  %215 = vmatmul.mubr.bf16.gmra.mxu0 %v54
  %v216 = vpop.f32.mrf.mxu0
  %v217 = vadd.f32 %v76, %v216
  %v218 = vpop.f32.mrf.mxu0
  %v219 = vpop.f32.mrf.mxu0
  %v220 = vadd.f32 %v76, %v219
  %v221 = vpop.f32.mrf.mxu0
  %222 = vdwg.mxu0
  %223 = vst [vmem:[%s3] sm:$0xff] %v161
  %224 = vst [vmem:[%s3 + $0x8] sm:$0xff] %v164
  %225 = vst [vmem:[%s3 + $0x10] sm:$0xff] %v169
  %226 = vst [vmem:[%s3 + $0x18] sm:$0xff] %v172
  %227 = vst [vmem:[%s3 + $0x20] sm:$0xff] %v177
  %228 = vst [vmem:[%s3 + $0x28] sm:$0xff] %v180
  %229 = vst [vmem:[%s3 + $0x30] sm:$0xff] %v185
  %230 = vst [vmem:[%s3 + $0x38] sm:$0xff] %v188
  %231 = vst [vmem:[%s3 + $0x40] sm:$0xff] %v193
  %232 = vst [vmem:[%s3 + $0x48] sm:$0xff] %v196
  %233 = vst [vmem:[%s3 + $0x50] sm:$0xff] %v201
  %234 = vst [vmem:[%s3 + $0x58] sm:$0xff] %v204
  %235 = vst [vmem:[%s3 + $0x60] sm:$0xff] %v209
  %236 = vst [vmem:[%s3 + $0x68] sm:$0xff] %v212
  %237 = vst [vmem:[%s3 + $0x70] sm:$0xff] %v217
  %238 = vst [vmem:[%s3 + $0x78] sm:$0xff] %v220
  // Predicated region
  $region14: #{phenomnn_forward.13} parent=0 // pred_check
    _
  $region15: #{phenomnn_forward.13} parent=0 // pred_check_branch
    %240 = sbr.rel (0) target = $region17
  $region16: #{phenomnn_forward.13} parent=0 // pred_region
    _
  $region17: #{phenomnn_forward.13} parent=0 // pred_fallthru
    _
  // Predicated region
  $region18: #{phenomnn_forward.13} parent=0 // pred_check
    _
  $region19: #{phenomnn_forward.13} parent=0 // pred_check_branch
    %242 = sbr.rel (0) target = $region21
  $region20: #{phenomnn_forward.13} parent=0 // pred_region
    _
  $region21: #{phenomnn_forward.13} parent=0 // pred_fallthru
    _

// kernel: phenomnn_forward.12
$region0: #{phenomnn_forward.12}
  #allocation0 [shape = 'u32[]', space=smem, size = 0x4, offset = 0x4, fixed_abs, tag = 'smem constant byte address 0x4 - core index']
  #allocation1 [shape = 'u32[144,128]{1,0:T(1,128)}', space=vmem, size = 0x12000, scoped, tag = 'internal scratch']
  #allocation2 [shape = 'f32[128,128]{1,0:T(8,128)}', space=vmem, size = 0x10000, scoped, tag = 'scratch operand']
  %s0 = inlined_call_operand.vmem [shape: bf16[128,128], index: 0, kind: input, shape index: {}]
  %s1 = inlined_call_operand.vmem [shape: bf16[128,128], index: 1, kind: input, shape index: {}]
  %s2 = inlined_call_operand.vmem [shape: f32[128,128], index: 2, kind: input, shape index: {}]
  %s3 = inlined_call_operand.vmem [shape: bf16[4,128,128], index: 3, kind: input, shape index: {}]
  %s4 = inlined_call_operand.vmem [shape: f32[128,128], index: 4, kind: output, shape index: {0}]
  %s5 = inlined_call_operand.hbm [shape: bf16[4,128,128], index: 5, kind: output, shape index: {1}]
  %6 = xla_tuple %s4, %s5
  %s7 = sld [smem:[#allocation0]]
  $region42: #{phenomnn_forward.12} parent=0
    _
  %s9 = ssub.s32 1, %s7
  %s10 = scalar_select 0, %s9, %s7
  $region1: #{phenomnn_forward.12} parent=0
    #allocation3 [shape = 'u8[131072]{0}', space=vmem, size = 0x20000, scoped, tag = 'output window, operand 1, single buffered']
    #allocation4 [shape = 's32[1]{0}', space=sflag, size = 0x4, scoped, tag = 'scoped memory for phenomnn_forward.12']
    %11 = vsyncpa [#allocation4], 0
    // Predicated region
    $region2: #{phenomnn_forward.12} parent=1 // pred_check
      _
    $region3: #{phenomnn_forward.12} parent=1 // pred_check_branch
      %13 = sbr.rel (0) target = $region5
    $region4: #{phenomnn_forward.12} parent=1 // pred_region
      _
    $region5: #{phenomnn_forward.12} parent=1 // pred_fallthru
      _
    // Predicated region
    $region6: #{phenomnn_forward.12} parent=1 // pred_check
      _
    $region7: #{phenomnn_forward.12} parent=1 // pred_check_branch
      %15 = sbr.rel (0) target = $region9
    $region8: #{phenomnn_forward.12} parent=1 // pred_region
      _
    $region9: #{phenomnn_forward.12} parent=1 // pred_fallthru
      _
    // Predicated region
    $region10: #{phenomnn_forward.12} parent=1 // pred_check
      _
    $region11: #{phenomnn_forward.12} parent=1 // pred_check_branch
      %17 = sbr.rel (0) target = $region13
    $region12: #{phenomnn_forward.12} parent=1 // pred_region
      _
    $region13: #{phenomnn_forward.12} parent=1 // pred_fallthru
      _
    // Predicated region
    $region14: #{phenomnn_forward.12} parent=1 // pred_check
      _
    $region15: #{phenomnn_forward.12} parent=1 // pred_check_branch
      %19 = sbr.rel (0) target = $region17
    $region16: #{phenomnn_forward.12} parent=1 // pred_region
      _
    $region17: #{phenomnn_forward.12} parent=1 // pred_fallthru
      _
    %p21 = scmp.eq.s32.totalorder 0, 0
    // Predicated region
    $region18: #{phenomnn_forward.12} parent=1 // pred_check
      %p22 = pneg %p21
    $region19: #{phenomnn_forward.12} parent=1 // pred_check_branch
      %24 = sbr.rel (%p22) target = $region21
    $region20: #{phenomnn_forward.12} parent=1 // pred_region
      %25 = vst [vmem:[#allocation2] sm:$0xff] 0.0
      %26 = vst [vmem:[#allocation2 + $0x8] sm:$0xff] 0.0
      %27 = vst [vmem:[#allocation2 + $0x10] sm:$0xff] 0.0
      %28 = vst [vmem:[#allocation2 + $0x18] sm:$0xff] 0.0
      %29 = vst [vmem:[#allocation2 + $0x20] sm:$0xff] 0.0
      %30 = vst [vmem:[#allocation2 + $0x28] sm:$0xff] 0.0
      %31 = vst [vmem:[#allocation2 + $0x30] sm:$0xff] 0.0
      %32 = vst [vmem:[#allocation2 + $0x38] sm:$0xff] 0.0
      %33 = vst [vmem:[#allocation2 + $0x40] sm:$0xff] 0.0
      %34 = vst [vmem:[#allocation2 + $0x48] sm:$0xff] 0.0
      %35 = vst [vmem:[#allocation2 + $0x50] sm:$0xff] 0.0
      %36 = vst [vmem:[#allocation2 + $0x58] sm:$0xff] 0.0
      %37 = vst [vmem:[#allocation2 + $0x60] sm:$0xff] 0.0
      %38 = vst [vmem:[#allocation2 + $0x68] sm:$0xff] 0.0
      %39 = vst [vmem:[#allocation2 + $0x70] sm:$0xff] 0.0
      %40 = vst [vmem:[#allocation2 + $0x78] sm:$0xff] 0.0
    $region21: #{phenomnn_forward.12} parent=1 // pred_fallthru
      _
    %v41 = vld [vmem:[#allocation2] sm:$0xff]
    %v42 = vld [vmem:[#allocation2 + $0x8] sm:$0xff]
    %v43 = vld [vmem:[#allocation2 + $0x10] sm:$0xff]
    %v44 = vld [vmem:[#allocation2 + $0x18] sm:$0xff]
    %v45 = vld [vmem:[#allocation2 + $0x20] sm:$0xff]
    %v46 = vld [vmem:[#allocation2 + $0x28] sm:$0xff]
    %v47 = vld [vmem:[#allocation2 + $0x30] sm:$0xff]
    %v48 = vld [vmem:[#allocation2 + $0x38] sm:$0xff]
    %v49 = vld [vmem:[#allocation2 + $0x40] sm:$0xff]
    %v50 = vld [vmem:[#allocation2 + $0x48] sm:$0xff]
    %v51 = vld [vmem:[#allocation2 + $0x50] sm:$0xff]
    %v52 = vld [vmem:[#allocation2 + $0x58] sm:$0xff]
    %v53 = vld [vmem:[#allocation2 + $0x60] sm:$0xff]
    %v54 = vld [vmem:[#allocation2 + $0x68] sm:$0xff]
    %v55 = vld [vmem:[#allocation2 + $0x70] sm:$0xff]
    %v56 = vld [vmem:[#allocation2 + $0x78] sm:$0xff]
    %v57 = vld [vmem:[%s0] sm:$0xf]
    %v58 = vld [vmem:[%s0 + $0x4] sm:$0xf]
    %v59 = vld [vmem:[%s0 + $0x8] sm:$0xf]
    %v60 = vld [vmem:[%s0 + $0xc] sm:$0xf]
    %v61 = vld [vmem:[%s0 + $0x10] sm:$0xf]
    %v62 = vld [vmem:[%s0 + $0x14] sm:$0xf]
    %v63 = vld [vmem:[%s0 + $0x18] sm:$0xf]
    %v64 = vld [vmem:[%s0 + $0x1c] sm:$0xf]
    %v65 = vld [vmem:[%s0 + $0x20] sm:$0xf]
    %v66 = vld [vmem:[%s0 + $0x24] sm:$0xf]
    %v67 = vld [vmem:[%s0 + $0x28] sm:$0xf]
    %v68 = vld [vmem:[%s0 + $0x2c] sm:$0xf]
    %v69 = vld [vmem:[%s0 + $0x30] sm:$0xf]
    %v70 = vld [vmem:[%s0 + $0x34] sm:$0xf]
    %v71 = vld [vmem:[%s0 + $0x38] sm:$0xf]
    %v72 = vld [vmem:[%s0 + $0x3c] sm:$0xf]
    %v73 = vld [vmem:[%s1] sm:$0xf]
    %v74 = vld [vmem:[%s1 + $0x4] sm:$0xf]
    %v75 = vld [vmem:[%s1 + $0x8] sm:$0xf]
    %v76 = vld [vmem:[%s1 + $0xc] sm:$0xf]
    %v77 = vld [vmem:[%s1 + $0x10] sm:$0xf]
    %v78 = vld [vmem:[%s1 + $0x14] sm:$0xf]
    %v79 = vld [vmem:[%s1 + $0x18] sm:$0xf]
    %v80 = vld [vmem:[%s1 + $0x1c] sm:$0xf]
    %v81 = vld [vmem:[%s1 + $0x20] sm:$0xf]
    %v82 = vld [vmem:[%s1 + $0x24] sm:$0xf]
    %v83 = vld [vmem:[%s1 + $0x28] sm:$0xf]
    %v84 = vld [vmem:[%s1 + $0x2c] sm:$0xf]
    %v85 = vld [vmem:[%s1 + $0x30] sm:$0xf]
    %v86 = vld [vmem:[%s1 + $0x34] sm:$0xf]
    %v87 = vld [vmem:[%s1 + $0x38] sm:$0xf]
    %v88 = vld [vmem:[%s1 + $0x3c] sm:$0xf]
    %v105 = vunpack.c.l.b16 %v57
    %v106 = vunpack.c.l.b16 %v58
    %v107 = vunpack.c.l.b16 %v59
    %v108 = vunpack.c.l.b16 %v60
    %v109 = vunpack.c.l.b16 %v61
    %v110 = vunpack.c.l.b16 %v62
    %v111 = vunpack.c.l.b16 %v63
    %v112 = vunpack.c.l.b16 %v64
    %v113 = vunpack.c.l.b16 %v65
    %v114 = vunpack.c.l.b16 %v66
    %v115 = vunpack.c.l.b16 %v67
    %v116 = vunpack.c.l.b16 %v68
    %v117 = vunpack.c.l.b16 %v69
    %v118 = vunpack.c.l.b16 %v70
    %v119 = vunpack.c.l.b16 %v71
    %v120 = vunpack.c.l.b16 %v72
    %v121 = vpack.c.b16 %v106, %v105
    %v122 = vpack.c.b16 %v108, %v107
    %v123 = vpack.c.b16 %v110, %v109
    %v124 = vpack.c.b16 %v112, %v111
    %v125 = vpack.c.b16 %v114, %v113
    %v126 = vpack.c.b16 %v116, %v115
    %v127 = vpack.c.b16 %v118, %v117
    %v128 = vpack.c.b16 %v120, %v119
    %v153 = vunpack.c.l.b16 %v73
    %v154 = vunpack.c.l.b16 %v74
    %v155 = vunpack.c.l.b16 %v75
    %v156 = vunpack.c.l.b16 %v76
    %v157 = vunpack.c.l.b16 %v77
    %v158 = vunpack.c.l.b16 %v78
    %v159 = vunpack.c.l.b16 %v79
    %v160 = vunpack.c.l.b16 %v80
    %v161 = vunpack.c.l.b16 %v81
    %v162 = vunpack.c.l.b16 %v82
    %v163 = vunpack.c.l.b16 %v83
    %v164 = vunpack.c.l.b16 %v84
    %v165 = vunpack.c.l.b16 %v85
    %v166 = vunpack.c.l.b16 %v86
    %v167 = vunpack.c.l.b16 %v87
    %v168 = vunpack.c.l.b16 %v88
    %v169 = vpack.c.b16 %v154, %v153
    %v170 = vpack.c.b16 %v156, %v155
    %v171 = vpack.c.b16 %v158, %v157
    %v172 = vpack.c.b16 %v160, %v159
    %v173 = vpack.c.b16 %v162, %v161
    %v174 = vpack.c.b16 %v164, %v163
    %v175 = vpack.c.b16 %v166, %v165
    %v176 = vpack.c.b16 %v168, %v167
    %185 = vmatprep.subr.bf16.mxu0 0
    %186 = vmatpush1.bf16.msra.mxu0 %v176
    %187 = vmatprep.subr.bf16.mxu0 0
    %188 = vmatpush1.bf16.msra.mxu0 %v175
    %189 = vmatprep.subr.bf16.mxu0 0
    %190 = vmatpush1.bf16.msra.mxu0 %v174
    %191 = vmatprep.subr.bf16.mxu0 0
    %192 = vmatpush1.bf16.msra.mxu0 %v173
    %193 = vmatprep.subr.bf16.mxu0 0
    %194 = vmatpush1.bf16.msra.mxu0 %v172
    %195 = vmatprep.subr.bf16.mxu0 0
    %196 = vmatpush1.bf16.msra.mxu0 %v171
    %197 = vmatprep.subr.bf16.mxu0 0
    %198 = vmatpush1.bf16.msra.mxu0 %v170
    %199 = vmatprep.subr.bf16.mxu0 0
    %200 = vmatpush1.bf16.msra.mxu0 %v169
    %201 = vmatprep.subr.bf16.mxu0 0
    %202 = vmatpush2.bf16.msra.mxu0 0
    %203 = vmatprep.subr.bf16.mxu0 0
    %204 = vmatpush2.bf16.msra.mxu0 0
    %205 = vmatprep.subr.bf16.mxu0 0
    %206 = vmatpush2.bf16.msra.mxu0 0
    %207 = vmatprep.subr.bf16.mxu0 0
    %208 = vmatpush2.bf16.msra.mxu0 0
    %209 = vmatprep.subr.bf16.mxu0 0
    %210 = vmatpush2.bf16.msra.mxu0 0
    %211 = vmatprep.subr.bf16.mxu0 0
    %212 = vmatpush2.bf16.msra.mxu0 0
    %213 = vmatprep.subr.bf16.mxu0 0
    %214 = vmatpush2.bf16.msra.mxu0 0
    %215 = vmatprep.subr.bf16.mxu0 0
    %216 = vmatpush2.bf16.msra.mxu0 0
    %217 = vmatprep.mubr.bf16.mxu0 0
    %218 = vmatmul.mubr.bf16.gmra.mxu0 %v121
    %v219 = vpop.f32.mrf.mxu0
    %v220 = vadd.f32 0.0, %v219
    %v221 = vpop.f32.mrf.mxu0
    %v222 = vpop.f32.mrf.mxu0
    %v223 = vadd.f32 0.0, %v222
    %v224 = vpop.f32.mrf.mxu0
    %225 = vmatprep.mubr.bf16.mxu0 0
    %226 = vmatmul.mubr.bf16.gmra.mxu0 %v122
    %v227 = vpop.f32.mrf.mxu0
    %v228 = vadd.f32 0.0, %v227
    %v229 = vpop.f32.mrf.mxu0
    %v230 = vpop.f32.mrf.mxu0
    %v231 = vadd.f32 0.0, %v230
    %v232 = vpop.f32.mrf.mxu0
    %233 = vmatprep.mubr.bf16.mxu0 0
    %234 = vmatmul.mubr.bf16.gmra.mxu0 %v123
    %v235 = vpop.f32.mrf.mxu0
    %v236 = vadd.f32 0.0, %v235
    %v237 = vpop.f32.mrf.mxu0
    %v238 = vpop.f32.mrf.mxu0
    %v239 = vadd.f32 0.0, %v238
    %v240 = vpop.f32.mrf.mxu0
    %241 = vmatprep.mubr.bf16.mxu0 0
    %242 = vmatmul.mubr.bf16.gmra.mxu0 %v124
    %v243 = vpop.f32.mrf.mxu0
    %v244 = vadd.f32 0.0, %v243
    %v245 = vpop.f32.mrf.mxu0
    %v246 = vpop.f32.mrf.mxu0
    %v247 = vadd.f32 0.0, %v246
    %v248 = vpop.f32.mrf.mxu0
    %249 = vmatprep.mubr.bf16.mxu0 0
    %250 = vmatmul.mubr.bf16.gmra.mxu0 %v125
    %v251 = vpop.f32.mrf.mxu0
    %v252 = vadd.f32 0.0, %v251
    %v253 = vpop.f32.mrf.mxu0
    %v254 = vpop.f32.mrf.mxu0
    %v255 = vadd.f32 0.0, %v254
    %v256 = vpop.f32.mrf.mxu0
    %257 = vmatprep.mubr.bf16.mxu0 0
    %258 = vmatmul.mubr.bf16.gmra.mxu0 %v126
    %v259 = vpop.f32.mrf.mxu0
    %v260 = vadd.f32 0.0, %v259
    %v261 = vpop.f32.mrf.mxu0
    %v262 = vpop.f32.mrf.mxu0
    %v263 = vadd.f32 0.0, %v262
    %v264 = vpop.f32.mrf.mxu0
    %265 = vmatprep.mubr.bf16.mxu0 0
    %266 = vmatmul.mubr.bf16.gmra.mxu0 %v127
    %v267 = vpop.f32.mrf.mxu0
    %v268 = vadd.f32 0.0, %v267
    %v269 = vpop.f32.mrf.mxu0
    %v270 = vpop.f32.mrf.mxu0
    %v271 = vadd.f32 0.0, %v270
    %v272 = vpop.f32.mrf.mxu0
    %273 = vmatprep.mubr.bf16.mxu0 0
    %274 = vmatmul.mubr.bf16.gmra.mxu0 %v128
    %v275 = vpop.f32.mrf.mxu0
    %v276 = vadd.f32 0.0, %v275
    %v277 = vpop.f32.mrf.mxu0
    %v278 = vpop.f32.mrf.mxu0
    %v279 = vadd.f32 0.0, %v278
    %v280 = vpop.f32.mrf.mxu0
    %281 = vdwg.mxu0
    %v282 = vadd.f32 %v41, %v220
    %v283 = vadd.f32 %v42, %v223
    %v284 = vadd.f32 %v43, %v228
    %v285 = vadd.f32 %v44, %v231
    %v286 = vadd.f32 %v45, %v236
    %v287 = vadd.f32 %v46, %v239
    %v288 = vadd.f32 %v47, %v244
    %v289 = vadd.f32 %v48, %v247
    %v290 = vadd.f32 %v49, %v252
    %v291 = vadd.f32 %v50, %v255
    %v292 = vadd.f32 %v51, %v260
    %v293 = vadd.f32 %v52, %v263
    %v294 = vadd.f32 %v53, %v268
    %v295 = vadd.f32 %v54, %v271
    %v296 = vadd.f32 %v55, %v276
    %v297 = vadd.f32 %v56, %v279
    %298 = vst [vmem:[#allocation2] sm:$0xff] %v282
    %299 = vst [vmem:[#allocation2 + $0x8] sm:$0xff] %v283
    %300 = vst [vmem:[#allocation2 + $0x10] sm:$0xff] %v284
    %301 = vst [vmem:[#allocation2 + $0x18] sm:$0xff] %v285
    %302 = vst [vmem:[#allocation2 + $0x20] sm:$0xff] %v286
    %303 = vst [vmem:[#allocation2 + $0x28] sm:$0xff] %v287
    %304 = vst [vmem:[#allocation2 + $0x30] sm:$0xff] %v288
    %305 = vst [vmem:[#allocation2 + $0x38] sm:$0xff] %v289
    %306 = vst [vmem:[#allocation2 + $0x40] sm:$0xff] %v290
    %307 = vst [vmem:[#allocation2 + $0x48] sm:$0xff] %v291
    %308 = vst [vmem:[#allocation2 + $0x50] sm:$0xff] %v292
    %309 = vst [vmem:[#allocation2 + $0x58] sm:$0xff] %v293
    %310 = vst [vmem:[#allocation2 + $0x60] sm:$0xff] %v294
    %311 = vst [vmem:[#allocation2 + $0x68] sm:$0xff] %v295
    %312 = vst [vmem:[#allocation2 + $0x70] sm:$0xff] %v296
    %313 = vst [vmem:[#allocation2 + $0x78] sm:$0xff] %v297
    // Predicated region
    $region22: #{phenomnn_forward.12} parent=1 // pred_check
      %p314 = pneg %p21
    $region23: #{phenomnn_forward.12} parent=1 // pred_check_branch
      %316 = sbr.rel (%p314) target = $region25
    $region24: #{phenomnn_forward.12} parent=1 // pred_region
      %v317 = vld [vmem:[%s2] sm:$0xff]
      %v318 = vld [vmem:[%s2 + $0x8] sm:$0xff]
      %v319 = vld [vmem:[%s2 + $0x10] sm:$0xff]
      %v320 = vld [vmem:[%s2 + $0x18] sm:$0xff]
      %v321 = vld [vmem:[%s2 + $0x20] sm:$0xff]
      %v322 = vld [vmem:[%s2 + $0x28] sm:$0xff]
      %v323 = vld [vmem:[%s2 + $0x30] sm:$0xff]
      %v324 = vld [vmem:[%s2 + $0x38] sm:$0xff]
      %v325 = vld [vmem:[%s2 + $0x40] sm:$0xff]
      %v326 = vld [vmem:[%s2 + $0x48] sm:$0xff]
      %v327 = vld [vmem:[%s2 + $0x50] sm:$0xff]
      %v328 = vld [vmem:[%s2 + $0x58] sm:$0xff]
      %v329 = vld [vmem:[%s2 + $0x60] sm:$0xff]
      %v330 = vld [vmem:[%s2 + $0x68] sm:$0xff]
      %v331 = vld [vmem:[%s2 + $0x70] sm:$0xff]
      %v332 = vld [vmem:[%s2 + $0x78] sm:$0xff]
      %v333 = vmul.f32 %v317, 0.6666667
      %v334 = vmul.f32 %v318, 0.6666667
      %v335 = vmul.f32 %v319, 0.6666667
      %v336 = vmul.f32 %v320, 0.6666667
      %v337 = vmul.f32 %v321, 0.6666667
      %v338 = vmul.f32 %v322, 0.6666667
      %v339 = vmul.f32 %v323, 0.6666667
      %v340 = vmul.f32 %v324, 0.6666667
      %v341 = vmul.f32 %v325, 0.6666667
      %v342 = vmul.f32 %v326, 0.6666667
      %v343 = vmul.f32 %v327, 0.6666667
      %v344 = vmul.f32 %v328, 0.6666667
      %v345 = vmul.f32 %v329, 0.6666667
      %v346 = vmul.f32 %v330, 0.6666667
      %v347 = vmul.f32 %v331, 0.6666667
      %v348 = vmul.f32 %v332, 0.6666667
      %v349 = vld [vmem:[#allocation2] sm:$0xff]
      %v350 = vld [vmem:[#allocation2 + $0x8] sm:$0xff]
      %v351 = vld [vmem:[#allocation2 + $0x10] sm:$0xff]
      %v352 = vld [vmem:[#allocation2 + $0x18] sm:$0xff]
      %v353 = vld [vmem:[#allocation2 + $0x20] sm:$0xff]
      %v354 = vld [vmem:[#allocation2 + $0x28] sm:$0xff]
      %v355 = vld [vmem:[#allocation2 + $0x30] sm:$0xff]
      %v356 = vld [vmem:[#allocation2 + $0x38] sm:$0xff]
      %v357 = vld [vmem:[#allocation2 + $0x40] sm:$0xff]
      %v358 = vld [vmem:[#allocation2 + $0x48] sm:$0xff]
      %v359 = vld [vmem:[#allocation2 + $0x50] sm:$0xff]
      %v360 = vld [vmem:[#allocation2 + $0x58] sm:$0xff]
      %v361 = vld [vmem:[#allocation2 + $0x60] sm:$0xff]
      %v362 = vld [vmem:[#allocation2 + $0x68] sm:$0xff]
      %v363 = vld [vmem:[#allocation2 + $0x70] sm:$0xff]
      %v364 = vld [vmem:[#allocation2 + $0x78] sm:$0xff]
      %v365 = vadd.f32 %v333, %v349
      %v366 = vadd.f32 %v334, %v350
      %v367 = vadd.f32 %v335, %v351
      %v368 = vadd.f32 %v336, %v352
      %v369 = vadd.f32 %v337, %v353
      %v370 = vadd.f32 %v338, %v354
      %v371 = vadd.f32 %v339, %v355
      %v372 = vadd.f32 %v340, %v356
      %v373 = vadd.f32 %v341, %v357
      %v374 = vadd.f32 %v342, %v358
      %v375 = vadd.f32 %v343, %v359
      %v376 = vadd.f32 %v344, %v360
      %v377 = vadd.f32 %v345, %v361
      %v378 = vadd.f32 %v346, %v362
      %v379 = vadd.f32 %v347, %v363
      %v380 = vadd.f32 %v348, %v364
      %381 = vst [vmem:[%s4] sm:$0xff] %v365
      %382 = vst [vmem:[%s4 + $0x8] sm:$0xff] %v366
      %383 = vst [vmem:[%s4 + $0x10] sm:$0xff] %v367
      %384 = vst [vmem:[%s4 + $0x18] sm:$0xff] %v368
      %385 = vst [vmem:[%s4 + $0x20] sm:$0xff] %v369
      %386 = vst [vmem:[%s4 + $0x28] sm:$0xff] %v370
      %387 = vst [vmem:[%s4 + $0x30] sm:$0xff] %v371
      %388 = vst [vmem:[%s4 + $0x38] sm:$0xff] %v372
      %389 = vst [vmem:[%s4 + $0x40] sm:$0xff] %v373
      %390 = vst [vmem:[%s4 + $0x48] sm:$0xff] %v374
      %391 = vst [vmem:[%s4 + $0x50] sm:$0xff] %v375
      %392 = vst [vmem:[%s4 + $0x58] sm:$0xff] %v376
      %393 = vst [vmem:[%s4 + $0x60] sm:$0xff] %v377
      %394 = vst [vmem:[%s4 + $0x68] sm:$0xff] %v378
      %395 = vst [vmem:[%s4 + $0x70] sm:$0xff] %v379
      %396 = vst [vmem:[%s4 + $0x78] sm:$0xff] %v380
      %v397 = vpack.c.bf16 %v366, %v365
      %v398 = vpack.c.bf16 %v368, %v367
      %v399 = vpack.c.bf16 %v370, %v369
      %v400 = vpack.c.bf16 %v372, %v371
      %v401 = vpack.c.bf16 %v374, %v373
      %v402 = vpack.c.bf16 %v376, %v375
      %v403 = vpack.c.bf16 %v378, %v377
      %v404 = vpack.c.bf16 %v380, %v379
      %v405 = vld [vmem:[%s3] sm:$0xf]
      %v406 = vld [vmem:[%s3 + $0x4] sm:$0xf]
      %v407 = vld [vmem:[%s3 + $0x8] sm:$0xf]
      %v408 = vld [vmem:[%s3 + $0xc] sm:$0xf]
      %v409 = vld [vmem:[%s3 + $0x10] sm:$0xf]
      %v410 = vld [vmem:[%s3 + $0x14] sm:$0xf]
      %v411 = vld [vmem:[%s3 + $0x18] sm:$0xf]
      %v412 = vld [vmem:[%s3 + $0x1c] sm:$0xf]
      %v413 = vld [vmem:[%s3 + $0x20] sm:$0xf]
      %v414 = vld [vmem:[%s3 + $0x24] sm:$0xf]
      %v415 = vld [vmem:[%s3 + $0x28] sm:$0xf]
      %v416 = vld [vmem:[%s3 + $0x2c] sm:$0xf]
      %v417 = vld [vmem:[%s3 + $0x30] sm:$0xf]
      %v418 = vld [vmem:[%s3 + $0x34] sm:$0xf]
      %v419 = vld [vmem:[%s3 + $0x38] sm:$0xf]
      %v420 = vld [vmem:[%s3 + $0x3c] sm:$0xf]
      %v437 = vunpack.c.l.b16 %v405
      %v438 = vunpack.c.l.b16 %v406
      %v439 = vunpack.c.l.b16 %v407
      %v440 = vunpack.c.l.b16 %v408
      %v441 = vunpack.c.l.b16 %v409
      %v442 = vunpack.c.l.b16 %v410
      %v443 = vunpack.c.l.b16 %v411
      %v444 = vunpack.c.l.b16 %v412
      %v445 = vunpack.c.l.b16 %v413
      %v446 = vunpack.c.l.b16 %v414
      %v447 = vunpack.c.l.b16 %v415
      %v448 = vunpack.c.l.b16 %v416
      %v449 = vunpack.c.l.b16 %v417
      %v450 = vunpack.c.l.b16 %v418
      %v451 = vunpack.c.l.b16 %v419
      %v452 = vunpack.c.l.b16 %v420
      %v453 = vpack.c.b16 %v438, %v437
      %v454 = vpack.c.b16 %v440, %v439
      %v455 = vpack.c.b16 %v442, %v441
      %v456 = vpack.c.b16 %v444, %v443
      %v457 = vpack.c.b16 %v446, %v445
      %v458 = vpack.c.b16 %v448, %v447
      %v459 = vpack.c.b16 %v450, %v449
      %v460 = vpack.c.b16 %v452, %v451
      %469 = vmatprep.subr.bf16.mxu0 0
      %470 = vmatpush1.bf16.msra.mxu0 %v460
      %471 = vmatprep.subr.bf16.mxu0 0
      %472 = vmatpush1.bf16.msra.mxu0 %v459
      %473 = vmatprep.subr.bf16.mxu0 0
      %474 = vmatpush1.bf16.msra.mxu0 %v458
      %475 = vmatprep.subr.bf16.mxu0 0
      %476 = vmatpush1.bf16.msra.mxu0 %v457
      %477 = vmatprep.subr.bf16.mxu0 0
      %478 = vmatpush1.bf16.msra.mxu0 %v456
      %479 = vmatprep.subr.bf16.mxu0 0
      %480 = vmatpush1.bf16.msra.mxu0 %v455
      %481 = vmatprep.subr.bf16.mxu0 0
      %482 = vmatpush1.bf16.msra.mxu0 %v454
      %483 = vmatprep.subr.bf16.mxu0 0
      %484 = vmatpush1.bf16.msra.mxu0 %v453
      %485 = vmatprep.subr.bf16.mxu0 0
      %486 = vmatpush2.bf16.msra.mxu0 0
      %487 = vmatprep.subr.bf16.mxu0 0
      %488 = vmatpush2.bf16.msra.mxu0 0
      %489 = vmatprep.subr.bf16.mxu0 0
      %490 = vmatpush2.bf16.msra.mxu0 0
      %491 = vmatprep.subr.bf16.mxu0 0
      %492 = vmatpush2.bf16.msra.mxu0 0
      %493 = vmatprep.subr.bf16.mxu0 0
      %494 = vmatpush2.bf16.msra.mxu0 0
      %495 = vmatprep.subr.bf16.mxu0 0
      %496 = vmatpush2.bf16.msra.mxu0 0
      %497 = vmatprep.subr.bf16.mxu0 0
      %498 = vmatpush2.bf16.msra.mxu0 0
      %499 = vmatprep.subr.bf16.mxu0 0
      %500 = vmatpush2.bf16.msra.mxu0 0
      %501 = vmatprep.mubr.bf16.mxu0 0
      %502 = vmatmul.mubr.bf16.gmra.mxu0 %v397
      %v503 = vpop.f32.mrf.mxu0
      %v504 = vadd.f32 0.0, %v503
      %v505 = vpop.f32.mrf.mxu0
      %v506 = vpop.f32.mrf.mxu0
      %v507 = vadd.f32 0.0, %v506
      %v508 = vpop.f32.mrf.mxu0
      %509 = vmatprep.mubr.bf16.mxu0 0
      %510 = vmatmul.mubr.bf16.gmra.mxu0 %v398
      %v511 = vpop.f32.mrf.mxu0
      %v512 = vadd.f32 0.0, %v511
      %v513 = vpop.f32.mrf.mxu0
      %v514 = vpop.f32.mrf.mxu0
      %v515 = vadd.f32 0.0, %v514
      %v516 = vpop.f32.mrf.mxu0
      %517 = vmatprep.mubr.bf16.mxu0 0
      %518 = vmatmul.mubr.bf16.gmra.mxu0 %v399
      %v519 = vpop.f32.mrf.mxu0
      %v520 = vadd.f32 0.0, %v519
      %v521 = vpop.f32.mrf.mxu0
      %v522 = vpop.f32.mrf.mxu0
      %v523 = vadd.f32 0.0, %v522
      %v524 = vpop.f32.mrf.mxu0
      %525 = vmatprep.mubr.bf16.mxu0 0
      %526 = vmatmul.mubr.bf16.gmra.mxu0 %v400
      %v527 = vpop.f32.mrf.mxu0
      %v528 = vadd.f32 0.0, %v527
      %v529 = vpop.f32.mrf.mxu0
      %v530 = vpop.f32.mrf.mxu0
      %v531 = vadd.f32 0.0, %v530
      %v532 = vpop.f32.mrf.mxu0
      %533 = vmatprep.mubr.bf16.mxu0 0
      %534 = vmatmul.mubr.bf16.gmra.mxu0 %v401
      %v535 = vpop.f32.mrf.mxu0
      %v536 = vadd.f32 0.0, %v535
      %v537 = vpop.f32.mrf.mxu0
      %v538 = vpop.f32.mrf.mxu0
      %v539 = vadd.f32 0.0, %v538
      %v540 = vpop.f32.mrf.mxu0
      %541 = vmatprep.mubr.bf16.mxu0 0
      %542 = vmatmul.mubr.bf16.gmra.mxu0 %v402
      %v543 = vpop.f32.mrf.mxu0
      %v544 = vadd.f32 0.0, %v543
      %v545 = vpop.f32.mrf.mxu0
      %v546 = vpop.f32.mrf.mxu0
      %v547 = vadd.f32 0.0, %v546
      %v548 = vpop.f32.mrf.mxu0
      %549 = vmatprep.mubr.bf16.mxu0 0
      %550 = vmatmul.mubr.bf16.gmra.mxu0 %v403
      %v551 = vpop.f32.mrf.mxu0
      %v552 = vadd.f32 0.0, %v551
      %v553 = vpop.f32.mrf.mxu0
      %v554 = vpop.f32.mrf.mxu0
      %v555 = vadd.f32 0.0, %v554
      %v556 = vpop.f32.mrf.mxu0
      %557 = vmatprep.mubr.bf16.mxu0 0
      %558 = vmatmul.mubr.bf16.gmra.mxu0 %v404
      %v559 = vpop.f32.mrf.mxu0
      %v560 = vadd.f32 0.0, %v559
      %v561 = vpop.f32.mrf.mxu0
      %v562 = vpop.f32.mrf.mxu0
      %v563 = vadd.f32 0.0, %v562
      %v564 = vpop.f32.mrf.mxu0
      %565 = vdwg.mxu0
      %v566 = vpack.c.bf16 %v507, %v504
      %v567 = vpack.c.bf16 %v515, %v512
      %v568 = vpack.c.bf16 %v523, %v520
      %v569 = vpack.c.bf16 %v531, %v528
      %v570 = vpack.c.bf16 %v539, %v536
      %v571 = vpack.c.bf16 %v547, %v544
      %v572 = vpack.c.bf16 %v555, %v552
      %v573 = vpack.c.bf16 %v563, %v560
      %v582 = vunpack.c.l.b16 %v566
      %v583 = vunpack.c.h.b16 %v566
      %v584 = vunpack.c.l.b16 %v567
      %v585 = vunpack.c.h.b16 %v567
      %v586 = vunpack.c.l.b16 %v568
      %v587 = vunpack.c.h.b16 %v568
      %v588 = vunpack.c.l.b16 %v569
      %v589 = vunpack.c.h.b16 %v569
      %v590 = vunpack.c.l.b16 %v570
      %v591 = vunpack.c.h.b16 %v570
      %v592 = vunpack.c.l.b16 %v571
      %v593 = vunpack.c.h.b16 %v571
      %v594 = vunpack.c.l.b16 %v572
      %v595 = vunpack.c.h.b16 %v572
      %v596 = vunpack.c.l.b16 %v573
      %v597 = vunpack.c.h.b16 %v573
      %v598 = vpack.c.b16 %v582, %v582
      %v599 = vpack.c.b16 %v583, %v583
      %v600 = vpack.c.b16 %v584, %v584
      %v601 = vpack.c.b16 %v585, %v585
      %v602 = vpack.c.b16 %v586, %v586
      %v603 = vpack.c.b16 %v587, %v587
      %v604 = vpack.c.b16 %v588, %v588
      %v605 = vpack.c.b16 %v589, %v589
      %v606 = vpack.c.b16 %v590, %v590
      %v607 = vpack.c.b16 %v591, %v591
      %v608 = vpack.c.b16 %v592, %v592
      %v609 = vpack.c.b16 %v593, %v593
      %v610 = vpack.c.b16 %v594, %v594
      %v611 = vpack.c.b16 %v595, %v595
      %v612 = vpack.c.b16 %v596, %v596
      %v613 = vpack.c.b16 %v597, %v597
      %630 = vst [vmem:[#allocation3] sm:$0xf] %v598
      %631 = vst [vmem:[#allocation3 + $0x4] sm:$0xf] %v599
      %632 = vst [vmem:[#allocation3 + $0x8] sm:$0xf] %v600
      %633 = vst [vmem:[#allocation3 + $0xc] sm:$0xf] %v601
      %634 = vst [vmem:[#allocation3 + $0x10] sm:$0xf] %v602
      %635 = vst [vmem:[#allocation3 + $0x14] sm:$0xf] %v603
      %636 = vst [vmem:[#allocation3 + $0x18] sm:$0xf] %v604
      %637 = vst [vmem:[#allocation3 + $0x1c] sm:$0xf] %v605
      %638 = vst [vmem:[#allocation3 + $0x20] sm:$0xf] %v606
      %639 = vst [vmem:[#allocation3 + $0x24] sm:$0xf] %v607
      %640 = vst [vmem:[#allocation3 + $0x28] sm:$0xf] %v608
      %641 = vst [vmem:[#allocation3 + $0x2c] sm:$0xf] %v609
      %642 = vst [vmem:[#allocation3 + $0x30] sm:$0xf] %v610
      %643 = vst [vmem:[#allocation3 + $0x34] sm:$0xf] %v611
      %644 = vst [vmem:[#allocation3 + $0x38] sm:$0xf] %v612
      %645 = vst [vmem:[#allocation3 + $0x3c] sm:$0xf] %v613
      %s646 = scalar_lea.vmem %s3, 64
      %v647 = vld [vmem:[%s646] sm:$0xf]
      %v648 = vld [vmem:[%s646 + $0x4] sm:$0xf]
      %v649 = vld [vmem:[%s646 + $0x8] sm:$0xf]
      %v650 = vld [vmem:[%s646 + $0xc] sm:$0xf]
      %v651 = vld [vmem:[%s646 + $0x10] sm:$0xf]
      %v652 = vld [vmem:[%s646 + $0x14] sm:$0xf]
      %v653 = vld [vmem:[%s646 + $0x18] sm:$0xf]
      %v654 = vld [vmem:[%s646 + $0x1c] sm:$0xf]
      %v655 = vld [vmem:[%s646 + $0x20] sm:$0xf]
      %v656 = vld [vmem:[%s646 + $0x24] sm:$0xf]
      %v657 = vld [vmem:[%s646 + $0x28] sm:$0xf]
      %v658 = vld [vmem:[%s646 + $0x2c] sm:$0xf]
      %v659 = vld [vmem:[%s646 + $0x30] sm:$0xf]
      %v660 = vld [vmem:[%s646 + $0x34] sm:$0xf]
      %v661 = vld [vmem:[%s646 + $0x38] sm:$0xf]
      %v662 = vld [vmem:[%s646 + $0x3c] sm:$0xf]
      %v679 = vunpack.c.l.b16 %v647
      %v680 = vunpack.c.l.b16 %v648
      %v681 = vunpack.c.l.b16 %v649
      %v682 = vunpack.c.l.b16 %v650
      %v683 = vunpack.c.l.b16 %v651
      %v684 = vunpack.c.l.b16 %v652
      %v685 = vunpack.c.l.b16 %v653
      %v686 = vunpack.c.l.b16 %v654
      %v687 = vunpack.c.l.b16 %v655
      %v688 = vunpack.c.l.b16 %v656
      %v689 = vunpack.c.l.b16 %v657
      %v690 = vunpack.c.l.b16 %v658
      %v691 = vunpack.c.l.b16 %v659
      %v692 = vunpack.c.l.b16 %v660
      %v693 = vunpack.c.l.b16 %v661
      %v694 = vunpack.c.l.b16 %v662
      %v695 = vpack.c.b16 %v680, %v679
      %v696 = vpack.c.b16 %v682, %v681
      %v697 = vpack.c.b16 %v684, %v683
      %v698 = vpack.c.b16 %v686, %v685
      %v699 = vpack.c.b16 %v688, %v687
      %v700 = vpack.c.b16 %v690, %v689
      %v701 = vpack.c.b16 %v692, %v691
      %v702 = vpack.c.b16 %v694, %v693
      %711 = vmatprep.subr.bf16.mxu0 0
      %712 = vmatpush1.bf16.msra.mxu0 %v702
      %713 = vmatprep.subr.bf16.mxu0 0
      %714 = vmatpush1.bf16.msra.mxu0 %v701
      %715 = vmatprep.subr.bf16.mxu0 0
      %716 = vmatpush1.bf16.msra.mxu0 %v700
      %717 = vmatprep.subr.bf16.mxu0 0
      %718 = vmatpush1.bf16.msra.mxu0 %v699
      %719 = vmatprep.subr.bf16.mxu0 0
      %720 = vmatpush1.bf16.msra.mxu0 %v698
      %721 = vmatprep.subr.bf16.mxu0 0
      %722 = vmatpush1.bf16.msra.mxu0 %v697
      %723 = vmatprep.subr.bf16.mxu0 0
      %724 = vmatpush1.bf16.msra.mxu0 %v696
      %725 = vmatprep.subr.bf16.mxu0 0
      %726 = vmatpush1.bf16.msra.mxu0 %v695
      %727 = vmatprep.subr.bf16.mxu0 0
      %728 = vmatpush2.bf16.msra.mxu0 0
      %729 = vmatprep.subr.bf16.mxu0 0
      %730 = vmatpush2.bf16.msra.mxu0 0
      %731 = vmatprep.subr.bf16.mxu0 0
      %732 = vmatpush2.bf16.msra.mxu0 0
      %733 = vmatprep.subr.bf16.mxu0 0
      %734 = vmatpush2.bf16.msra.mxu0 0
      %735 = vmatprep.subr.bf16.mxu0 0
      %736 = vmatpush2.bf16.msra.mxu0 0
      %737 = vmatprep.subr.bf16.mxu0 0
      %738 = vmatpush2.bf16.msra.mxu0 0
      %739 = vmatprep.subr.bf16.mxu0 0
      %740 = vmatpush2.bf16.msra.mxu0 0
      %741 = vmatprep.subr.bf16.mxu0 0
      %742 = vmatpush2.bf16.msra.mxu0 0
      %743 = vmatprep.mubr.bf16.mxu0 0
      %744 = vmatmul.mubr.bf16.gmra.mxu0 %v397
      %v745 = vpop.f32.mrf.mxu0
      %v746 = vadd.f32 0.0, %v745
      %v747 = vpop.f32.mrf.mxu0
      %v748 = vpop.f32.mrf.mxu0
      %v749 = vadd.f32 0.0, %v748
      %v750 = vpop.f32.mrf.mxu0
      %751 = vmatprep.mubr.bf16.mxu0 0
      %752 = vmatmul.mubr.bf16.gmra.mxu0 %v398
      %v753 = vpop.f32.mrf.mxu0
      %v754 = vadd.f32 0.0, %v753
      %v755 = vpop.f32.mrf.mxu0
      %v756 = vpop.f32.mrf.mxu0
      %v757 = vadd.f32 0.0, %v756
      %v758 = vpop.f32.mrf.mxu0
      %759 = vmatprep.mubr.bf16.mxu0 0
      %760 = vmatmul.mubr.bf16.gmra.mxu0 %v399
      %v761 = vpop.f32.mrf.mxu0
      %v762 = vadd.f32 0.0, %v761
      %v763 = vpop.f32.mrf.mxu0
      %v764 = vpop.f32.mrf.mxu0
      %v765 = vadd.f32 0.0, %v764
      %v766 = vpop.f32.mrf.mxu0
      %767 = vmatprep.mubr.bf16.mxu0 0
      %768 = vmatmul.mubr.bf16.gmra.mxu0 %v400
      %v769 = vpop.f32.mrf.mxu0
      %v770 = vadd.f32 0.0, %v769
      %v771 = vpop.f32.mrf.mxu0
      %v772 = vpop.f32.mrf.mxu0
      %v773 = vadd.f32 0.0, %v772
      %v774 = vpop.f32.mrf.mxu0
      %775 = vmatprep.mubr.bf16.mxu0 0
      %776 = vmatmul.mubr.bf16.gmra.mxu0 %v401
      %v777 = vpop.f32.mrf.mxu0
      %v778 = vadd.f32 0.0, %v777
      %v779 = vpop.f32.mrf.mxu0
      %v780 = vpop.f32.mrf.mxu0
      %v781 = vadd.f32 0.0, %v780
      %v782 = vpop.f32.mrf.mxu0
      %783 = vmatprep.mubr.bf16.mxu0 0
      %784 = vmatmul.mubr.bf16.gmra.mxu0 %v402
      %v785 = vpop.f32.mrf.mxu0
      %v786 = vadd.f32 0.0, %v785
      %v787 = vpop.f32.mrf.mxu0
      %v788 = vpop.f32.mrf.mxu0
      %v789 = vadd.f32 0.0, %v788
      %v790 = vpop.f32.mrf.mxu0
      %791 = vmatprep.mubr.bf16.mxu0 0
      %792 = vmatmul.mubr.bf16.gmra.mxu0 %v403
      %v793 = vpop.f32.mrf.mxu0
      %v794 = vadd.f32 0.0, %v793
      %v795 = vpop.f32.mrf.mxu0
      %v796 = vpop.f32.mrf.mxu0
      %v797 = vadd.f32 0.0, %v796
      %v798 = vpop.f32.mrf.mxu0
      %799 = vmatprep.mubr.bf16.mxu0 0
      %800 = vmatmul.mubr.bf16.gmra.mxu0 %v404
      %v801 = vpop.f32.mrf.mxu0
      %v802 = vadd.f32 0.0, %v801
      %v803 = vpop.f32.mrf.mxu0
      %v804 = vpop.f32.mrf.mxu0
      %v805 = vadd.f32 0.0, %v804
      %v806 = vpop.f32.mrf.mxu0
      %807 = vdwg.mxu0
      %v808 = vpack.c.bf16 %v749, %v746
      %v809 = vpack.c.bf16 %v757, %v754
      %v810 = vpack.c.bf16 %v765, %v762
      %v811 = vpack.c.bf16 %v773, %v770
      %v812 = vpack.c.bf16 %v781, %v778
      %v813 = vpack.c.bf16 %v789, %v786
      %v814 = vpack.c.bf16 %v797, %v794
      %v815 = vpack.c.bf16 %v805, %v802
      %v824 = vunpack.c.l.b16 %v808
      %v825 = vunpack.c.h.b16 %v808
      %v826 = vunpack.c.l.b16 %v809
      %v827 = vunpack.c.h.b16 %v809
      %v828 = vunpack.c.l.b16 %v810
      %v829 = vunpack.c.h.b16 %v810
      %v830 = vunpack.c.l.b16 %v811
      %v831 = vunpack.c.h.b16 %v811
      %v832 = vunpack.c.l.b16 %v812
      %v833 = vunpack.c.h.b16 %v812
      %v834 = vunpack.c.l.b16 %v813
      %v835 = vunpack.c.h.b16 %v813
      %v836 = vunpack.c.l.b16 %v814
      %v837 = vunpack.c.h.b16 %v814
      %v838 = vunpack.c.l.b16 %v815
      %v839 = vunpack.c.h.b16 %v815
      %v840 = vpack.c.b16 %v824, %v824
      %v841 = vpack.c.b16 %v825, %v825
      %v842 = vpack.c.b16 %v826, %v826
      %v843 = vpack.c.b16 %v827, %v827
      %v844 = vpack.c.b16 %v828, %v828
      %v845 = vpack.c.b16 %v829, %v829
      %v846 = vpack.c.b16 %v830, %v830
      %v847 = vpack.c.b16 %v831, %v831
      %v848 = vpack.c.b16 %v832, %v832
      %v849 = vpack.c.b16 %v833, %v833
      %v850 = vpack.c.b16 %v834, %v834
      %v851 = vpack.c.b16 %v835, %v835
      %v852 = vpack.c.b16 %v836, %v836
      %v853 = vpack.c.b16 %v837, %v837
      %v854 = vpack.c.b16 %v838, %v838
      %v855 = vpack.c.b16 %v839, %v839
      %s872 = scalar_lea.vmem [#allocation3], 64
      %873 = vst [vmem:[%s872] sm:$0xf] %v840
      %874 = vst [vmem:[%s872 + $0x4] sm:$0xf] %v841
      %875 = vst [vmem:[%s872 + $0x8] sm:$0xf] %v842
      %876 = vst [vmem:[%s872 + $0xc] sm:$0xf] %v843
      %877 = vst [vmem:[%s872 + $0x10] sm:$0xf] %v844
      %878 = vst [vmem:[%s872 + $0x14] sm:$0xf] %v845
      %879 = vst [vmem:[%s872 + $0x18] sm:$0xf] %v846
      %880 = vst [vmem:[%s872 + $0x1c] sm:$0xf] %v847
      %881 = vst [vmem:[%s872 + $0x20] sm:$0xf] %v848
      %882 = vst [vmem:[%s872 + $0x24] sm:$0xf] %v849
      %883 = vst [vmem:[%s872 + $0x28] sm:$0xf] %v850
      %884 = vst [vmem:[%s872 + $0x2c] sm:$0xf] %v851
      %885 = vst [vmem:[%s872 + $0x30] sm:$0xf] %v852
      %886 = vst [vmem:[%s872 + $0x34] sm:$0xf] %v853
      %887 = vst [vmem:[%s872 + $0x38] sm:$0xf] %v854
      %888 = vst [vmem:[%s872 + $0x3c] sm:$0xf] %v855
      %s889 = scalar_lea.vmem %s3, 128
      %v890 = vld [vmem:[%s889] sm:$0xf]
      %v891 = vld [vmem:[%s889 + $0x4] sm:$0xf]
      %v892 = vld [vmem:[%s889 + $0x8] sm:$0xf]
      %v893 = vld [vmem:[%s889 + $0xc] sm:$0xf]
      %v894 = vld [vmem:[%s889 + $0x10] sm:$0xf]
      %v895 = vld [vmem:[%s889 + $0x14] sm:$0xf]
      %v896 = vld [vmem:[%s889 + $0x18] sm:$0xf]
      %v897 = vld [vmem:[%s889 + $0x1c] sm:$0xf]
      %v898 = vld [vmem:[%s889 + $0x20] sm:$0xf]
      %v899 = vld [vmem:[%s889 + $0x24] sm:$0xf]
      %v900 = vld [vmem:[%s889 + $0x28] sm:$0xf]
      %v901 = vld [vmem:[%s889 + $0x2c] sm:$0xf]
      %v902 = vld [vmem:[%s889 + $0x30] sm:$0xf]
      %v903 = vld [vmem:[%s889 + $0x34] sm:$0xf]
      %v904 = vld [vmem:[%s889 + $0x38] sm:$0xf]
      %v905 = vld [vmem:[%s889 + $0x3c] sm:$0xf]
      %v922 = vunpack.c.l.b16 %v890
      %v923 = vunpack.c.l.b16 %v891
      %v924 = vunpack.c.l.b16 %v892
      %v925 = vunpack.c.l.b16 %v893
      %v926 = vunpack.c.l.b16 %v894
      %v927 = vunpack.c.l.b16 %v895
      %v928 = vunpack.c.l.b16 %v896
      %v929 = vunpack.c.l.b16 %v897
      %v930 = vunpack.c.l.b16 %v898
      %v931 = vunpack.c.l.b16 %v899
      %v932 = vunpack.c.l.b16 %v900
      %v933 = vunpack.c.l.b16 %v901
      %v934 = vunpack.c.l.b16 %v902
      %v935 = vunpack.c.l.b16 %v903
      %v936 = vunpack.c.l.b16 %v904
      %v937 = vunpack.c.l.b16 %v905
      %v938 = vpack.c.b16 %v923, %v922
      %v939 = vpack.c.b16 %v925, %v924
      %v940 = vpack.c.b16 %v927, %v926
      %v941 = vpack.c.b16 %v929, %v928
      %v942 = vpack.c.b16 %v931, %v930
      %v943 = vpack.c.b16 %v933, %v932
      %v944 = vpack.c.b16 %v935, %v934
      %v945 = vpack.c.b16 %v937, %v936
      %954 = vmatprep.subr.bf16.mxu0 0
      %955 = vmatpush1.bf16.msra.mxu0 %v945
      %956 = vmatprep.subr.bf16.mxu0 0
      %957 = vmatpush1.bf16.msra.mxu0 %v944
      %958 = vmatprep.subr.bf16.mxu0 0
      %959 = vmatpush1.bf16.msra.mxu0 %v943
      %960 = vmatprep.subr.bf16.mxu0 0
      %961 = vmatpush1.bf16.msra.mxu0 %v942
      %962 = vmatprep.subr.bf16.mxu0 0
      %963 = vmatpush1.bf16.msra.mxu0 %v941
      %964 = vmatprep.subr.bf16.mxu0 0
      %965 = vmatpush1.bf16.msra.mxu0 %v940
      %966 = vmatprep.subr.bf16.mxu0 0
      %967 = vmatpush1.bf16.msra.mxu0 %v939
      %968 = vmatprep.subr.bf16.mxu0 0
      %969 = vmatpush1.bf16.msra.mxu0 %v938
      %970 = vmatprep.subr.bf16.mxu0 0
      %971 = vmatpush2.bf16.msra.mxu0 0
      %972 = vmatprep.subr.bf16.mxu0 0
      %973 = vmatpush2.bf16.msra.mxu0 0
      %974 = vmatprep.subr.bf16.mxu0 0
      %975 = vmatpush2.bf16.msra.mxu0 0
      %976 = vmatprep.subr.bf16.mxu0 0
      %977 = vmatpush2.bf16.msra.mxu0 0
      %978 = vmatprep.subr.bf16.mxu0 0
      %979 = vmatpush2.bf16.msra.mxu0 0
      %980 = vmatprep.subr.bf16.mxu0 0
      %981 = vmatpush2.bf16.msra.mxu0 0
      %982 = vmatprep.subr.bf16.mxu0 0
      %983 = vmatpush2.bf16.msra.mxu0 0
      %984 = vmatprep.subr.bf16.mxu0 0
      %985 = vmatpush2.bf16.msra.mxu0 0
      %986 = vmatprep.mubr.bf16.mxu0 0
      %987 = vmatmul.mubr.bf16.gmra.mxu0 %v397
      %v988 = vpop.f32.mrf.mxu0
      %v989 = vadd.f32 0.0, %v988
      %v990 = vpop.f32.mrf.mxu0
      %v991 = vpop.f32.mrf.mxu0
      %v992 = vadd.f32 0.0, %v991
      %v993 = vpop.f32.mrf.mxu0
      %994 = vmatprep.mubr.bf16.mxu0 0
      %995 = vmatmul.mubr.bf16.gmra.mxu0 %v398
      %v996 = vpop.f32.mrf.mxu0
      %v997 = vadd.f32 0.0, %v996
      %v998 = vpop.f32.mrf.mxu0
      %v999 = vpop.f32.mrf.mxu0
      %v1000 = vadd.f32 0.0, %v999
      %v1001 = vpop.f32.mrf.mxu0
      %1002 = vmatprep.mubr.bf16.mxu0 0
      %1003 = vmatmul.mubr.bf16.gmra.mxu0 %v399
      %v1004 = vpop.f32.mrf.mxu0
      %v1005 = vadd.f32 0.0, %v1004
      %v1006 = vpop.f32.mrf.mxu0
      %v1007 = vpop.f32.mrf.mxu0
      %v1008 = vadd.f32 0.0, %v1007
      %v1009 = vpop.f32.mrf.mxu0
      %1010 = vmatprep.mubr.bf16.mxu0 0
      %1011 = vmatmul.mubr.bf16.gmra.mxu0 %v400
      %v1012 = vpop.f32.mrf.mxu0
      %v1013 = vadd.f32 0.0, %v1012
      %v1014 = vpop.f32.mrf.mxu0
      %v1015 = vpop.f32.mrf.mxu0
      %v1016 = vadd.f32 0.0, %v1015
      %v1017 = vpop.f32.mrf.mxu0
      %1018 = vmatprep.mubr.bf16.mxu0 0
      %1019 = vmatmul.mubr.bf16.gmra.mxu0 %v401
      %v1020 = vpop.f32.mrf.mxu0
      %v1021 = vadd.f32 0.0, %v1020
      %v1022 = vpop.f32.mrf.mxu0
      %v1023 = vpop.f32.mrf.mxu0
      %v1024 = vadd.f32 0.0, %v1023
      %v1025 = vpop.f32.mrf.mxu0
      %1026 = vmatprep.mubr.bf16.mxu0 0
      %1027 = vmatmul.mubr.bf16.gmra.mxu0 %v402
      %v1028 = vpop.f32.mrf.mxu0
      %v1029 = vadd.f32 0.0, %v1028
      %v1030 = vpop.f32.mrf.mxu0
      %v1031 = vpop.f32.mrf.mxu0
      %v1032 = vadd.f32 0.0, %v1031
      %v1033 = vpop.f32.mrf.mxu0
      %1034 = vmatprep.mubr.bf16.mxu0 0
      %1035 = vmatmul.mubr.bf16.gmra.mxu0 %v403
      %v1036 = vpop.f32.mrf.mxu0
      %v1037 = vadd.f32 0.0, %v1036
      %v1038 = vpop.f32.mrf.mxu0
      %v1039 = vpop.f32.mrf.mxu0
      %v1040 = vadd.f32 0.0, %v1039
      %v1041 = vpop.f32.mrf.mxu0
      %1042 = vmatprep.mubr.bf16.mxu0 0
      %1043 = vmatmul.mubr.bf16.gmra.mxu0 %v404
      %v1044 = vpop.f32.mrf.mxu0
      %v1045 = vadd.f32 0.0, %v1044
      %v1046 = vpop.f32.mrf.mxu0
      %v1047 = vpop.f32.mrf.mxu0
      %v1048 = vadd.f32 0.0, %v1047
      %v1049 = vpop.f32.mrf.mxu0
      %1050 = vdwg.mxu0
      %v1051 = vpack.c.bf16 %v992, %v989
      %v1052 = vpack.c.bf16 %v1000, %v997
      %v1053 = vpack.c.bf16 %v1008, %v1005
      %v1054 = vpack.c.bf16 %v1016, %v1013
      %v1055 = vpack.c.bf16 %v1024, %v1021
      %v1056 = vpack.c.bf16 %v1032, %v1029
      %v1057 = vpack.c.bf16 %v1040, %v1037
      %v1058 = vpack.c.bf16 %v1048, %v1045
      %v1067 = vunpack.c.l.b16 %v1051
      %v1068 = vunpack.c.h.b16 %v1051
      %v1069 = vunpack.c.l.b16 %v1052
      %v1070 = vunpack.c.h.b16 %v1052
      %v1071 = vunpack.c.l.b16 %v1053
      %v1072 = vunpack.c.h.b16 %v1053
      %v1073 = vunpack.c.l.b16 %v1054
      %v1074 = vunpack.c.h.b16 %v1054
      %v1075 = vunpack.c.l.b16 %v1055
      %v1076 = vunpack.c.h.b16 %v1055
      %v1077 = vunpack.c.l.b16 %v1056
      %v1078 = vunpack.c.h.b16 %v1056
      %v1079 = vunpack.c.l.b16 %v1057
      %v1080 = vunpack.c.h.b16 %v1057
      %v1081 = vunpack.c.l.b16 %v1058
      %v1082 = vunpack.c.h.b16 %v1058
      %v1083 = vpack.c.b16 %v1067, %v1067
      %v1084 = vpack.c.b16 %v1068, %v1068
      %v1085 = vpack.c.b16 %v1069, %v1069
      %v1086 = vpack.c.b16 %v1070, %v1070
      %v1087 = vpack.c.b16 %v1071, %v1071
      %v1088 = vpack.c.b16 %v1072, %v1072
      %v1089 = vpack.c.b16 %v1073, %v1073
      %v1090 = vpack.c.b16 %v1074, %v1074
      %v1091 = vpack.c.b16 %v1075, %v1075
      %v1092 = vpack.c.b16 %v1076, %v1076
      %v1093 = vpack.c.b16 %v1077, %v1077
      %v1094 = vpack.c.b16 %v1078, %v1078
      %v1095 = vpack.c.b16 %v1079, %v1079
      %v1096 = vpack.c.b16 %v1080, %v1080
      %v1097 = vpack.c.b16 %v1081, %v1081
      %v1098 = vpack.c.b16 %v1082, %v1082
      %s1115 = scalar_lea.vmem [#allocation3], 128
      %1116 = vst [vmem:[%s1115] sm:$0xf] %v1083
      %1117 = vst [vmem:[%s1115 + $0x4] sm:$0xf] %v1084
      %1118 = vst [vmem:[%s1115 + $0x8] sm:$0xf] %v1085
      %1119 = vst [vmem:[%s1115 + $0xc] sm:$0xf] %v1086
      %1120 = vst [vmem:[%s1115 + $0x10] sm:$0xf] %v1087
      %1121 = vst [vmem:[%s1115 + $0x14] sm:$0xf] %v1088
      %1122 = vst [vmem:[%s1115 + $0x18] sm:$0xf] %v1089
      %1123 = vst [vmem:[%s1115 + $0x1c] sm:$0xf] %v1090
      %1124 = vst [vmem:[%s1115 + $0x20] sm:$0xf] %v1091
      %1125 = vst [vmem:[%s1115 + $0x24] sm:$0xf] %v1092
      %1126 = vst [vmem:[%s1115 + $0x28] sm:$0xf] %v1093
      %1127 = vst [vmem:[%s1115 + $0x2c] sm:$0xf] %v1094
      %1128 = vst [vmem:[%s1115 + $0x30] sm:$0xf] %v1095
      %1129 = vst [vmem:[%s1115 + $0x34] sm:$0xf] %v1096
      %1130 = vst [vmem:[%s1115 + $0x38] sm:$0xf] %v1097
      %1131 = vst [vmem:[%s1115 + $0x3c] sm:$0xf] %v1098
      %s1132 = scalar_lea.vmem %s3, 192
      %v1133 = vld [vmem:[%s1132] sm:$0xf]
      %v1134 = vld [vmem:[%s1132 + $0x4] sm:$0xf]
      %v1135 = vld [vmem:[%s1132 + $0x8] sm:$0xf]
      %v1136 = vld [vmem:[%s1132 + $0xc] sm:$0xf]
      %v1137 = vld [vmem:[%s1132 + $0x10] sm:$0xf]
      %v1138 = vld [vmem:[%s1132 + $0x14] sm:$0xf]
      %v1139 = vld [vmem:[%s1132 + $0x18] sm:$0xf]
      %v1140 = vld [vmem:[%s1132 + $0x1c] sm:$0xf]
      %v1141 = vld [vmem:[%s1132 + $0x20] sm:$0xf]
      %v1142 = vld [vmem:[%s1132 + $0x24] sm:$0xf]
      %v1143 = vld [vmem:[%s1132 + $0x28] sm:$0xf]
      %v1144 = vld [vmem:[%s1132 + $0x2c] sm:$0xf]
      %v1145 = vld [vmem:[%s1132 + $0x30] sm:$0xf]
      %v1146 = vld [vmem:[%s1132 + $0x34] sm:$0xf]
      %v1147 = vld [vmem:[%s1132 + $0x38] sm:$0xf]
      %v1148 = vld [vmem:[%s1132 + $0x3c] sm:$0xf]
      %v1165 = vunpack.c.l.b16 %v1133
      %v1166 = vunpack.c.l.b16 %v1134
      %v1167 = vunpack.c.l.b16 %v1135
      %v1168 = vunpack.c.l.b16 %v1136
      %v1169 = vunpack.c.l.b16 %v1137
      %v1170 = vunpack.c.l.b16 %v1138
      %v1171 = vunpack.c.l.b16 %v1139
      %v1172 = vunpack.c.l.b16 %v1140
      %v1173 = vunpack.c.l.b16 %v1141
      %v1174 = vunpack.c.l.b16 %v1142
      %v1175 = vunpack.c.l.b16 %v1143
      %v1176 = vunpack.c.l.b16 %v1144
      %v1177 = vunpack.c.l.b16 %v1145
      %v1178 = vunpack.c.l.b16 %v1146
      %v1179 = vunpack.c.l.b16 %v1147
      %v1180 = vunpack.c.l.b16 %v1148
      %v1181 = vpack.c.b16 %v1166, %v1165
      %v1182 = vpack.c.b16 %v1168, %v1167
      %v1183 = vpack.c.b16 %v1170, %v1169
      %v1184 = vpack.c.b16 %v1172, %v1171
      %v1185 = vpack.c.b16 %v1174, %v1173
      %v1186 = vpack.c.b16 %v1176, %v1175
      %v1187 = vpack.c.b16 %v1178, %v1177
      %v1188 = vpack.c.b16 %v1180, %v1179
      %1197 = vmatprep.subr.bf16.mxu0 0
      %1198 = vmatpush1.bf16.msra.mxu0 %v1188
      %1199 = vmatprep.subr.bf16.mxu0 0
      %1200 = vmatpush1.bf16.msra.mxu0 %v1187
      %1201 = vmatprep.subr.bf16.mxu0 0
      %1202 = vmatpush1.bf16.msra.mxu0 %v1186
      %1203 = vmatprep.subr.bf16.mxu0 0
      %1204 = vmatpush1.bf16.msra.mxu0 %v1185
      %1205 = vmatprep.subr.bf16.mxu0 0
      %1206 = vmatpush1.bf16.msra.mxu0 %v1184
      %1207 = vmatprep.subr.bf16.mxu0 0
      %1208 = vmatpush1.bf16.msra.mxu0 %v1183
      %1209 = vmatprep.subr.bf16.mxu0 0
      %1210 = vmatpush1.bf16.msra.mxu0 %v1182
      %1211 = vmatprep.subr.bf16.mxu0 0
      %1212 = vmatpush1.bf16.msra.mxu0 %v1181
      %1213 = vmatprep.subr.bf16.mxu0 0
      %1214 = vmatpush2.bf16.msra.mxu0 0
      %1215 = vmatprep.subr.bf16.mxu0 0
      %1216 = vmatpush2.bf16.msra.mxu0 0
      %1217 = vmatprep.subr.bf16.mxu0 0
      %1218 = vmatpush2.bf16.msra.mxu0 0
      %1219 = vmatprep.subr.bf16.mxu0 0
      %1220 = vmatpush2.bf16.msra.mxu0 0
      %1221 = vmatprep.subr.bf16.mxu0 0
      %1222 = vmatpush2.bf16.msra.mxu0 0
      %1223 = vmatprep.subr.bf16.mxu0 0
      %1224 = vmatpush2.bf16.msra.mxu0 0
      %1225 = vmatprep.subr.bf16.mxu0 0
      %1226 = vmatpush2.bf16.msra.mxu0 0
      %1227 = vmatprep.subr.bf16.mxu0 0
      %1228 = vmatpush2.bf16.msra.mxu0 0
      %1229 = vmatprep.mubr.bf16.mxu0 0
      %1230 = vmatmul.mubr.bf16.gmra.mxu0 %v397
      %v1231 = vpop.f32.mrf.mxu0
      %v1232 = vadd.f32 0.0, %v1231
      %v1233 = vpop.f32.mrf.mxu0
      %v1234 = vpop.f32.mrf.mxu0
      %v1235 = vadd.f32 0.0, %v1234
      %v1236 = vpop.f32.mrf.mxu0
      %1237 = vmatprep.mubr.bf16.mxu0 0
      %1238 = vmatmul.mubr.bf16.gmra.mxu0 %v398
      %v1239 = vpop.f32.mrf.mxu0
      %v1240 = vadd.f32 0.0, %v1239
      %v1241 = vpop.f32.mrf.mxu0
      %v1242 = vpop.f32.mrf.mxu0
      %v1243 = vadd.f32 0.0, %v1242
      %v1244 = vpop.f32.mrf.mxu0
      %1245 = vmatprep.mubr.bf16.mxu0 0
      %1246 = vmatmul.mubr.bf16.gmra.mxu0 %v399
      %v1247 = vpop.f32.mrf.mxu0
      %v1248 = vadd.f32 0.0, %v1247
      %v1249 = vpop.f32.mrf.mxu0
      %v1250 = vpop.f32.mrf.mxu0
      %v1251 = vadd.f32 0.0, %v1250
      %v1252 = vpop.f32.mrf.mxu0
      %1253 = vmatprep.mubr.bf16.mxu0 0
      %1254 = vmatmul.mubr.bf16.gmra.mxu0 %v400
      %v1255 = vpop.f32.mrf.mxu0
      %v1256 = vadd.f32 0.0, %v1255
      %v1257 = vpop.f32.mrf.mxu0
      %v1258 = vpop.f32.mrf.mxu0
      %v1259 = vadd.f32 0.0, %v1258
      %v1260 = vpop.f32.mrf.mxu0
      %1261 = vmatprep.mubr.bf16.mxu0 0
      %1262 = vmatmul.mubr.bf16.gmra.mxu0 %v401
      %v1263 = vpop.f32.mrf.mxu0
      %v1264 = vadd.f32 0.0, %v1263
      %v1265 = vpop.f32.mrf.mxu0
      %v1266 = vpop.f32.mrf.mxu0
      %v1267 = vadd.f32 0.0, %v1266
      %v1268 = vpop.f32.mrf.mxu0
      %1269 = vmatprep.mubr.bf16.mxu0 0
      %1270 = vmatmul.mubr.bf16.gmra.mxu0 %v402
      %v1271 = vpop.f32.mrf.mxu0
      %v1272 = vadd.f32 0.0, %v1271
      %v1273 = vpop.f32.mrf.mxu0
      %v1274 = vpop.f32.mrf.mxu0
      %v1275 = vadd.f32 0.0, %v1274
      %v1276 = vpop.f32.mrf.mxu0
      %1277 = vmatprep.mubr.bf16.mxu0 0
      %1278 = vmatmul.mubr.bf16.gmra.mxu0 %v403
      %v1279 = vpop.f32.mrf.mxu0
      %v1280 = vadd.f32 0.0, %v1279
      %v1281 = vpop.f32.mrf.mxu0
      %v1282 = vpop.f32.mrf.mxu0
      %v1283 = vadd.f32 0.0, %v1282
      %v1284 = vpop.f32.mrf.mxu0
      %1285 = vmatprep.mubr.bf16.mxu0 0
      %1286 = vmatmul.mubr.bf16.gmra.mxu0 %v404
      %v1287 = vpop.f32.mrf.mxu0
      %v1288 = vadd.f32 0.0, %v1287
      %v1289 = vpop.f32.mrf.mxu0
      %v1290 = vpop.f32.mrf.mxu0
      %v1291 = vadd.f32 0.0, %v1290
      %v1292 = vpop.f32.mrf.mxu0
      %1293 = vdwg.mxu0
      %v1294 = vpack.c.bf16 %v1235, %v1232
      %v1295 = vpack.c.bf16 %v1243, %v1240
      %v1296 = vpack.c.bf16 %v1251, %v1248
      %v1297 = vpack.c.bf16 %v1259, %v1256
      %v1298 = vpack.c.bf16 %v1267, %v1264
      %v1299 = vpack.c.bf16 %v1275, %v1272
      %v1300 = vpack.c.bf16 %v1283, %v1280
      %v1301 = vpack.c.bf16 %v1291, %v1288
      %v1310 = vunpack.c.l.b16 %v1294
      %v1311 = vunpack.c.h.b16 %v1294
      %v1312 = vunpack.c.l.b16 %v1295
      %v1313 = vunpack.c.h.b16 %v1295
      %v1314 = vunpack.c.l.b16 %v1296
      %v1315 = vunpack.c.h.b16 %v1296
      %v1316 = vunpack.c.l.b16 %v1297
      %v1317 = vunpack.c.h.b16 %v1297
      %v1318 = vunpack.c.l.b16 %v1298
      %v1319 = vunpack.c.h.b16 %v1298
      %v1320 = vunpack.c.l.b16 %v1299
      %v1321 = vunpack.c.h.b16 %v1299
      %v1322 = vunpack.c.l.b16 %v1300
      %v1323 = vunpack.c.h.b16 %v1300
      %v1324 = vunpack.c.l.b16 %v1301
      %v1325 = vunpack.c.h.b16 %v1301
      %v1326 = vpack.c.b16 %v1310, %v1310
      %v1327 = vpack.c.b16 %v1311, %v1311
      %v1328 = vpack.c.b16 %v1312, %v1312
      %v1329 = vpack.c.b16 %v1313, %v1313
      %v1330 = vpack.c.b16 %v1314, %v1314
      %v1331 = vpack.c.b16 %v1315, %v1315
      %v1332 = vpack.c.b16 %v1316, %v1316
      %v1333 = vpack.c.b16 %v1317, %v1317
      %v1334 = vpack.c.b16 %v1318, %v1318
      %v1335 = vpack.c.b16 %v1319, %v1319
      %v1336 = vpack.c.b16 %v1320, %v1320
      %v1337 = vpack.c.b16 %v1321, %v1321
      %v1338 = vpack.c.b16 %v1322, %v1322
      %v1339 = vpack.c.b16 %v1323, %v1323
      %v1340 = vpack.c.b16 %v1324, %v1324
      %v1341 = vpack.c.b16 %v1325, %v1325
      %s1358 = scalar_lea.vmem [#allocation3], 192
      %1359 = vst [vmem:[%s1358] sm:$0xf] %v1326
      %1360 = vst [vmem:[%s1358 + $0x4] sm:$0xf] %v1327
      %1361 = vst [vmem:[%s1358 + $0x8] sm:$0xf] %v1328
      %1362 = vst [vmem:[%s1358 + $0xc] sm:$0xf] %v1329
      %1363 = vst [vmem:[%s1358 + $0x10] sm:$0xf] %v1330
      %1364 = vst [vmem:[%s1358 + $0x14] sm:$0xf] %v1331
      %1365 = vst [vmem:[%s1358 + $0x18] sm:$0xf] %v1332
      %1366 = vst [vmem:[%s1358 + $0x1c] sm:$0xf] %v1333
      %1367 = vst [vmem:[%s1358 + $0x20] sm:$0xf] %v1334
      %1368 = vst [vmem:[%s1358 + $0x24] sm:$0xf] %v1335
      %1369 = vst [vmem:[%s1358 + $0x28] sm:$0xf] %v1336
      %1370 = vst [vmem:[%s1358 + $0x2c] sm:$0xf] %v1337
      %1371 = vst [vmem:[%s1358 + $0x30] sm:$0xf] %v1338
      %1372 = vst [vmem:[%s1358 + $0x34] sm:$0xf] %v1339
      %1373 = vst [vmem:[%s1358 + $0x38] sm:$0xf] %v1340
      %1374 = vst [vmem:[%s1358 + $0x3c] sm:$0xf] %v1341
    $region25: #{phenomnn_forward.12} parent=1 // pred_fallthru
      _
    // Predicated region
    $region26: #{phenomnn_forward.12} parent=1 // pred_check
      _
    $region27: #{phenomnn_forward.12} parent=1 // pred_check_branch
      %1376 = sbr.rel (0) target = $region29
    $region28: #{phenomnn_forward.12} parent=1 // pred_region
      _
    $region29: #{phenomnn_forward.12} parent=1 // pred_fallthru
      _
    // Predicated region
    $region30: #{phenomnn_forward.12} parent=1 // pred_check
      _
    $region31: #{phenomnn_forward.12} parent=1 // pred_check_branch
      %1378 = sbr.rel (0) target = $region33
    $region32: #{phenomnn_forward.12} parent=1 // pred_region
      %s1380 = ssub.s32 4096, 4096
      %1381 = vsyncadd [#allocation4], %s1380
      %s1382 = sshll.u32 [#allocation3], 4
      %s1383 = int_to_ptr.vmem [resolvable:$true] %s1382
      %1388 = dma.vmem_to_hbm [thread:$0]  %s1383, 4096, %s5, [#allocation4], 64, 64, 4
    $region33: #{phenomnn_forward.12} parent=1 // pred_fallthru
      _
    // Predicated region
    $region34: #{phenomnn_forward.12} parent=1 // pred_check
      _
    $region35: #{phenomnn_forward.12} parent=1 // pred_check_branch
      %1390 = sbr.rel (0) target = $region37
    $region36: #{phenomnn_forward.12} parent=1 // pred_region
      _
    $region37: #{phenomnn_forward.12} parent=1 // pred_fallthru
      _
    // Predicated region
    $region38: #{phenomnn_forward.12} parent=1 // pred_check
      _
    $region39: #{phenomnn_forward.12} parent=1 // pred_check_branch
      %1392 = sbr.rel (0) target = $region41
    $region40: #{phenomnn_forward.12} parent=1 // pred_region
      %1393 = dma.done [#allocation4], 4096
    $region41: #{phenomnn_forward.12} parent=1 // pred_fallthru
      _
    %1394 = vsyncpa [#allocation4], 1

</llo_original>
